<compile_context>
chip_gen: v7x
topology: tpu7x:2x2x1
jax: 0.10.0
libtpu: 0.0.40
codegen_flags: <defaults>
</compile_context>

<pallas_src>
import math

import jax
import jax.numpy as jnp
from jax import lax
from jax.experimental import pallas as pl
from jax.experimental.pallas import tpu as pltpu


# ---------------- model hyper-parameters (small demo config) ----------------
N_EMBD = 32          # config.n_embd
N_HEADS = 4          # config.n_heads
HEAD_DIM = N_EMBD // N_HEADS
DEC_LEN = 8          # decoder sequence length (tags_maxlen)
ENC_LEN = 16         # encoder sequence length (content_maxlen)
LN_EPS = 1e-5
ATT_SCALE = 1.0 / math.sqrt(HEAD_DIM)
GELU_C = math.sqrt(2.0 / math.pi)


# ---------------- in-kernel helpers (pure jnp/lax, trace-time) ---------------
def _mm(a, b):
    """MXU matmul: bf16 operands, f32 accumulation."""
    return jnp.dot(a.astype(jnp.bfloat16), b.astype(jnp.bfloat16),
                   preferred_element_type=jnp.float32)


def _mm_nt(a, b):
    """a @ b.T (contract last dims of both), bf16 operands, f32 accumulation."""
    return lax.dot_general(a.astype(jnp.bfloat16), b.astype(jnp.bfloat16),
                           (((1,), (1,)), ((), ())),
                           preferred_element_type=jnp.float32)


def _layer_norm(x, gamma, beta):
    mu = jnp.mean(x, axis=-1, keepdims=True)
    xc = x - mu
    var = jnp.mean(xc * xc, axis=-1, keepdims=True)
    return xc * lax.rsqrt(var + LN_EPS) * gamma + beta


def _gelu_tanh(x):
    return 0.5 * x * (1.0 + jnp.tanh(GELU_C * (x + 0.044715 * x * x * x)))


def _softmax(s):
    m = jnp.max(s, axis=-1, keepdims=True)
    p = jnp.exp(s - m)
    return p / jnp.sum(p, axis=-1, keepdims=True)


def _mha(q, k, v, *, causal):
    """Multi-head attention for one batch element. q:(N,C), k,v:(T,C)."""
    n, t = q.shape[0], k.shape[0]
    if causal:
        row = lax.broadcasted_iota(jnp.int32, (n, t), 0)
        col = lax.broadcasted_iota(jnp.int32, (n, t), 1)
        keep = row >= col
    heads = []
    for h in range(N_HEADS):            # static unrolled loop (N_HEADS small)
        sl = slice(h * HEAD_DIM, (h + 1) * HEAD_DIM)
        att = _mm_nt(q[:, sl], k[:, sl]) * ATT_SCALE          # (N, T) f32
        if causal:
            att = jnp.where(keep, att, -1e30)
        p = _softmax(att)
        heads.append(_mm(p, v[:, sl]))                        # (N, HEAD_DIM)
    return jnp.concatenate(heads, axis=-1)                    # (N, C)


# --------------------------------- kernel -----------------------------------
def decoder_block_kernel(x_ref, enc_ref,
                         wqkv_ref, bqkv_ref, wsp_ref, bsp_ref,    # self-attn
                         g1_ref, be1_ref,                          # ln_1
                         wq_ref, bq_ref, wkv_ref, bkv_ref,         # cross-attn
                         wcp_ref, bcp_ref,
                         g2_ref, be2_ref,                          # ln_2
                         wfc_ref, bfc_ref, wmp_ref, bmp_ref,       # mlp
                         g3_ref, be3_ref,                          # ln_3
                         o_ref):
    C = N_EMBD
    x = x_ref[...]            # (N, C)  one batch element (grid over batch)
    enc = enc_ref[...]        # (T, C)

    # ---- masked self-attention (note: NO residual around it in this module) --
    qkv = _mm(x, wqkv_ref[...]) + bqkv_ref[...]                   # (N, 3C)
    y = _mha(qkv[:, :C], qkv[:, C:2 * C], qkv[:, 2 * C:], causal=True)
    y = _mm(y, wsp_ref[...]) + bsp_ref[...]

    # ---- ln_1 ----
    x1 = _layer_norm(y, g1_ref[...], be1_ref[...])

    # ---- cross-attention + residual ----
    kv = _mm(enc, wkv_ref[...]) + bkv_ref[...]                    # (T, 2C)
    q = _mm(x1, wq_ref[...]) + bq_ref[...]                        # (N, C)
    yc = _mha(q, kv[:, :C], kv[:, C:], causal=False)
    x2 = x1 + _mm(yc, wcp_ref[...]) + bcp_ref[...]

    # ---- ln_2 ----
    x2 = _layer_norm(x2, g2_ref[...], be2_ref[...])

    # ---- MLP + residual ----
    h = _gelu_tanh(_mm(x2, wfc_ref[...]) + bfc_ref[...])          # (N, 4C)
    x3 = x2 + _mm(h, wmp_ref[...]) + bmp_ref[...]

    # ---- ln_3 ----
    o_ref[...] = _layer_norm(x3, g3_ref[...], be3_ref[...])


# --------------------------------- wrapper ----------------------------------
def decoder_block_forward(prev_output, encoder_output, params):
    B, N, C = prev_output.shape
    _, T, _ = encoder_output.shape
    assert C == N_EMBD

    def seq_spec(seq_len):
        return pl.BlockSpec((None, seq_len, C), lambda b: (b, 0, 0))

    def p2(shape):   # every parameter is rank-2 and kept whole in VMEM
        return pl.BlockSpec(shape, lambda b: (0, 0))

    in_specs = [seq_spec(N), seq_spec(T)] + [p2(p.shape) for p in params]

    return pl.pallas_call(
        decoder_block_kernel,
        out_shape=jax.ShapeDtypeStruct((B, N, C), jnp.float32),
        grid_spec=pltpu.PrefetchScalarGridSpec(
            num_scalar_prefetch=0,
            grid=(B,),
            in_specs=in_specs,
            out_specs=seq_spec(N),
        ),
        compiler_params=pltpu.CompilerParams(
            dimension_semantics=("parallel",)),   # shard batch across TCs (v7x)
    )(prev_output, encoder_output, *params)


# ----------------------------- parameter setup ------------------------------
def init_params(key):
    """Weights stored already transposed to (in, out); bf16 for MXU operands."""
    C = N_EMBD
    ks = jax.random.split(key, 20)

    def w(k, fi, fo):
        return (0.1 * jax.random.normal(k, (fi, fo), jnp.float32)
                ).astype(jnp.bfloat16)

    def b(k, dim):
        return 0.01 * jax.random.normal(k, (1, dim), jnp.float32)

    def g(k, dim):
        return 1.0 + 0.1 * jax.random.normal(k, (1, dim), jnp.float32)

    wqkv, bqkv = w(ks[0], C, 3 * C), b(ks[1], 3 * C)
    wsp, bsp = w(ks[2], C, C), b(ks[3], C)
    g1, be1 = g(ks[4], C), b(ks[5], C)
    wq, bq = w(ks[6], C, C), b(ks[7], C)
    wkv, bkv = w(ks[8], C, 2 * C), b(ks[9], 2 * C)
    wcp, bcp = w(ks[10], C, C), b(ks[11], C)
    g2, be2 = g(ks[12], C), b(ks[13], C)
    wfc, bfc = w(ks[14], C, 4 * C), b(ks[15], 4 * C)
    wmp, bmp = w(ks[16], 4 * C, C), b(ks[17], C)
    g3, be3 = g(ks[18], C), b(ks[19], C)

    return (wqkv, bqkv, wsp, bsp, g1, be1,
            wq, bq, wkv, bkv, wcp, bcp, g2, be2,
            wfc, bfc, wmp, bmp, g3, be3)


# ------------------------- pure-JAX reference check --------------------------
def reference_forward(x, enc, params):
    (wqkv, bqkv, wsp, bsp, g1, be1, wq, bq, wkv, bkv, wcp, bcp,
     g2, be2, wfc, bfc, wmp, bmp, g3, be3) = params
    B, N, C = x.shape
    nh, hd = N_HEADS, HEAD_DIM

    def mm(a, w_):
        return jnp.matmul(a.astype(jnp.bfloat16), w_.astype(jnp.bfloat16),
                          preferred_element_type=jnp.float32)

    def ln(h, gg, bb):
        mu = jnp.mean(h, -1, keepdims=True)
        xc = h - mu
        var = jnp.mean(xc * xc, -1, keepdims=True)
        return xc * lax.rsqrt(var + LN_EPS) * gg + bb

    def split_heads(z):
        Bz, S, _ = z.shape
        return z.reshape(Bz, S, nh, hd).transpose(0, 2, 1, 3)

    def mha(q, k, v, causal):
        qh, kh, vh = split_heads(q), split_heads(k), split_heads(v)
        att = jnp.einsum('bhnd,bhtd->bhnt',
                         qh.astype(jnp.bfloat16), kh.astype(jnp.bfloat16),
                         preferred_element_type=jnp.float32) * ATT_SCALE
        if causal:
            keep = (jnp.arange(q.shape[1])[:, None]
                    >= jnp.arange(k.shape[1])[None, :])
            att = jnp.where(keep[None, None], att, -1e30)
        m = jnp.max(att, -1, keepdims=True)
        p = jnp.exp(att - m)
        p = p / jnp.sum(p, -1, keepdims=True)
        y = jnp.einsum('bhnt,bhtd->bhnd',
                       p.astype(jnp.bfloat16), vh.astype(jnp.bfloat16),
                       preferred_element_type=jnp.float32)
        return y.transpose(0, 2, 1, 3).reshape(q.shape[0], q.shape[1], C)

    def gelu(h):
        return 0.5 * h * (1.0 + jnp.tanh(GELU_C * (h + 0.044715 * h ** 3)))

    qkv = mm(x, wqkv) + bqkv
    y = mha(qkv[..., :C], qkv[..., C:2 * C], qkv[..., 2 * C:], causal=True)
    y = mm(y, wsp) + bsp
    x1 = ln(y, g1, be1)

    kv = mm(enc, wkv) + bkv
    yc = mha(mm(x1, wq) + bq, kv[..., :C], kv[..., C:], causal=False)
    x2 = ln(x1 + mm(yc, wcp) + bcp, g2, be2)

    h = gelu(mm(x2, wfc) + bfc)
    x3 = x2 + mm(h, wmp) + bmp
    return ln(x3, g3, be3)


# ----------------------------------- main ------------------------------------
if __name__ == "__main__":
    B = 2
    key = jax.random.PRNGKey(0)
    k_inp, k_enc, k_par = jax.random.split(key, 3)

    prev_output = jax.random.normal(k_inp, (B, DEC_LEN, N_EMBD), jnp.float32)
    encoder_output = jax.random.normal(k_enc, (B, ENC_LEN, N_EMBD), jnp.float32)
    params = init_params(k_par)

    out = decoder_block_forward(prev_output, encoder_output, params)
    out = jax.block_until_ready(out)

    ref = reference_forward(prev_output, encoder_output, params)

    assert out.shape == (B, DEC_LEN, N_EMBD)
    assert bool(jnp.all(jnp.isfinite(out)))
    # tolerance covers minor EUP-vs-XLA transcendental / accumulation-order
    # differences; any semantic bug would be O(1) on the LayerNorm'd output.
    assert jnp.allclose(out, ref, atol=5e-3, rtol=5e-3), \
        float(jnp.max(jnp.abs(out - ref)))

    print("KERNEL_OK")
</pallas_src>

<mosaic_0001>
module attributes {stable_mosaic.version = 11 : i64} {
  func.func @decoder_block_kernel(%arg0: i32, %arg1: memref<1x8x32xf32, #tpu.memory_space<vmem>>, %arg2: memref<1x16x32xf32, #tpu.memory_space<vmem>>, %arg3: memref<32x96xbf16, #tpu.memory_space<vmem>>, %arg4: memref<1x96xf32, #tpu.memory_space<vmem>>, %arg5: memref<32x32xbf16, #tpu.memory_space<vmem>>, %arg6: memref<1x32xf32, #tpu.memory_space<vmem>>, %arg7: memref<1x32xf32, #tpu.memory_space<vmem>>, %arg8: memref<1x32xf32, #tpu.memory_space<vmem>>, %arg9: memref<32x32xbf16, #tpu.memory_space<vmem>>, %arg10: memref<1x32xf32, #tpu.memory_space<vmem>>, %arg11: memref<32x64xbf16, #tpu.memory_space<vmem>>, %arg12: memref<1x64xf32, #tpu.memory_space<vmem>>, %arg13: memref<32x32xbf16, #tpu.memory_space<vmem>>, %arg14: memref<1x32xf32, #tpu.memory_space<vmem>>, %arg15: memref<1x32xf32, #tpu.memory_space<vmem>>, %arg16: memref<1x32xf32, #tpu.memory_space<vmem>>, %arg17: memref<32x128xbf16, #tpu.memory_space<vmem>>, %arg18: memref<1x128xf32, #tpu.memory_space<vmem>>, %arg19: memref<128x32xbf16, #tpu.memory_space<vmem>>, %arg20: memref<1x32xf32, #tpu.memory_space<vmem>>, %arg21: memref<1x32xf32, #tpu.memory_space<vmem>>, %arg22: memref<1x32xf32, #tpu.memory_space<vmem>>, %arg23: memref<1x8x32xf32, #tpu.memory_space<vmem>>) attributes {dimension_semantics = [#tpu.dimension_semantics<parallel>], iteration_bounds = array<i64: 2>, scalar_prefetch = 0 : i64, scratch_operands = 0 : i64, tpu.core_type = #tpu.core_type<tc>, window_params = [{transform_indices = @transform_0, window_bounds = array<i64: 1, 8, 32>}, {transform_indices = @transform_1, window_bounds = array<i64: 1, 16, 32>}, {pipeline_mode = #tpu.pipeline_mode<synchronous>, transform_indices = @transform_2, window_bounds = array<i64: 32, 96>}, {pipeline_mode = #tpu.pipeline_mode<synchronous>, transform_indices = @transform_3, window_bounds = array<i64: 1, 96>}, {pipeline_mode = #tpu.pipeline_mode<synchronous>, transform_indices = @transform_4, window_bounds = array<i64: 32, 32>}, {pipeline_mode = #tpu.pipeline_mode<synchronous>, transform_indices = @transform_5, window_bounds = array<i64: 1, 32>}, {pipeline_mode = #tpu.pipeline_mode<synchronous>, transform_indices = @transform_6, window_bounds = array<i64: 1, 32>}, {pipeline_mode = #tpu.pipeline_mode<synchronous>, transform_indices = @transform_7, window_bounds = array<i64: 1, 32>}, {pipeline_mode = #tpu.pipeline_mode<synchronous>, transform_indices = @transform_8, window_bounds = array<i64: 32, 32>}, {pipeline_mode = #tpu.pipeline_mode<synchronous>, transform_indices = @transform_9, window_bounds = array<i64: 1, 32>}, {pipeline_mode = #tpu.pipeline_mode<synchronous>, transform_indices = @transform_10, window_bounds = array<i64: 32, 64>}, {pipeline_mode = #tpu.pipeline_mode<synchronous>, transform_indices = @transform_11, window_bounds = array<i64: 1, 64>}, {pipeline_mode = #tpu.pipeline_mode<synchronous>, transform_indices = @transform_12, window_bounds = array<i64: 32, 32>}, {pipeline_mode = #tpu.pipeline_mode<synchronous>, transform_indices = @transform_13, window_bounds = array<i64: 1, 32>}, {pipeline_mode = #tpu.pipeline_mode<synchronous>, transform_indices = @transform_14, window_bounds = array<i64: 1, 32>}, {pipeline_mode = #tpu.pipeline_mode<synchronous>, transform_indices = @transform_15, window_bounds = array<i64: 1, 32>}, {pipeline_mode = #tpu.pipeline_mode<synchronous>, transform_indices = @transform_16, window_bounds = array<i64: 32, 128>}, {pipeline_mode = #tpu.pipeline_mode<synchronous>, transform_indices = @transform_17, window_bounds = array<i64: 1, 128>}, {pipeline_mode = #tpu.pipeline_mode<synchronous>, transform_indices = @transform_18, window_bounds = array<i64: 128, 32>}, {pipeline_mode = #tpu.pipeline_mode<synchronous>, transform_indices = @transform_19, window_bounds = array<i64: 1, 32>}, {pipeline_mode = #tpu.pipeline_mode<synchronous>, transform_indices = @transform_20, window_bounds = array<i64: 1, 32>}, {pipeline_mode = #tpu.pipeline_mode<synchronous>, transform_indices = @transform_21, window_bounds = array<i64: 1, 32>}, {transform_indices = @transform_22, window_bounds = array<i64: 1, 8, 32>}]} {
    %c0 = arith.constant 0 : index
    %c0_0 = arith.constant 0 : index
    %c0_1 = arith.constant 0 : index
    %0 = vector.load %arg1[%c0, %c0_0, %c0_1] : memref<1x8x32xf32, #tpu.memory_space<vmem>>, vector<1x8x32xf32>
    %1 = vector.shape_cast %0 : vector<1x8x32xf32> to vector<8x32xf32>
    %c0_2 = arith.constant 0 : index
    %c0_3 = arith.constant 0 : index
    %c0_4 = arith.constant 0 : index
    %2 = vector.load %arg2[%c0_2, %c0_3, %c0_4] : memref<1x16x32xf32, #tpu.memory_space<vmem>>, vector<1x16x32xf32>
    %3 = vector.shape_cast %2 : vector<1x16x32xf32> to vector<16x32xf32>
    %c0_5 = arith.constant 0 : index
    %c0_6 = arith.constant 0 : index
    %4 = vector.load %arg3[%c0_5, %c0_6] : memref<32x96xbf16, #tpu.memory_space<vmem>>, vector<32x96xbf16>
    %5 = arith.truncf %1 : vector<8x32xf32> to vector<8x32xbf16>
    %cst = arith.constant dense<0.000000e+00> : vector<8x96xf32>
    %6 = tpu.matmul %5, %4, %cst {dimension_numbers = #tpu.dot_dimension_numbers<[1], [0], [0], [1], [0, 0, 1, 1], [], []>} : vector<8x32xbf16>, vector<32x96xbf16>, vector<8x96xf32> -> vector<8x96xf32>
    %c0_7 = arith.constant 0 : index
    %c0_8 = arith.constant 0 : index
    %7 = vector.load %arg4[%c0_7, %c0_8] : memref<1x96xf32, #tpu.memory_space<vmem>>, vector<1x96xf32>
    %8 = vector.broadcast %7 : vector<1x96xf32> to vector<8x96xf32>
    %9 = arith.addf %6, %8 : vector<8x96xf32>
    %10 = vector.extract_strided_slice %9 {offsets = [0, 0], sizes = [8, 32], strides = [1, 1]} : vector<8x96xf32> to vector<8x32xf32>
    %11 = vector.extract_strided_slice %9 {offsets = [0, 32], sizes = [8, 32], strides = [1, 1]} : vector<8x96xf32> to vector<8x32xf32>
    %12 = vector.extract_strided_slice %9 {offsets = [0, 64], sizes = [8, 32], strides = [1, 1]} : vector<8x96xf32> to vector<8x32xf32>
    %13 = tpu.iota {dimensions = array<i32: 0>} : vector<8x8xi32>
    %14 = tpu.iota {dimensions = array<i32: 1>} : vector<8x8xi32>
    %15 = arith.cmpi sge, %13, %14 : vector<8x8xi32>
    %16 = vector.extract_strided_slice %10 {offsets = [0, 0], sizes = [8, 8], strides = [1, 1]} : vector<8x32xf32> to vector<8x8xf32>
    %17 = vector.extract_strided_slice %11 {offsets = [0, 0], sizes = [8, 8], strides = [1, 1]} : vector<8x32xf32> to vector<8x8xf32>
    %18 = arith.truncf %16 : vector<8x8xf32> to vector<8x8xbf16>
    %19 = arith.truncf %17 : vector<8x8xf32> to vector<8x8xbf16>
    %cst_9 = arith.constant dense<0.000000e+00> : vector<8x8xf32>
    %20 = tpu.matmul %18, %19, %cst_9 {dimension_numbers = #tpu.dot_dimension_numbers<[1], [1], [0], [0], [0, 0, 1, 0], [], []>} : vector<8x8xbf16>, vector<8x8xbf16>, vector<8x8xf32> -> vector<8x8xf32>
    %cst_10 = arith.constant 0.353553385 : f32
    %21 = vector.broadcast %cst_10 : f32 to vector<8x8xf32>
    %22 = arith.mulf %20, %21 : vector<8x8xf32>
    %cst_11 = arith.constant -1.000000e+30 : f32
    %23 = vector.broadcast %cst_11 : f32 to vector<8x8xf32>
    %24 = arith.select %15, %22, %23 : vector<8x8xi1>, vector<8x8xf32>
    %cst_12 = arith.constant dense<0xFF800000> : vector<8xf32>
    %25 = vector.multi_reduction <maximumf>, %24, %cst_12 [1] : vector<8x8xf32> to vector<8xf32>
    %26 = vector.shape_cast %25 : vector<8xf32> to vector<8x1xf32>
    %27 = vector.broadcast %26 : vector<8x1xf32> to vector<8x8xf32>
    %28 = arith.subf %24, %27 : vector<8x8xf32>
    %29 = math.exp %28 : vector<8x8xf32>
    %cst_13 = arith.constant dense<0.000000e+00> : vector<8xf32>
    %30 = vector.multi_reduction <add>, %29, %cst_13 [1] : vector<8x8xf32> to vector<8xf32>
    %31 = vector.shape_cast %30 : vector<8xf32> to vector<8x1xf32>
    %32 = vector.broadcast %31 : vector<8x1xf32> to vector<8x8xf32>
    %33 = arith.divf %29, %32 : vector<8x8xf32>
    %34 = vector.extract_strided_slice %12 {offsets = [0, 0], sizes = [8, 8], strides = [1, 1]} : vector<8x32xf32> to vector<8x8xf32>
    %35 = arith.truncf %33 : vector<8x8xf32> to vector<8x8xbf16>
    %36 = arith.truncf %34 : vector<8x8xf32> to vector<8x8xbf16>
    %cst_14 = arith.constant dense<0.000000e+00> : vector<8x8xf32>
    %37 = tpu.matmul %35, %36, %cst_14 {dimension_numbers = #tpu.dot_dimension_numbers<[1], [0], [0], [1], [0, 0, 1, 1], [], []>} : vector<8x8xbf16>, vector<8x8xbf16>, vector<8x8xf32> -> vector<8x8xf32>
    %38 = vector.extract_strided_slice %10 {offsets = [0, 8], sizes = [8, 8], strides = [1, 1]} : vector<8x32xf32> to vector<8x8xf32>
    %39 = vector.extract_strided_slice %11 {offsets = [0, 8], sizes = [8, 8], strides = [1, 1]} : vector<8x32xf32> to vector<8x8xf32>
    %40 = arith.truncf %38 : vector<8x8xf32> to vector<8x8xbf16>
    %41 = arith.truncf %39 : vector<8x8xf32> to vector<8x8xbf16>
    %cst_15 = arith.constant dense<0.000000e+00> : vector<8x8xf32>
    %42 = tpu.matmul %40, %41, %cst_15 {dimension_numbers = #tpu.dot_dimension_numbers<[1], [1], [0], [0], [0, 0, 1, 0], [], []>} : vector<8x8xbf16>, vector<8x8xbf16>, vector<8x8xf32> -> vector<8x8xf32>
    %cst_16 = arith.constant 0.353553385 : f32
    %43 = vector.broadcast %cst_16 : f32 to vector<8x8xf32>
    %44 = arith.mulf %42, %43 : vector<8x8xf32>
    %cst_17 = arith.constant -1.000000e+30 : f32
    %45 = vector.broadcast %cst_17 : f32 to vector<8x8xf32>
    %46 = arith.select %15, %44, %45 : vector<8x8xi1>, vector<8x8xf32>
    %cst_18 = arith.constant dense<0xFF800000> : vector<8xf32>
    %47 = vector.multi_reduction <maximumf>, %46, %cst_18 [1] : vector<8x8xf32> to vector<8xf32>
    %48 = vector.shape_cast %47 : vector<8xf32> to vector<8x1xf32>
    %49 = vector.broadcast %48 : vector<8x1xf32> to vector<8x8xf32>
    %50 = arith.subf %46, %49 : vector<8x8xf32>
    %51 = math.exp %50 : vector<8x8xf32>
    %cst_19 = arith.constant dense<0.000000e+00> : vector<8xf32>
    %52 = vector.multi_reduction <add>, %51, %cst_19 [1] : vector<8x8xf32> to vector<8xf32>
    %53 = vector.shape_cast %52 : vector<8xf32> to vector<8x1xf32>
    %54 = vector.broadcast %53 : vector<8x1xf32> to vector<8x8xf32>
    %55 = arith.divf %51, %54 : vector<8x8xf32>
    %56 = vector.extract_strided_slice %12 {offsets = [0, 8], sizes = [8, 8], strides = [1, 1]} : vector<8x32xf32> to vector<8x8xf32>
    %57 = arith.truncf %55 : vector<8x8xf32> to vector<8x8xbf16>
    %58 = arith.truncf %56 : vector<8x8xf32> to vector<8x8xbf16>
    %cst_20 = arith.constant dense<0.000000e+00> : vector<8x8xf32>
    %59 = tpu.matmul %57, %58, %cst_20 {dimension_numbers = #tpu.dot_dimension_numbers<[1], [0], [0], [1], [0, 0, 1, 1], [], []>} : vector<8x8xbf16>, vector<8x8xbf16>, vector<8x8xf32> -> vector<8x8xf32>
    %60 = vector.extract_strided_slice %10 {offsets = [0, 16], sizes = [8, 8], strides = [1, 1]} : vector<8x32xf32> to vector<8x8xf32>
    %61 = vector.extract_strided_slice %11 {offsets = [0, 16], sizes = [8, 8], strides = [1, 1]} : vector<8x32xf32> to vector<8x8xf32>
    %62 = arith.truncf %60 : vector<8x8xf32> to vector<8x8xbf16>
    %63 = arith.truncf %61 : vector<8x8xf32> to vector<8x8xbf16>
    %cst_21 = arith.constant dense<0.000000e+00> : vector<8x8xf32>
    %64 = tpu.matmul %62, %63, %cst_21 {dimension_numbers = #tpu.dot_dimension_numbers<[1], [1], [0], [0], [0, 0, 1, 0], [], []>} : vector<8x8xbf16>, vector<8x8xbf16>, vector<8x8xf32> -> vector<8x8xf32>
    %cst_22 = arith.constant 0.353553385 : f32
    %65 = vector.broadcast %cst_22 : f32 to vector<8x8xf32>
    %66 = arith.mulf %64, %65 : vector<8x8xf32>
    %cst_23 = arith.constant -1.000000e+30 : f32
    %67 = vector.broadcast %cst_23 : f32 to vector<8x8xf32>
    %68 = arith.select %15, %66, %67 : vector<8x8xi1>, vector<8x8xf32>
    %cst_24 = arith.constant dense<0xFF800000> : vector<8xf32>
    %69 = vector.multi_reduction <maximumf>, %68, %cst_24 [1] : vector<8x8xf32> to vector<8xf32>
    %70 = vector.shape_cast %69 : vector<8xf32> to vector<8x1xf32>
    %71 = vector.broadcast %70 : vector<8x1xf32> to vector<8x8xf32>
    %72 = arith.subf %68, %71 : vector<8x8xf32>
    %73 = math.exp %72 : vector<8x8xf32>
    %cst_25 = arith.constant dense<0.000000e+00> : vector<8xf32>
    %74 = vector.multi_reduction <add>, %73, %cst_25 [1] : vector<8x8xf32> to vector<8xf32>
    %75 = vector.shape_cast %74 : vector<8xf32> to vector<8x1xf32>
    %76 = vector.broadcast %75 : vector<8x1xf32> to vector<8x8xf32>
    %77 = arith.divf %73, %76 : vector<8x8xf32>
    %78 = vector.extract_strided_slice %12 {offsets = [0, 16], sizes = [8, 8], strides = [1, 1]} : vector<8x32xf32> to vector<8x8xf32>
    %79 = arith.truncf %77 : vector<8x8xf32> to vector<8x8xbf16>
    %80 = arith.truncf %78 : vector<8x8xf32> to vector<8x8xbf16>
    %cst_26 = arith.constant dense<0.000000e+00> : vector<8x8xf32>
    %81 = tpu.matmul %79, %80, %cst_26 {dimension_numbers = #tpu.dot_dimension_numbers<[1], [0], [0], [1], [0, 0, 1, 1], [], []>} : vector<8x8xbf16>, vector<8x8xbf16>, vector<8x8xf32> -> vector<8x8xf32>
    %82 = vector.extract_strided_slice %10 {offsets = [0, 24], sizes = [8, 8], strides = [1, 1]} : vector<8x32xf32> to vector<8x8xf32>
    %83 = vector.extract_strided_slice %11 {offsets = [0, 24], sizes = [8, 8], strides = [1, 1]} : vector<8x32xf32> to vector<8x8xf32>
    %84 = arith.truncf %82 : vector<8x8xf32> to vector<8x8xbf16>
    %85 = arith.truncf %83 : vector<8x8xf32> to vector<8x8xbf16>
    %cst_27 = arith.constant dense<0.000000e+00> : vector<8x8xf32>
    %86 = tpu.matmul %84, %85, %cst_27 {dimension_numbers = #tpu.dot_dimension_numbers<[1], [1], [0], [0], [0, 0, 1, 0], [], []>} : vector<8x8xbf16>, vector<8x8xbf16>, vector<8x8xf32> -> vector<8x8xf32>
    %cst_28 = arith.constant 0.353553385 : f32
    %87 = vector.broadcast %cst_28 : f32 to vector<8x8xf32>
    %88 = arith.mulf %86, %87 : vector<8x8xf32>
    %cst_29 = arith.constant -1.000000e+30 : f32
    %89 = vector.broadcast %cst_29 : f32 to vector<8x8xf32>
    %90 = arith.select %15, %88, %89 : vector<8x8xi1>, vector<8x8xf32>
    %cst_30 = arith.constant dense<0xFF800000> : vector<8xf32>
    %91 = vector.multi_reduction <maximumf>, %90, %cst_30 [1] : vector<8x8xf32> to vector<8xf32>
    %92 = vector.shape_cast %91 : vector<8xf32> to vector<8x1xf32>
    %93 = vector.broadcast %92 : vector<8x1xf32> to vector<8x8xf32>
    %94 = arith.subf %90, %93 : vector<8x8xf32>
    %95 = math.exp %94 : vector<8x8xf32>
    %cst_31 = arith.constant dense<0.000000e+00> : vector<8xf32>
    %96 = vector.multi_reduction <add>, %95, %cst_31 [1] : vector<8x8xf32> to vector<8xf32>
    %97 = vector.shape_cast %96 : vector<8xf32> to vector<8x1xf32>
    %98 = vector.broadcast %97 : vector<8x1xf32> to vector<8x8xf32>
    %99 = arith.divf %95, %98 : vector<8x8xf32>
    %100 = vector.extract_strided_slice %12 {offsets = [0, 24], sizes = [8, 8], strides = [1, 1]} : vector<8x32xf32> to vector<8x8xf32>
    %101 = arith.truncf %99 : vector<8x8xf32> to vector<8x8xbf16>
    %102 = arith.truncf %100 : vector<8x8xf32> to vector<8x8xbf16>
    %cst_32 = arith.constant dense<0.000000e+00> : vector<8x8xf32>
    %103 = tpu.matmul %101, %102, %cst_32 {dimension_numbers = #tpu.dot_dimension_numbers<[1], [0], [0], [1], [0, 0, 1, 1], [], []>} : vector<8x8xbf16>, vector<8x8xbf16>, vector<8x8xf32> -> vector<8x8xf32>
    %104 = tpu.concatenate %37, %59, %81, %103 in 1 : vector<8x8xf32>, vector<8x8xf32>, vector<8x8xf32>, vector<8x8xf32> -> vector<8x32xf32>
    %c0_33 = arith.constant 0 : index
    %c0_34 = arith.constant 0 : index
    %105 = vector.load %arg5[%c0_33, %c0_34] : memref<32x32xbf16, #tpu.memory_space<vmem>>, vector<32x32xbf16>
    %106 = arith.truncf %104 : vector<8x32xf32> to vector<8x32xbf16>
    %cst_35 = arith.constant dense<0.000000e+00> : vector<8x32xf32>
    %107 = tpu.matmul %106, %105, %cst_35 {dimension_numbers = #tpu.dot_dimension_numbers<[1], [0], [0], [1], [0, 0, 1, 1], [], []>} : vector<8x32xbf16>, vector<32x32xbf16>, vector<8x32xf32> -> vector<8x32xf32>
    %c0_36 = arith.constant 0 : index
    %c0_37 = arith.constant 0 : index
    %108 = vector.load %arg6[%c0_36, %c0_37] : memref<1x32xf32, #tpu.memory_space<vmem>>, vector<1x32xf32>
    %109 = vector.broadcast %108 : vector<1x32xf32> to vector<8x32xf32>
    %110 = arith.addf %107, %109 : vector<8x32xf32>
    %c0_38 = arith.constant 0 : index
    %c0_39 = arith.constant 0 : index
    %111 = vector.load %arg7[%c0_38, %c0_39] : memref<1x32xf32, #tpu.memory_space<vmem>>, vector<1x32xf32>
    %c0_40 = arith.constant 0 : index
    %c0_41 = arith.constant 0 : index
    %112 = vector.load %arg8[%c0_40, %c0_41] : memref<1x32xf32, #tpu.memory_space<vmem>>, vector<1x32xf32>
    %cst_42 = arith.constant dense<0.000000e+00> : vector<8xf32>
    %113 = vector.multi_reduction <add>, %110, %cst_42 [1] : vector<8x32xf32> to vector<8xf32>
    %114 = vector.shape_cast %113 : vector<8xf32> to vector<8x1xf32>
    %cst_43 = arith.constant 3.200000e+01 : f32
    %115 = vector.broadcast %cst_43 : f32 to vector<8x1xf32>
    %116 = arith.divf %114, %115 : vector<8x1xf32>
    %117 = vector.broadcast %116 : vector<8x1xf32> to vector<8x32xf32>
    %118 = arith.subf %110, %117 : vector<8x32xf32>
    %119 = arith.mulf %118, %118 : vector<8x32xf32>
    %cst_44 = arith.constant dense<0.000000e+00> : vector<8xf32>
    %120 = vector.multi_reduction <add>, %119, %cst_44 [1] : vector<8x32xf32> to vector<8xf32>
    %121 = vector.shape_cast %120 : vector<8xf32> to vector<8x1xf32>
    %cst_45 = arith.constant 3.200000e+01 : f32
    %122 = vector.broadcast %cst_45 : f32 to vector<8x1xf32>
    %123 = arith.divf %121, %122 : vector<8x1xf32>
    %cst_46 = arith.constant 9.99999974E-6 : f32
    %124 = vector.broadcast %cst_46 : f32 to vector<8x1xf32>
    %125 = arith.addf %123, %124 : vector<8x1xf32>
    %126 = math.rsqrt %125 : vector<8x1xf32>
    %127 = vector.broadcast %126 : vector<8x1xf32> to vector<8x32xf32>
    %128 = arith.mulf %118, %127 : vector<8x32xf32>
    %129 = vector.broadcast %111 : vector<1x32xf32> to vector<8x32xf32>
    %130 = arith.mulf %128, %129 : vector<8x32xf32>
    %131 = vector.broadcast %112 : vector<1x32xf32> to vector<8x32xf32>
    %132 = arith.addf %130, %131 : vector<8x32xf32>
    %c0_47 = arith.constant 0 : index
    %c0_48 = arith.constant 0 : index
    %133 = vector.load %arg11[%c0_47, %c0_48] : memref<32x64xbf16, #tpu.memory_space<vmem>>, vector<32x64xbf16>
    %134 = arith.truncf %3 : vector<16x32xf32> to vector<16x32xbf16>
    %cst_49 = arith.constant dense<0.000000e+00> : vector<16x64xf32>
    %135 = tpu.matmul %134, %133, %cst_49 {dimension_numbers = #tpu.dot_dimension_numbers<[1], [0], [0], [1], [0, 0, 1, 1], [], []>} : vector<16x32xbf16>, vector<32x64xbf16>, vector<16x64xf32> -> vector<16x64xf32>
    %c0_50 = arith.constant 0 : index
    %c0_51 = arith.constant 0 : index
    %136 = vector.load %arg12[%c0_50, %c0_51] : memref<1x64xf32, #tpu.memory_space<vmem>>, vector<1x64xf32>
    %137 = vector.broadcast %136 : vector<1x64xf32> to vector<16x64xf32>
    %138 = arith.addf %135, %137 : vector<16x64xf32>
    %c0_52 = arith.constant 0 : index
    %c0_53 = arith.constant 0 : index
    %139 = vector.load %arg9[%c0_52, %c0_53] : memref<32x32xbf16, #tpu.memory_space<vmem>>, vector<32x32xbf16>
    %140 = arith.truncf %132 : vector<8x32xf32> to vector<8x32xbf16>
    %cst_54 = arith.constant dense<0.000000e+00> : vector<8x32xf32>
    %141 = tpu.matmul %140, %139, %cst_54 {dimension_numbers = #tpu.dot_dimension_numbers<[1], [0], [0], [1], [0, 0, 1, 1], [], []>} : vector<8x32xbf16>, vector<32x32xbf16>, vector<8x32xf32> -> vector<8x32xf32>
    %c0_55 = arith.constant 0 : index
    %c0_56 = arith.constant 0 : index
    %142 = vector.load %arg10[%c0_55, %c0_56] : memref<1x32xf32, #tpu.memory_space<vmem>>, vector<1x32xf32>
    %143 = vector.broadcast %142 : vector<1x32xf32> to vector<8x32xf32>
    %144 = arith.addf %141, %143 : vector<8x32xf32>
    %145 = vector.extract_strided_slice %138 {offsets = [0, 0], sizes = [16, 32], strides = [1, 1]} : vector<16x64xf32> to vector<16x32xf32>
    %146 = vector.extract_strided_slice %138 {offsets = [0, 32], sizes = [16, 32], strides = [1, 1]} : vector<16x64xf32> to vector<16x32xf32>
    %147 = vector.extract_strided_slice %144 {offsets = [0, 0], sizes = [8, 8], strides = [1, 1]} : vector<8x32xf32> to vector<8x8xf32>
    %148 = vector.extract_strided_slice %145 {offsets = [0, 0], sizes = [16, 8], strides = [1, 1]} : vector<16x32xf32> to vector<16x8xf32>
    %149 = arith.truncf %147 : vector<8x8xf32> to vector<8x8xbf16>
    %150 = arith.truncf %148 : vector<16x8xf32> to vector<16x8xbf16>
    %cst_57 = arith.constant dense<0.000000e+00> : vector<8x16xf32>
    %151 = tpu.matmul %149, %150, %cst_57 {dimension_numbers = #tpu.dot_dimension_numbers<[1], [1], [0], [0], [0, 0, 1, 0], [], []>} : vector<8x8xbf16>, vector<16x8xbf16>, vector<8x16xf32> -> vector<8x16xf32>
    %cst_58 = arith.constant 0.353553385 : f32
    %152 = vector.broadcast %cst_58 : f32 to vector<8x16xf32>
    %153 = arith.mulf %151, %152 : vector<8x16xf32>
    %cst_59 = arith.constant dense<0xFF800000> : vector<8xf32>
    %154 = vector.multi_reduction <maximumf>, %153, %cst_59 [1] : vector<8x16xf32> to vector<8xf32>
    %155 = vector.shape_cast %154 : vector<8xf32> to vector<8x1xf32>
    %156 = vector.broadcast %155 : vector<8x1xf32> to vector<8x16xf32>
    %157 = arith.subf %153, %156 : vector<8x16xf32>
    %158 = math.exp %157 : vector<8x16xf32>
    %cst_60 = arith.constant dense<0.000000e+00> : vector<8xf32>
    %159 = vector.multi_reduction <add>, %158, %cst_60 [1] : vector<8x16xf32> to vector<8xf32>
    %160 = vector.shape_cast %159 : vector<8xf32> to vector<8x1xf32>
    %161 = vector.broadcast %160 : vector<8x1xf32> to vector<8x16xf32>
    %162 = arith.divf %158, %161 : vector<8x16xf32>
    %163 = vector.extract_strided_slice %146 {offsets = [0, 0], sizes = [16, 8], strides = [1, 1]} : vector<16x32xf32> to vector<16x8xf32>
    %164 = arith.truncf %162 : vector<8x16xf32> to vector<8x16xbf16>
    %165 = arith.truncf %163 : vector<16x8xf32> to vector<16x8xbf16>
    %cst_61 = arith.constant dense<0.000000e+00> : vector<8x8xf32>
    %166 = tpu.matmul %164, %165, %cst_61 {dimension_numbers = #tpu.dot_dimension_numbers<[1], [0], [0], [1], [0, 0, 1, 1], [], []>} : vector<8x16xbf16>, vector<16x8xbf16>, vector<8x8xf32> -> vector<8x8xf32>
    %167 = vector.extract_strided_slice %144 {offsets = [0, 8], sizes = [8, 8], strides = [1, 1]} : vector<8x32xf32> to vector<8x8xf32>
    %168 = vector.extract_strided_slice %145 {offsets = [0, 8], sizes = [16, 8], strides = [1, 1]} : vector<16x32xf32> to vector<16x8xf32>
    %169 = arith.truncf %167 : vector<8x8xf32> to vector<8x8xbf16>
    %170 = arith.truncf %168 : vector<16x8xf32> to vector<16x8xbf16>
    %cst_62 = arith.constant dense<0.000000e+00> : vector<8x16xf32>
    %171 = tpu.matmul %169, %170, %cst_62 {dimension_numbers = #tpu.dot_dimension_numbers<[1], [1], [0], [0], [0, 0, 1, 0], [], []>} : vector<8x8xbf16>, vector<16x8xbf16>, vector<8x16xf32> -> vector<8x16xf32>
    %cst_63 = arith.constant 0.353553385 : f32
    %172 = vector.broadcast %cst_63 : f32 to vector<8x16xf32>
    %173 = arith.mulf %171, %172 : vector<8x16xf32>
    %cst_64 = arith.constant dense<0xFF800000> : vector<8xf32>
    %174 = vector.multi_reduction <maximumf>, %173, %cst_64 [1] : vector<8x16xf32> to vector<8xf32>
    %175 = vector.shape_cast %174 : vector<8xf32> to vector<8x1xf32>
    %176 = vector.broadcast %175 : vector<8x1xf32> to vector<8x16xf32>
    %177 = arith.subf %173, %176 : vector<8x16xf32>
    %178 = math.exp %177 : vector<8x16xf32>
    %cst_65 = arith.constant dense<0.000000e+00> : vector<8xf32>
    %179 = vector.multi_reduction <add>, %178, %cst_65 [1] : vector<8x16xf32> to vector<8xf32>
    %180 = vector.shape_cast %179 : vector<8xf32> to vector<8x1xf32>
    %181 = vector.broadcast %180 : vector<8x1xf32> to vector<8x16xf32>
    %182 = arith.divf %178, %181 : vector<8x16xf32>
    %183 = vector.extract_strided_slice %146 {offsets = [0, 8], sizes = [16, 8], strides = [1, 1]} : vector<16x32xf32> to vector<16x8xf32>
    %184 = arith.truncf %182 : vector<8x16xf32> to vector<8x16xbf16>
    %185 = arith.truncf %183 : vector<16x8xf32> to vector<16x8xbf16>
    %cst_66 = arith.constant dense<0.000000e+00> : vector<8x8xf32>
    %186 = tpu.matmul %184, %185, %cst_66 {dimension_numbers = #tpu.dot_dimension_numbers<[1], [0], [0], [1], [0, 0, 1, 1], [], []>} : vector<8x16xbf16>, vector<16x8xbf16>, vector<8x8xf32> -> vector<8x8xf32>
    %187 = vector.extract_strided_slice %144 {offsets = [0, 16], sizes = [8, 8], strides = [1, 1]} : vector<8x32xf32> to vector<8x8xf32>
    %188 = vector.extract_strided_slice %145 {offsets = [0, 16], sizes = [16, 8], strides = [1, 1]} : vector<16x32xf32> to vector<16x8xf32>
    %189 = arith.truncf %187 : vector<8x8xf32> to vector<8x8xbf16>
    %190 = arith.truncf %188 : vector<16x8xf32> to vector<16x8xbf16>
    %cst_67 = arith.constant dense<0.000000e+00> : vector<8x16xf32>
    %191 = tpu.matmul %189, %190, %cst_67 {dimension_numbers = #tpu.dot_dimension_numbers<[1], [1], [0], [0], [0, 0, 1, 0], [], []>} : vector<8x8xbf16>, vector<16x8xbf16>, vector<8x16xf32> -> vector<8x16xf32>
    %cst_68 = arith.constant 0.353553385 : f32
    %192 = vector.broadcast %cst_68 : f32 to vector<8x16xf32>
    %193 = arith.mulf %191, %192 : vector<8x16xf32>
    %cst_69 = arith.constant dense<0xFF800000> : vector<8xf32>
    %194 = vector.multi_reduction <maximumf>, %193, %cst_69 [1] : vector<8x16xf32> to vector<8xf32>
    %195 = vector.shape_cast %194 : vector<8xf32> to vector<8x1xf32>
    %196 = vector.broadcast %195 : vector<8x1xf32> to vector<8x16xf32>
    %197 = arith.subf %193, %196 : vector<8x16xf32>
    %198 = math.exp %197 : vector<8x16xf32>
    %cst_70 = arith.constant dense<0.000000e+00> : vector<8xf32>
    %199 = vector.multi_reduction <add>, %198, %cst_70 [1] : vector<8x16xf32> to vector<8xf32>
    %200 = vector.shape_cast %199 : vector<8xf32> to vector<8x1xf32>
    %201 = vector.broadcast %200 : vector<8x1xf32> to vector<8x16xf32>
    %202 = arith.divf %198, %201 : vector<8x16xf32>
    %203 = vector.extract_strided_slice %146 {offsets = [0, 16], sizes = [16, 8], strides = [1, 1]} : vector<16x32xf32> to vector<16x8xf32>
    %204 = arith.truncf %202 : vector<8x16xf32> to vector<8x16xbf16>
    %205 = arith.truncf %203 : vector<16x8xf32> to vector<16x8xbf16>
    %cst_71 = arith.constant dense<0.000000e+00> : vector<8x8xf32>
    %206 = tpu.matmul %204, %205, %cst_71 {dimension_numbers = #tpu.dot_dimension_numbers<[1], [0], [0], [1], [0, 0, 1, 1], [], []>} : vector<8x16xbf16>, vector<16x8xbf16>, vector<8x8xf32> -> vector<8x8xf32>
    %207 = vector.extract_strided_slice %144 {offsets = [0, 24], sizes = [8, 8], strides = [1, 1]} : vector<8x32xf32> to vector<8x8xf32>
    %208 = vector.extract_strided_slice %145 {offsets = [0, 24], sizes = [16, 8], strides = [1, 1]} : vector<16x32xf32> to vector<16x8xf32>
    %209 = arith.truncf %207 : vector<8x8xf32> to vector<8x8xbf16>
    %210 = arith.truncf %208 : vector<16x8xf32> to vector<16x8xbf16>
    %cst_72 = arith.constant dense<0.000000e+00> : vector<8x16xf32>
    %211 = tpu.matmul %209, %210, %cst_72 {dimension_numbers = #tpu.dot_dimension_numbers<[1], [1], [0], [0], [0, 0, 1, 0], [], []>} : vector<8x8xbf16>, vector<16x8xbf16>, vector<8x16xf32> -> vector<8x16xf32>
    %cst_73 = arith.constant 0.353553385 : f32
    %212 = vector.broadcast %cst_73 : f32 to vector<8x16xf32>
    %213 = arith.mulf %211, %212 : vector<8x16xf32>
    %cst_74 = arith.constant dense<0xFF800000> : vector<8xf32>
    %214 = vector.multi_reduction <maximumf>, %213, %cst_74 [1] : vector<8x16xf32> to vector<8xf32>
    %215 = vector.shape_cast %214 : vector<8xf32> to vector<8x1xf32>
    %216 = vector.broadcast %215 : vector<8x1xf32> to vector<8x16xf32>
    %217 = arith.subf %213, %216 : vector<8x16xf32>
    %218 = math.exp %217 : vector<8x16xf32>
    %cst_75 = arith.constant dense<0.000000e+00> : vector<8xf32>
    %219 = vector.multi_reduction <add>, %218, %cst_75 [1] : vector<8x16xf32> to vector<8xf32>
    %220 = vector.shape_cast %219 : vector<8xf32> to vector<8x1xf32>
    %221 = vector.broadcast %220 : vector<8x1xf32> to vector<8x16xf32>
    %222 = arith.divf %218, %221 : vector<8x16xf32>
    %223 = vector.extract_strided_slice %146 {offsets = [0, 24], sizes = [16, 8], strides = [1, 1]} : vector<16x32xf32> to vector<16x8xf32>
    %224 = arith.truncf %222 : vector<8x16xf32> to vector<8x16xbf16>
    %225 = arith.truncf %223 : vector<16x8xf32> to vector<16x8xbf16>
    %cst_76 = arith.constant dense<0.000000e+00> : vector<8x8xf32>
    %226 = tpu.matmul %224, %225, %cst_76 {dimension_numbers = #tpu.dot_dimension_numbers<[1], [0], [0], [1], [0, 0, 1, 1], [], []>} : vector<8x16xbf16>, vector<16x8xbf16>, vector<8x8xf32> -> vector<8x8xf32>
    %227 = tpu.concatenate %166, %186, %206, %226 in 1 : vector<8x8xf32>, vector<8x8xf32>, vector<8x8xf32>, vector<8x8xf32> -> vector<8x32xf32>
    %c0_77 = arith.constant 0 : index
    %c0_78 = arith.constant 0 : index
    %228 = vector.load %arg13[%c0_77, %c0_78] : memref<32x32xbf16, #tpu.memory_space<vmem>>, vector<32x32xbf16>
    %229 = arith.truncf %227 : vector<8x32xf32> to vector<8x32xbf16>
    %cst_79 = arith.constant dense<0.000000e+00> : vector<8x32xf32>
    %230 = tpu.matmul %229, %228, %cst_79 {dimension_numbers = #tpu.dot_dimension_numbers<[1], [0], [0], [1], [0, 0, 1, 1], [], []>} : vector<8x32xbf16>, vector<32x32xbf16>, vector<8x32xf32> -> vector<8x32xf32>
    %231 = arith.addf %132, %230 : vector<8x32xf32>
    %c0_80 = arith.constant 0 : index
    %c0_81 = arith.constant 0 : index
    %232 = vector.load %arg14[%c0_80, %c0_81] : memref<1x32xf32, #tpu.memory_space<vmem>>, vector<1x32xf32>
    %233 = vector.broadcast %232 : vector<1x32xf32> to vector<8x32xf32>
    %234 = arith.addf %231, %233 : vector<8x32xf32>
    %c0_82 = arith.constant 0 : index
    %c0_83 = arith.constant 0 : index
    %235 = vector.load %arg15[%c0_82, %c0_83] : memref<1x32xf32, #tpu.memory_space<vmem>>, vector<1x32xf32>
    %c0_84 = arith.constant 0 : index
    %c0_85 = arith.constant 0 : index
    %236 = vector.load %arg16[%c0_84, %c0_85] : memref<1x32xf32, #tpu.memory_space<vmem>>, vector<1x32xf32>
    %cst_86 = arith.constant dense<0.000000e+00> : vector<8xf32>
    %237 = vector.multi_reduction <add>, %234, %cst_86 [1] : vector<8x32xf32> to vector<8xf32>
    %238 = vector.shape_cast %237 : vector<8xf32> to vector<8x1xf32>
    %cst_87 = arith.constant 3.200000e+01 : f32
    %239 = vector.broadcast %cst_87 : f32 to vector<8x1xf32>
    %240 = arith.divf %238, %239 : vector<8x1xf32>
    %241 = vector.broadcast %240 : vector<8x1xf32> to vector<8x32xf32>
    %242 = arith.subf %234, %241 : vector<8x32xf32>
    %243 = arith.mulf %242, %242 : vector<8x32xf32>
    %cst_88 = arith.constant dense<0.000000e+00> : vector<8xf32>
    %244 = vector.multi_reduction <add>, %243, %cst_88 [1] : vector<8x32xf32> to vector<8xf32>
    %245 = vector.shape_cast %244 : vector<8xf32> to vector<8x1xf32>
    %cst_89 = arith.constant 3.200000e+01 : f32
    %246 = vector.broadcast %cst_89 : f32 to vector<8x1xf32>
    %247 = arith.divf %245, %246 : vector<8x1xf32>
    %cst_90 = arith.constant 9.99999974E-6 : f32
    %248 = vector.broadcast %cst_90 : f32 to vector<8x1xf32>
    %249 = arith.addf %247, %248 : vector<8x1xf32>
    %250 = math.rsqrt %249 : vector<8x1xf32>
    %251 = vector.broadcast %250 : vector<8x1xf32> to vector<8x32xf32>
    %252 = arith.mulf %242, %251 : vector<8x32xf32>
    %253 = vector.broadcast %235 : vector<1x32xf32> to vector<8x32xf32>
    %254 = arith.mulf %252, %253 : vector<8x32xf32>
    %255 = vector.broadcast %236 : vector<1x32xf32> to vector<8x32xf32>
    %256 = arith.addf %254, %255 : vector<8x32xf32>
    %c0_91 = arith.constant 0 : index
    %c0_92 = arith.constant 0 : index
    %257 = vector.load %arg17[%c0_91, %c0_92] : memref<32x128xbf16, #tpu.memory_space<vmem>>, vector<32x128xbf16>
    %258 = arith.truncf %256 : vector<8x32xf32> to vector<8x32xbf16>
    %cst_93 = arith.constant dense<0.000000e+00> : vector<8x128xf32>
    %259 = tpu.matmul %258, %257, %cst_93 {dimension_numbers = #tpu.dot_dimension_numbers<[1], [0], [0], [1], [0, 0, 1, 1], [], []>} : vector<8x32xbf16>, vector<32x128xbf16>, vector<8x128xf32> -> vector<8x128xf32>
    %c0_94 = arith.constant 0 : index
    %c0_95 = arith.constant 0 : index
    %260 = vector.load %arg18[%c0_94, %c0_95] : memref<1x128xf32, #tpu.memory_space<vmem>>, vector<1x128xf32>
    %261 = vector.broadcast %260 : vector<1x128xf32> to vector<8x128xf32>
    %262 = arith.addf %259, %261 : vector<8x128xf32>
    %cst_96 = arith.constant 5.000000e-01 : f32
    %263 = vector.broadcast %cst_96 : f32 to vector<8x128xf32>
    %264 = arith.mulf %263, %262 : vector<8x128xf32>
    %cst_97 = arith.constant 4.471500e-02 : f32
    %265 = vector.broadcast %cst_97 : f32 to vector<8x128xf32>
    %266 = arith.mulf %265, %262 : vector<8x128xf32>
    %267 = arith.mulf %266, %262 : vector<8x128xf32>
    %268 = arith.mulf %267, %262 : vector<8x128xf32>
    %269 = arith.addf %262, %268 : vector<8x128xf32>
    %cst_98 = arith.constant 0.797884583 : f32
    %270 = vector.broadcast %cst_98 : f32 to vector<8x128xf32>
    %271 = arith.mulf %270, %269 : vector<8x128xf32>
    %272 = math.tanh %271 : vector<8x128xf32>
    %cst_99 = arith.constant 1.000000e+00 : f32
    %273 = vector.broadcast %cst_99 : f32 to vector<8x128xf32>
    %274 = arith.addf %273, %272 : vector<8x128xf32>
    %275 = arith.mulf %264, %274 : vector<8x128xf32>
    %c0_100 = arith.constant 0 : index
    %c0_101 = arith.constant 0 : index
    %276 = vector.load %arg19[%c0_100, %c0_101] : memref<128x32xbf16, #tpu.memory_space<vmem>>, vector<128x32xbf16>
    %277 = arith.truncf %275 : vector<8x128xf32> to vector<8x128xbf16>
    %cst_102 = arith.constant dense<0.000000e+00> : vector<8x32xf32>
    %278 = tpu.matmul %277, %276, %cst_102 {dimension_numbers = #tpu.dot_dimension_numbers<[1], [0], [0], [1], [0, 0, 1, 1], [], []>} : vector<8x128xbf16>, vector<128x32xbf16>, vector<8x32xf32> -> vector<8x32xf32>
    %279 = arith.addf %256, %278 : vector<8x32xf32>
    %c0_103 = arith.constant 0 : index
    %c0_104 = arith.constant 0 : index
    %280 = vector.load %arg20[%c0_103, %c0_104] : memref<1x32xf32, #tpu.memory_space<vmem>>, vector<1x32xf32>
    %281 = vector.broadcast %280 : vector<1x32xf32> to vector<8x32xf32>
    %282 = arith.addf %279, %281 : vector<8x32xf32>
    %c0_105 = arith.constant 0 : index
    %c0_106 = arith.constant 0 : index
    %283 = vector.load %arg21[%c0_105, %c0_106] : memref<1x32xf32, #tpu.memory_space<vmem>>, vector<1x32xf32>
    %c0_107 = arith.constant 0 : index
    %c0_108 = arith.constant 0 : index
    %284 = vector.load %arg22[%c0_107, %c0_108] : memref<1x32xf32, #tpu.memory_space<vmem>>, vector<1x32xf32>
    %cst_109 = arith.constant dense<0.000000e+00> : vector<8xf32>
    %285 = vector.multi_reduction <add>, %282, %cst_109 [1] : vector<8x32xf32> to vector<8xf32>
    %286 = vector.shape_cast %285 : vector<8xf32> to vector<8x1xf32>
    %cst_110 = arith.constant 3.200000e+01 : f32
    %287 = vector.broadcast %cst_110 : f32 to vector<8x1xf32>
    %288 = arith.divf %286, %287 : vector<8x1xf32>
    %289 = vector.broadcast %288 : vector<8x1xf32> to vector<8x32xf32>
    %290 = arith.subf %282, %289 : vector<8x32xf32>
    %291 = arith.mulf %290, %290 : vector<8x32xf32>
    %cst_111 = arith.constant dense<0.000000e+00> : vector<8xf32>
    %292 = vector.multi_reduction <add>, %291, %cst_111 [1] : vector<8x32xf32> to vector<8xf32>
    %293 = vector.shape_cast %292 : vector<8xf32> to vector<8x1xf32>
    %cst_112 = arith.constant 3.200000e+01 : f32
    %294 = vector.broadcast %cst_112 : f32 to vector<8x1xf32>
    %295 = arith.divf %293, %294 : vector<8x1xf32>
    %cst_113 = arith.constant 9.99999974E-6 : f32
    %296 = vector.broadcast %cst_113 : f32 to vector<8x1xf32>
    %297 = arith.addf %295, %296 : vector<8x1xf32>
    %298 = math.rsqrt %297 : vector<8x1xf32>
    %299 = vector.broadcast %298 : vector<8x1xf32> to vector<8x32xf32>
    %300 = arith.mulf %290, %299 : vector<8x32xf32>
    %301 = vector.broadcast %283 : vector<1x32xf32> to vector<8x32xf32>
    %302 = arith.mulf %300, %301 : vector<8x32xf32>
    %303 = vector.broadcast %284 : vector<1x32xf32> to vector<8x32xf32>
    %304 = arith.addf %302, %303 : vector<8x32xf32>
    %c0_114 = arith.constant 0 : index
    %c0_115 = arith.constant 0 : index
    %c0_116 = arith.constant 0 : index
    %305 = vector.load %arg23[%c0_114, %c0_115, %c0_116] : memref<1x8x32xf32, #tpu.memory_space<vmem>>, vector<1x8x32xf32>
    %306 = vector.shape_cast %305 : vector<1x8x32xf32> to vector<8x32xf32>
    %307 = vector.shape_cast %304 : vector<8x32xf32> to vector<1x8x32xf32>
    tpu.vector_store %arg23[%c0_114, %c0_115, %c0_116], %307 {strides = array<i32>} : memref<1x8x32xf32, #tpu.memory_space<vmem>>, vector<1x8x32xf32>,
    return
  }
  func.func @transform_0(%arg0: i32) -> (i32, i32, i32) {
    %c0_i32 = arith.constant 0 : i32
    %c0_i32_0 = arith.constant 0 : i32
    %c0_i32_1 = arith.constant 0 : i32
    return %arg0, %c0_i32, %c0_i32_0 : i32, i32, i32
  }
  func.func @transform_1(%arg0: i32) -> (i32, i32, i32) {
    %c0_i32 = arith.constant 0 : i32
    %c0_i32_0 = arith.constant 0 : i32
    %c0_i32_1 = arith.constant 0 : i32
    return %arg0, %c0_i32, %c0_i32_0 : i32, i32, i32
  }
  func.func @transform_2(%arg0: i32) -> (i32, i32) {
    %c0_i32 = arith.constant 0 : i32
    %c0_i32_0 = arith.constant 0 : i32
    %c0_i32_1 = arith.constant 0 : i32
    return %c0_i32, %c0_i32_0 : i32, i32
  }
  func.func @transform_3(%arg0: i32) -> (i32, i32) {
    %c0_i32 = arith.constant 0 : i32
    %c0_i32_0 = arith.constant 0 : i32
    %c0_i32_1 = arith.constant 0 : i32
    return %c0_i32, %c0_i32_0 : i32, i32
  }
  func.func @transform_4(%arg0: i32) -> (i32, i32) {
    %c0_i32 = arith.constant 0 : i32
    %c0_i32_0 = arith.constant 0 : i32
    %c0_i32_1 = arith.constant 0 : i32
    return %c0_i32, %c0_i32_0 : i32, i32
  }
  func.func @transform_5(%arg0: i32) -> (i32, i32) {
    %c0_i32 = arith.constant 0 : i32
    %c0_i32_0 = arith.constant 0 : i32
    %c0_i32_1 = arith.constant 0 : i32
    return %c0_i32, %c0_i32_0 : i32, i32
  }
  func.func @transform_6(%arg0: i32) -> (i32, i32) {
    %c0_i32 = arith.constant 0 : i32
    %c0_i32_0 = arith.constant 0 : i32
    %c0_i32_1 = arith.constant 0 : i32
    return %c0_i32, %c0_i32_0 : i32, i32
  }
  func.func @transform_7(%arg0: i32) -> (i32, i32) {
    %c0_i32 = arith.constant 0 : i32
    %c0_i32_0 = arith.constant 0 : i32
    %c0_i32_1 = arith.constant 0 : i32
    return %c0_i32, %c0_i32_0 : i32, i32
  }
  func.func @transform_8(%arg0: i32) -> (i32, i32) {
    %c0_i32 = arith.constant 0 : i32
    %c0_i32_0 = arith.constant 0 : i32
    %c0_i32_1 = arith.constant 0 : i32
    return %c0_i32, %c0_i32_0 : i32, i32
  }
  func.func @transform_9(%arg0: i32) -> (i32, i32) {
    %c0_i32 = arith.constant 0 : i32
    %c0_i32_0 = arith.constant 0 : i32
    %c0_i32_1 = arith.constant 0 : i32
    return %c0_i32, %c0_i32_0 : i32, i32
  }
  func.func @transform_10(%arg0: i32) -> (i32, i32) {
    %c0_i32 = arith.constant 0 : i32
    %c0_i32_0 = arith.constant 0 : i32
    %c0_i32_1 = arith.constant 0 : i32
    return %c0_i32, %c0_i32_0 : i32, i32
  }
  func.func @transform_11(%arg0: i32) -> (i32, i32) {
    %c0_i32 = arith.constant 0 : i32
    %c0_i32_0 = arith.constant 0 : i32
    %c0_i32_1 = arith.constant 0 : i32
    return %c0_i32, %c0_i32_0 : i32, i32
  }
  func.func @transform_12(%arg0: i32) -> (i32, i32) {
    %c0_i32 = arith.constant 0 : i32
    %c0_i32_0 = arith.constant 0 : i32
    %c0_i32_1 = arith.constant 0 : i32
    return %c0_i32, %c0_i32_0 : i32, i32
  }
  func.func @transform_13(%arg0: i32) -> (i32, i32) {
    %c0_i32 = arith.constant 0 : i32
    %c0_i32_0 = arith.constant 0 : i32
    %c0_i32_1 = arith.constant 0 : i32
    return %c0_i32, %c0_i32_0 : i32, i32
  }
  func.func @transform_14(%arg0: i32) -> (i32, i32) {
    %c0_i32 = arith.constant 0 : i32
    %c0_i32_0 = arith.constant 0 : i32
    %c0_i32_1 = arith.constant 0 : i32
    return %c0_i32, %c0_i32_0 : i32, i32
  }
  func.func @transform_15(%arg0: i32) -> (i32, i32) {
    %c0_i32 = arith.constant 0 : i32
    %c0_i32_0 = arith.constant 0 : i32
    %c0_i32_1 = arith.constant 0 : i32
    return %c0_i32, %c0_i32_0 : i32, i32
  }
  func.func @transform_16(%arg0: i32) -> (i32, i32) {
    %c0_i32 = arith.constant 0 : i32
    %c0_i32_0 = arith.constant 0 : i32
    %c0_i32_1 = arith.constant 0 : i32
    return %c0_i32, %c0_i32_0 : i32, i32
  }
  func.func @transform_17(%arg0: i32) -> (i32, i32) {
    %c0_i32 = arith.constant 0 : i32
    %c0_i32_0 = arith.constant 0 : i32
    %c0_i32_1 = arith.constant 0 : i32
    return %c0_i32, %c0_i32_0 : i32, i32
  }
  func.func @transform_18(%arg0: i32) -> (i32, i32) {
    %c0_i32 = arith.constant 0 : i32
    %c0_i32_0 = arith.constant 0 : i32
    %c0_i32_1 = arith.constant 0 : i32
    return %c0_i32, %c0_i32_0 : i32, i32
  }
  func.func @transform_19(%arg0: i32) -> (i32, i32) {
    %c0_i32 = arith.constant 0 : i32
    %c0_i32_0 = arith.constant 0 : i32
    %c0_i32_1 = arith.constant 0 : i32
    return %c0_i32, %c0_i32_0 : i32, i32
  }
  func.func @transform_20(%arg0: i32) -> (i32, i32) {
    %c0_i32 = arith.constant 0 : i32
    %c0_i32_0 = arith.constant 0 : i32
    %c0_i32_1 = arith.constant 0 : i32
    return %c0_i32, %c0_i32_0 : i32, i32
  }
  func.func @transform_21(%arg0: i32) -> (i32, i32) {
    %c0_i32 = arith.constant 0 : i32
    %c0_i32_0 = arith.constant 0 : i32
    %c0_i32_1 = arith.constant 0 : i32
    return %c0_i32, %c0_i32_0 : i32, i32
  }
  func.func @transform_22(%arg0: i32) -> (i32, i32, i32) {
    %c0_i32 = arith.constant 0 : i32
    %c0_i32_0 = arith.constant 0 : i32
    %c0_i32_1 = arith.constant 0 : i32
    return %arg0, %c0_i32, %c0_i32_0 : i32, i32, i32
  }
}

</mosaic_0001>

<llo_original>
// kernel: tpu_custom_call.1
$region0: #{tpu_custom_call.1}
  #allocation0 [shape = 'u32[]', space=smem, size = 0x4, offset = 0x4, fixed_abs, tag = 'smem constant byte address 0x4 - core index']
  #allocation1 [shape = 'u32[144,128]{1,0:T(1,128)}', space=vmem, size = 0x12000, scoped, tag = 'internal scratch']
  %s0 = inlined_call_operand.vmem [shape: f32[2,8,32], index: 0, kind: input, shape index: {}]
  %s1 = inlined_call_operand.vmem [shape: f32[2,16,32], index: 1, kind: input, shape index: {}]
  %s2 = inlined_call_operand.vmem [shape: bf16[32,96], index: 2, kind: input, shape index: {}]
  %s3 = inlined_call_operand.vmem [shape: f32[1,96], index: 3, kind: input, shape index: {}]
  %s4 = inlined_call_operand.vmem [shape: bf16[32,32], index: 4, kind: input, shape index: {}]
  %s5 = inlined_call_operand.hbm [shape: f32[1,32], index: 5, kind: input, shape index: {}]
  %s6 = inlined_call_operand.hbm [shape: f32[1,32], index: 6, kind: input, shape index: {}]
  %s7 = inlined_call_operand.hbm [shape: f32[1,32], index: 7, kind: input, shape index: {}]
  %s8 = inlined_call_operand.hbm [shape: bf16[32,32], index: 8, kind: input, shape index: {}]
  %s9 = inlined_call_operand.hbm [shape: f32[1,32], index: 9, kind: input, shape index: {}]
  %s10 = inlined_call_operand.vmem [shape: bf16[32,64], index: 10, kind: input, shape index: {}]
  %s11 = inlined_call_operand.hbm [shape: f32[1,64], index: 11, kind: input, shape index: {}]
  %s12 = inlined_call_operand.hbm [shape: bf16[32,32], index: 12, kind: input, shape index: {}]
  %s13 = inlined_call_operand.hbm [shape: f32[1,32], index: 13, kind: input, shape index: {}]
  %s14 = inlined_call_operand.vmem [shape: f32[1,32], index: 14, kind: input, shape index: {}]
  %s15 = inlined_call_operand.vmem [shape: f32[1,32], index: 15, kind: input, shape index: {}]
  %s16 = inlined_call_operand.vmem [shape: bf16[32,128], index: 16, kind: input, shape index: {}]
  %s17 = inlined_call_operand.vmem [shape: f32[1,128], index: 17, kind: input, shape index: {}]
  %s18 = inlined_call_operand.vmem [shape: bf16[128,32], index: 18, kind: input, shape index: {}]
  %s19 = inlined_call_operand.vmem [shape: f32[1,32], index: 19, kind: input, shape index: {}]
  %s20 = inlined_call_operand.vmem [shape: f32[1,32], index: 20, kind: input, shape index: {}]
  %s21 = inlined_call_operand.vmem [shape: f32[1,32], index: 21, kind: input, shape index: {}]
  %s22 = inlined_call_operand.hbm [shape: f32[2,8,32], index: 22, kind: output, shape index: {}]
  %s23 = sld [smem:[#allocation0]]
  $region153: #{tpu_custom_call.1} parent=0
    _
  %s25 = ssub.s32 1, %s23
  %s26 = scalar_select 0, %s25, %s23
  $region1: #{tpu_custom_call.1} parent=0
    #allocation2 [shape = 'u8[512]{0}', space=vmem, size = 0x400, scoped, tag = 'input window, operand 5, single buffered']
    #allocation3 [shape = 's32[2]{0}', space=sflag, size = 0x8, scoped, tag = 'scoped memory for tpu_custom_call.1']
    #allocation4 [shape = 's32[2]{0}', space=sflag, size = 0x8, scoped, tag = 'scoped memory for tpu_custom_call.1']
    #allocation5 [shape = 'u8[512]{0}', space=vmem, size = 0x400, scoped, tag = 'input window, operand 6, single buffered']
    #allocation6 [shape = 's32[1]{0}', space=sflag, size = 0x4, scoped, tag = 'scoped memory for tpu_custom_call.1']
    #allocation7 [shape = 'u8[512]{0}', space=vmem, size = 0x400, scoped, tag = 'input window, operand 7, single buffered']
    #allocation8 [shape = 'u8[8192]{0}', space=vmem, size = 0x2000, scoped, tag = 'input window, operand 8, single buffered']
    #allocation9 [shape = 's32[1]{0}', space=sflag, size = 0x4, scoped, tag = 'scoped memory for tpu_custom_call.1']
    #allocation10 [shape = 'u8[512]{0}', space=vmem, size = 0x400, scoped, tag = 'input window, operand 9, single buffered']
    #allocation11 [shape = 'u8[512]{0}', space=vmem, size = 0x400, scoped, tag = 'input window, operand 11, single buffered']
    #allocation12 [shape = 's32[1]{0}', space=sflag, size = 0x4, scoped, tag = 'scoped memory for tpu_custom_call.1']
    #allocation13 [shape = 'u8[8192]{0}', space=vmem, size = 0x2000, scoped, tag = 'input window, operand 12, single buffered']
    #allocation14 [shape = 'u8[512]{0}', space=vmem, size = 0x400, scoped, tag = 'input window, operand 13, single buffered']
    #allocation15 [shape = 's32[1]{0}', space=sflag, size = 0x4, scoped, tag = 'scoped memory for tpu_custom_call.1']
    #allocation16 [shape = 'u8[8192]{0}', space=vmem, size = 0x2000, scoped, tag = 'output window, operand 0']
    %27 = vsyncpa [#allocation3], 0
    %28 = vsyncpa [#allocation6], 0
    %29 = vsyncpa [#allocation9], 0
    %30 = vsyncpa [#allocation12], 0
    %31 = vsyncpa [#allocation15], 0
    %32 = vsyncpa [#allocation4], 0
    %s33 = scalar_lea.sflag [#allocation4], 1
    %34 = vsyncpa %s33, 0
    loop: start=0, step=1, limit=4
    $region2: #{tpu_custom_call.1} parent=1 // loop_pre_header
      _
    $region3: #{tpu_custom_call.1} parent=1 // loop_header
      %s36 = sphi 0, %s40
      %p37 = scmp.ge.s32.totalorder %s36, 4
      %s46 = sphi 0, %s48
      %s49 = sphi 0, %s46
      %s50 = sphi 0, %s49
      %s66 = sphi 0, %s50
      %s72 = sphi 0, %s74
      %s75 = sphi 0, %s72
      %s76 = sphi 0, %s75
      %s92 = sphi 0, %s76
      %s96 = sphi 0, %s96
      %s98 = sphi 0, %s96
      %s99 = sphi 0, %s98
      %s113 = sphi 0, %s99
      %s117 = sphi 0, %s117
      %s119 = sphi 0, %s117
      %s120 = sphi 0, %s119
      %s134 = sphi 0, %s120
      %s138 = sphi 0, %s138
      %s140 = sphi 0, %s138
      %s141 = sphi 0, %s140
      %s155 = sphi 0, %s141
      %s159 = sphi 0, %s159
      %s161 = sphi 0, %s159
      %s162 = sphi 0, %s161
      %s176 = sphi 0, %s162
      %s180 = sphi 0, %s180
      %s182 = sphi 0, %s180
      %s183 = sphi 0, %s182
      %s197 = sphi 0, %s183
      %s201 = sphi 0, %s201
      %s203 = sphi 0, %s201
      %s204 = sphi 0, %s203
      %s218 = sphi 0, %s204
      %s222 = sphi 0, %s222
      %s224 = sphi 0, %s222
      %s225 = sphi 0, %s224
      %s239 = sphi 0, %s225
      %s243 = sphi 0, %s243
      %s245 = sphi 0, %s243
      %s246 = sphi 0, %s245
      %s260 = sphi 0, %s246
      %s264 = sphi 0, %s264
      %s266 = sphi 0, %s264
      %s267 = sphi 0, %s266
      %s281 = sphi 0, %s267
      %s285 = sphi 0, %s285
      %s287 = sphi 0, %s285
      %s288 = sphi 0, %s287
      %s302 = sphi 0, %s288
      %s306 = sphi 0, %s306
      %s308 = sphi 0, %s306
      %s309 = sphi 0, %s308
      %s323 = sphi 0, %s309
      %s327 = sphi 0, %s327
      %s329 = sphi 0, %s327
      %s330 = sphi 0, %s329
      %s344 = sphi 0, %s330
      %s348 = sphi 0, %s348
      %s350 = sphi 0, %s348
      %s351 = sphi 0, %s350
      %s365 = sphi 0, %s351
      %s369 = sphi 0, %s369
      %s371 = sphi 0, %s369
      %s372 = sphi 0, %s371
      %s386 = sphi 0, %s372
      %s390 = sphi 0, %s390
      %s392 = sphi 0, %s390
      %s393 = sphi 0, %s392
      %s407 = sphi 0, %s393
      %s411 = sphi 0, %s411
      %s413 = sphi 0, %s411
      %s414 = sphi 0, %s413
      %s428 = sphi 0, %s414
      %s432 = sphi 0, %s432
      %s434 = sphi 0, %s432
      %s435 = sphi 0, %s434
      %s449 = sphi 0, %s435
      %s453 = sphi 0, %s453
      %s455 = sphi 0, %s453
      %s456 = sphi 0, %s455
      %s470 = sphi 0, %s456
      %s474 = sphi 0, %s474
      %s476 = sphi 0, %s474
      %s477 = sphi 0, %s476
      %s491 = sphi 0, %s477
      %s495 = sphi 0, %s495
      %s497 = sphi 0, %s495
      %s498 = sphi 0, %s497
      %s512 = sphi 0, %s498
      %s518 = sphi 0, %s520
      %s521 = sphi 0, %s518
      %s522 = sphi 0, %s521
      %s538 = sphi 0, %s522
    $region4: #{tpu_custom_call.1} parent=1 // loop_header_branch
      %39 = sbr.rel (%p37) target = $region8
    $region5: #{tpu_custom_call.1} parent=1 // loop_body
      %s41 = ssub.s32 %s36, 1
      %s42 = ssub.s32 %s36, 2
      %s43 = sadd.s32 %s36, 1
      %s44 = ssub.s32 %s36, %s43
      %p45 = scmp.eq.s32.totalorder %s44, 0
      %s47 = sadd.s32 %s46, 1
      %s48 = scalar_select %p45, %s46, %s47
      %p51 = pneg %p45
      %p52 = scmp.eq.s32.totalorder %s36, 1
      %p53 = por %p51, %p52
      %p54 = scmp.ne.s32.totalorder %s46, %s49
      %p55 = scmp.eq.s32.totalorder %s36, 0
      %p56 = por %p54, %p55
      %p57 = scmp.ne.s32.totalorder %s46, %s49
      %p58 = scmp.eq.s32.totalorder %s41, 1
      %p59 = por %p57, %p58
      %p60 = scmp.ne.s32.totalorder %s49, %s50
      %p61 = scmp.eq.s32.totalorder %s41, 0
      %p62 = por %p60, %p61
      %p63 = scmp.ne.s32.totalorder %s49, %s50
      %p64 = scmp.eq.s32.totalorder %s42, 1
      %p65 = por %p63, %p64
      %p67 = scmp.ne.s32.totalorder %s50, %s66
      %p68 = scmp.eq.s32.totalorder %s42, 0
      %p69 = por %p67, %p68
      %s70 = ssub.s32 %s36, %s43
      %p71 = scmp.eq.s32.totalorder %s70, 0
      %s73 = sadd.s32 %s72, 1
      %s74 = scalar_select %p71, %s72, %s73
      %p77 = pneg %p71
      %p78 = scmp.eq.s32.totalorder %s36, 1
      %p79 = por %p77, %p78
      %p80 = scmp.ne.s32.totalorder %s72, %s75
      %p81 = scmp.eq.s32.totalorder %s36, 0
      %p82 = por %p80, %p81
      %p83 = scmp.ne.s32.totalorder %s72, %s75
      %p84 = scmp.eq.s32.totalorder %s41, 1
      %p85 = por %p83, %p84
      %p86 = scmp.ne.s32.totalorder %s75, %s76
      %p87 = scmp.eq.s32.totalorder %s41, 0
      %p88 = por %p86, %p87
      %p89 = scmp.ne.s32.totalorder %s75, %s76
      %p90 = scmp.eq.s32.totalorder %s42, 1
      %p91 = por %p89, %p90
      %p93 = scmp.ne.s32.totalorder %s76, %s92
      %p94 = scmp.eq.s32.totalorder %s42, 0
      %p95 = por %p93, %p94
      %s97 = sadd.s32 %s96, 1
      %p100 = scmp.eq.s32.totalorder %s36, 1
      %p101 = scmp.ne.s32.totalorder %s96, %s98
      %p102 = scmp.eq.s32.totalorder %s36, 0
      %p103 = por %p101, %p102
      %p104 = scmp.ne.s32.totalorder %s96, %s98
      %p105 = scmp.eq.s32.totalorder %s41, 1
      %p106 = por %p104, %p105
      %p107 = scmp.ne.s32.totalorder %s98, %s99
      %p108 = scmp.eq.s32.totalorder %s41, 0
      %p109 = por %p107, %p108
      %p110 = scmp.ne.s32.totalorder %s98, %s99
      %p111 = scmp.eq.s32.totalorder %s42, 1
      %p112 = por %p110, %p111
      %p114 = scmp.ne.s32.totalorder %s99, %s113
      %p115 = scmp.eq.s32.totalorder %s42, 0
      %p116 = por %p114, %p115
      %s118 = sadd.s32 %s117, 1
      %p121 = scmp.eq.s32.totalorder %s36, 1
      %p122 = scmp.ne.s32.totalorder %s117, %s119
      %p123 = scmp.eq.s32.totalorder %s36, 0
      %p124 = por %p122, %p123
      %p125 = scmp.ne.s32.totalorder %s117, %s119
      %p126 = scmp.eq.s32.totalorder %s41, 1
      %p127 = por %p125, %p126
      %p128 = scmp.ne.s32.totalorder %s119, %s120
      %p129 = scmp.eq.s32.totalorder %s41, 0
      %p130 = por %p128, %p129
      %p131 = scmp.ne.s32.totalorder %s119, %s120
      %p132 = scmp.eq.s32.totalorder %s42, 1
      %p133 = por %p131, %p132
      %p135 = scmp.ne.s32.totalorder %s120, %s134
      %p136 = scmp.eq.s32.totalorder %s42, 0
      %p137 = por %p135, %p136
      %s139 = sadd.s32 %s138, 1
      %p142 = scmp.eq.s32.totalorder %s36, 1
      %p143 = scmp.ne.s32.totalorder %s138, %s140
      %p144 = scmp.eq.s32.totalorder %s36, 0
      %p145 = por %p143, %p144
      %p146 = scmp.ne.s32.totalorder %s138, %s140
      %p147 = scmp.eq.s32.totalorder %s41, 1
      %p148 = por %p146, %p147
      %p149 = scmp.ne.s32.totalorder %s140, %s141
      %p150 = scmp.eq.s32.totalorder %s41, 0
      %p151 = por %p149, %p150
      %p152 = scmp.ne.s32.totalorder %s140, %s141
      %p153 = scmp.eq.s32.totalorder %s42, 1
      %p154 = por %p152, %p153
      %p156 = scmp.ne.s32.totalorder %s141, %s155
      %p157 = scmp.eq.s32.totalorder %s42, 0
      %p158 = por %p156, %p157
      %s160 = sadd.s32 %s159, 1
      %p163 = scmp.eq.s32.totalorder %s36, 1
      %p164 = scmp.ne.s32.totalorder %s159, %s161
      %p165 = scmp.eq.s32.totalorder %s36, 0
      %p166 = por %p164, %p165
      %p167 = scmp.ne.s32.totalorder %s159, %s161
      %p168 = scmp.eq.s32.totalorder %s41, 1
      %p169 = por %p167, %p168
      %p170 = scmp.ne.s32.totalorder %s161, %s162
      %p171 = scmp.eq.s32.totalorder %s41, 0
      %p172 = por %p170, %p171
      %p173 = scmp.ne.s32.totalorder %s161, %s162
      %p174 = scmp.eq.s32.totalorder %s42, 1
      %p175 = por %p173, %p174
      %p177 = scmp.ne.s32.totalorder %s162, %s176
      %p178 = scmp.eq.s32.totalorder %s42, 0
      %p179 = por %p177, %p178
      %s181 = sadd.s32 %s180, 1
      %p184 = scmp.eq.s32.totalorder %s36, 1
      %p185 = scmp.ne.s32.totalorder %s180, %s182
      %p186 = scmp.eq.s32.totalorder %s36, 0
      %p187 = por %p185, %p186
      %p188 = scmp.ne.s32.totalorder %s180, %s182
      %p189 = scmp.eq.s32.totalorder %s41, 1
      %p190 = por %p188, %p189
      %p191 = scmp.ne.s32.totalorder %s182, %s183
      %p192 = scmp.eq.s32.totalorder %s41, 0
      %p193 = por %p191, %p192
      %p194 = scmp.ne.s32.totalorder %s182, %s183
      %p195 = scmp.eq.s32.totalorder %s42, 1
      %p196 = por %p194, %p195
      %p198 = scmp.ne.s32.totalorder %s183, %s197
      %p199 = scmp.eq.s32.totalorder %s42, 0
      %p200 = por %p198, %p199
      %s202 = sadd.s32 %s201, 1
      %p205 = scmp.eq.s32.totalorder %s36, 1
      %p206 = scmp.ne.s32.totalorder %s201, %s203
      %p207 = scmp.eq.s32.totalorder %s36, 0
      %p208 = por %p206, %p207
      %p209 = scmp.ne.s32.totalorder %s201, %s203
      %p210 = scmp.eq.s32.totalorder %s41, 1
      %p211 = por %p209, %p210
      %p212 = scmp.ne.s32.totalorder %s203, %s204
      %p213 = scmp.eq.s32.totalorder %s41, 0
      %p214 = por %p212, %p213
      %p215 = scmp.ne.s32.totalorder %s203, %s204
      %p216 = scmp.eq.s32.totalorder %s42, 1
      %p217 = por %p215, %p216
      %p219 = scmp.ne.s32.totalorder %s204, %s218
      %p220 = scmp.eq.s32.totalorder %s42, 0
      %p221 = por %p219, %p220
      %s223 = sadd.s32 %s222, 1
      %p226 = scmp.eq.s32.totalorder %s36, 1
      %p227 = scmp.ne.s32.totalorder %s222, %s224
      %p228 = scmp.eq.s32.totalorder %s36, 0
      %p229 = por %p227, %p228
      %p230 = scmp.ne.s32.totalorder %s222, %s224
      %p231 = scmp.eq.s32.totalorder %s41, 1
      %p232 = por %p230, %p231
      %p233 = scmp.ne.s32.totalorder %s224, %s225
      %p234 = scmp.eq.s32.totalorder %s41, 0
      %p235 = por %p233, %p234
      %p236 = scmp.ne.s32.totalorder %s224, %s225
      %p237 = scmp.eq.s32.totalorder %s42, 1
      %p238 = por %p236, %p237
      %p240 = scmp.ne.s32.totalorder %s225, %s239
      %p241 = scmp.eq.s32.totalorder %s42, 0
      %p242 = por %p240, %p241
      %s244 = sadd.s32 %s243, 1
      %p247 = scmp.eq.s32.totalorder %s36, 1
      %p248 = scmp.ne.s32.totalorder %s243, %s245
      %p249 = scmp.eq.s32.totalorder %s36, 0
      %p250 = por %p248, %p249
      %p251 = scmp.ne.s32.totalorder %s243, %s245
      %p252 = scmp.eq.s32.totalorder %s41, 1
      %p253 = por %p251, %p252
      %p254 = scmp.ne.s32.totalorder %s245, %s246
      %p255 = scmp.eq.s32.totalorder %s41, 0
      %p256 = por %p254, %p255
      %p257 = scmp.ne.s32.totalorder %s245, %s246
      %p258 = scmp.eq.s32.totalorder %s42, 1
      %p259 = por %p257, %p258
      %p261 = scmp.ne.s32.totalorder %s246, %s260
      %p262 = scmp.eq.s32.totalorder %s42, 0
      %p263 = por %p261, %p262
      %s265 = sadd.s32 %s264, 1
      %p268 = scmp.eq.s32.totalorder %s36, 1
      %p269 = scmp.ne.s32.totalorder %s264, %s266
      %p270 = scmp.eq.s32.totalorder %s36, 0
      %p271 = por %p269, %p270
      %p272 = scmp.ne.s32.totalorder %s264, %s266
      %p273 = scmp.eq.s32.totalorder %s41, 1
      %p274 = por %p272, %p273
      %p275 = scmp.ne.s32.totalorder %s266, %s267
      %p276 = scmp.eq.s32.totalorder %s41, 0
      %p277 = por %p275, %p276
      %p278 = scmp.ne.s32.totalorder %s266, %s267
      %p279 = scmp.eq.s32.totalorder %s42, 1
      %p280 = por %p278, %p279
      %p282 = scmp.ne.s32.totalorder %s267, %s281
      %p283 = scmp.eq.s32.totalorder %s42, 0
      %p284 = por %p282, %p283
      %s286 = sadd.s32 %s285, 1
      %p289 = scmp.eq.s32.totalorder %s36, 1
      %p290 = scmp.ne.s32.totalorder %s285, %s287
      %p291 = scmp.eq.s32.totalorder %s36, 0
      %p292 = por %p290, %p291
      %p293 = scmp.ne.s32.totalorder %s285, %s287
      %p294 = scmp.eq.s32.totalorder %s41, 1
      %p295 = por %p293, %p294
      %p296 = scmp.ne.s32.totalorder %s287, %s288
      %p297 = scmp.eq.s32.totalorder %s41, 0
      %p298 = por %p296, %p297
      %p299 = scmp.ne.s32.totalorder %s287, %s288
      %p300 = scmp.eq.s32.totalorder %s42, 1
      %p301 = por %p299, %p300
      %p303 = scmp.ne.s32.totalorder %s288, %s302
      %p304 = scmp.eq.s32.totalorder %s42, 0
      %p305 = por %p303, %p304
      %s307 = sadd.s32 %s306, 1
      %p310 = scmp.eq.s32.totalorder %s36, 1
      %p311 = scmp.ne.s32.totalorder %s306, %s308
      %p312 = scmp.eq.s32.totalorder %s36, 0
      %p313 = por %p311, %p312
      %p314 = scmp.ne.s32.totalorder %s306, %s308
      %p315 = scmp.eq.s32.totalorder %s41, 1
      %p316 = por %p314, %p315
      %p317 = scmp.ne.s32.totalorder %s308, %s309
      %p318 = scmp.eq.s32.totalorder %s41, 0
      %p319 = por %p317, %p318
      %p320 = scmp.ne.s32.totalorder %s308, %s309
      %p321 = scmp.eq.s32.totalorder %s42, 1
      %p322 = por %p320, %p321
      %p324 = scmp.ne.s32.totalorder %s309, %s323
      %p325 = scmp.eq.s32.totalorder %s42, 0
      %p326 = por %p324, %p325
      %s328 = sadd.s32 %s327, 1
      %p331 = scmp.eq.s32.totalorder %s36, 1
      %p332 = scmp.ne.s32.totalorder %s327, %s329
      %p333 = scmp.eq.s32.totalorder %s36, 0
      %p334 = por %p332, %p333
      %p335 = scmp.ne.s32.totalorder %s327, %s329
      %p336 = scmp.eq.s32.totalorder %s41, 1
      %p337 = por %p335, %p336
      %p338 = scmp.ne.s32.totalorder %s329, %s330
      %p339 = scmp.eq.s32.totalorder %s41, 0
      %p340 = por %p338, %p339
      %p341 = scmp.ne.s32.totalorder %s329, %s330
      %p342 = scmp.eq.s32.totalorder %s42, 1
      %p343 = por %p341, %p342
      %p345 = scmp.ne.s32.totalorder %s330, %s344
      %p346 = scmp.eq.s32.totalorder %s42, 0
      %p347 = por %p345, %p346
      %s349 = sadd.s32 %s348, 1
      %p352 = scmp.eq.s32.totalorder %s36, 1
      %p353 = scmp.ne.s32.totalorder %s348, %s350
      %p354 = scmp.eq.s32.totalorder %s36, 0
      %p355 = por %p353, %p354
      %p356 = scmp.ne.s32.totalorder %s348, %s350
      %p357 = scmp.eq.s32.totalorder %s41, 1
      %p358 = por %p356, %p357
      %p359 = scmp.ne.s32.totalorder %s350, %s351
      %p360 = scmp.eq.s32.totalorder %s41, 0
      %p361 = por %p359, %p360
      %p362 = scmp.ne.s32.totalorder %s350, %s351
      %p363 = scmp.eq.s32.totalorder %s42, 1
      %p364 = por %p362, %p363
      %p366 = scmp.ne.s32.totalorder %s351, %s365
      %p367 = scmp.eq.s32.totalorder %s42, 0
      %p368 = por %p366, %p367
      %s370 = sadd.s32 %s369, 1
      %p373 = scmp.eq.s32.totalorder %s36, 1
      %p374 = scmp.ne.s32.totalorder %s369, %s371
      %p375 = scmp.eq.s32.totalorder %s36, 0
      %p376 = por %p374, %p375
      %p377 = scmp.ne.s32.totalorder %s369, %s371
      %p378 = scmp.eq.s32.totalorder %s41, 1
      %p379 = por %p377, %p378
      %p380 = scmp.ne.s32.totalorder %s371, %s372
      %p381 = scmp.eq.s32.totalorder %s41, 0
      %p382 = por %p380, %p381
      %p383 = scmp.ne.s32.totalorder %s371, %s372
      %p384 = scmp.eq.s32.totalorder %s42, 1
      %p385 = por %p383, %p384
      %p387 = scmp.ne.s32.totalorder %s372, %s386
      %p388 = scmp.eq.s32.totalorder %s42, 0
      %p389 = por %p387, %p388
      %s391 = sadd.s32 %s390, 1
      %p394 = scmp.eq.s32.totalorder %s36, 1
      %p395 = scmp.ne.s32.totalorder %s390, %s392
      %p396 = scmp.eq.s32.totalorder %s36, 0
      %p397 = por %p395, %p396
      %p398 = scmp.ne.s32.totalorder %s390, %s392
      %p399 = scmp.eq.s32.totalorder %s41, 1
      %p400 = por %p398, %p399
      %p401 = scmp.ne.s32.totalorder %s392, %s393
      %p402 = scmp.eq.s32.totalorder %s41, 0
      %p403 = por %p401, %p402
      %p404 = scmp.ne.s32.totalorder %s392, %s393
      %p405 = scmp.eq.s32.totalorder %s42, 1
      %p406 = por %p404, %p405
      %p408 = scmp.ne.s32.totalorder %s393, %s407
      %p409 = scmp.eq.s32.totalorder %s42, 0
      %p410 = por %p408, %p409
      %s412 = sadd.s32 %s411, 1
      %p415 = scmp.eq.s32.totalorder %s36, 1
      %p416 = scmp.ne.s32.totalorder %s411, %s413
      %p417 = scmp.eq.s32.totalorder %s36, 0
      %p418 = por %p416, %p417
      %p419 = scmp.ne.s32.totalorder %s411, %s413
      %p420 = scmp.eq.s32.totalorder %s41, 1
      %p421 = por %p419, %p420
      %p422 = scmp.ne.s32.totalorder %s413, %s414
      %p423 = scmp.eq.s32.totalorder %s41, 0
      %p424 = por %p422, %p423
      %p425 = scmp.ne.s32.totalorder %s413, %s414
      %p426 = scmp.eq.s32.totalorder %s42, 1
      %p427 = por %p425, %p426
      %p429 = scmp.ne.s32.totalorder %s414, %s428
      %p430 = scmp.eq.s32.totalorder %s42, 0
      %p431 = por %p429, %p430
      %s433 = sadd.s32 %s432, 1
      %p436 = scmp.eq.s32.totalorder %s36, 1
      %p437 = scmp.ne.s32.totalorder %s432, %s434
      %p438 = scmp.eq.s32.totalorder %s36, 0
      %p439 = por %p437, %p438
      %p440 = scmp.ne.s32.totalorder %s432, %s434
      %p441 = scmp.eq.s32.totalorder %s41, 1
      %p442 = por %p440, %p441
      %p443 = scmp.ne.s32.totalorder %s434, %s435
      %p444 = scmp.eq.s32.totalorder %s41, 0
      %p445 = por %p443, %p444
      %p446 = scmp.ne.s32.totalorder %s434, %s435
      %p447 = scmp.eq.s32.totalorder %s42, 1
      %p448 = por %p446, %p447
      %p450 = scmp.ne.s32.totalorder %s435, %s449
      %p451 = scmp.eq.s32.totalorder %s42, 0
      %p452 = por %p450, %p451
      %s454 = sadd.s32 %s453, 1
      %p457 = scmp.eq.s32.totalorder %s36, 1
      %p458 = scmp.ne.s32.totalorder %s453, %s455
      %p459 = scmp.eq.s32.totalorder %s36, 0
      %p460 = por %p458, %p459
      %p461 = scmp.ne.s32.totalorder %s453, %s455
      %p462 = scmp.eq.s32.totalorder %s41, 1
      %p463 = por %p461, %p462
      %p464 = scmp.ne.s32.totalorder %s455, %s456
      %p465 = scmp.eq.s32.totalorder %s41, 0
      %p466 = por %p464, %p465
      %p467 = scmp.ne.s32.totalorder %s455, %s456
      %p468 = scmp.eq.s32.totalorder %s42, 1
      %p469 = por %p467, %p468
      %p471 = scmp.ne.s32.totalorder %s456, %s470
      %p472 = scmp.eq.s32.totalorder %s42, 0
      %p473 = por %p471, %p472
      %s475 = sadd.s32 %s474, 1
      %p478 = scmp.eq.s32.totalorder %s36, 1
      %p479 = scmp.ne.s32.totalorder %s474, %s476
      %p480 = scmp.eq.s32.totalorder %s36, 0
      %p481 = por %p479, %p480
      %p482 = scmp.ne.s32.totalorder %s474, %s476
      %p483 = scmp.eq.s32.totalorder %s41, 1
      %p484 = por %p482, %p483
      %p485 = scmp.ne.s32.totalorder %s476, %s477
      %p486 = scmp.eq.s32.totalorder %s41, 0
      %p487 = por %p485, %p486
      %p488 = scmp.ne.s32.totalorder %s476, %s477
      %p489 = scmp.eq.s32.totalorder %s42, 1
      %p490 = por %p488, %p489
      %p492 = scmp.ne.s32.totalorder %s477, %s491
      %p493 = scmp.eq.s32.totalorder %s42, 0
      %p494 = por %p492, %p493
      %s496 = sadd.s32 %s495, 1
      %p499 = scmp.eq.s32.totalorder %s36, 1
      %p500 = scmp.ne.s32.totalorder %s495, %s497
      %p501 = scmp.eq.s32.totalorder %s36, 0
      %p502 = por %p500, %p501
      %p503 = scmp.ne.s32.totalorder %s495, %s497
      %p504 = scmp.eq.s32.totalorder %s41, 1
      %p505 = por %p503, %p504
      %p506 = scmp.ne.s32.totalorder %s497, %s498
      %p507 = scmp.eq.s32.totalorder %s41, 0
      %p508 = por %p506, %p507
      %p509 = scmp.ne.s32.totalorder %s497, %s498
      %p510 = scmp.eq.s32.totalorder %s42, 1
      %p511 = por %p509, %p510
      %p513 = scmp.ne.s32.totalorder %s498, %s512
      %p514 = scmp.eq.s32.totalorder %s42, 0
      %p515 = por %p513, %p514
      %s516 = ssub.s32 %s36, %s43
      %p517 = scmp.eq.s32.totalorder %s516, 0
      %s519 = sadd.s32 %s518, 1
      %s520 = scalar_select %p517, %s518, %s519
      %p523 = pneg %p517
      %p524 = scmp.eq.s32.totalorder %s36, 1
      %p525 = por %p523, %p524
      %p526 = scmp.ne.s32.totalorder %s518, %s521
      %p527 = scmp.eq.s32.totalorder %s36, 0
      %p528 = por %p526, %p527
      %p529 = scmp.ne.s32.totalorder %s518, %s521
      %p530 = scmp.eq.s32.totalorder %s41, 1
      %p531 = por %p529, %p530
      %p532 = scmp.ne.s32.totalorder %s521, %s522
      %p533 = scmp.eq.s32.totalorder %s41, 0
      %p534 = por %p532, %p533
      %p535 = scmp.ne.s32.totalorder %s521, %s522
      %p536 = scmp.eq.s32.totalorder %s42, 1
      %p537 = por %p535, %p536
      %p539 = scmp.ne.s32.totalorder %s522, %s538
      %p540 = scmp.eq.s32.totalorder %s42, 0
      %p541 = por %p539, %p540
      %p542 = scmp.le.s32.totalorder 1, %s36
      %p543 = scmp.lt.s32.totalorder %s36, 3
      %p544 = pnand %p542, %p543
      %p545 = pneg %p544
      // Predicated region
      $region9: #{tpu_custom_call.1} parent=5 // pred_check
        _
      $region10: #{tpu_custom_call.1} parent=5 // pred_check_branch
        %547 = sbr.rel (%p544) target = $region12
      $region11: #{tpu_custom_call.1} parent=5 // pred_region
        %s548 = ssub.s32 %s36, 1
        // Predicated region
        $region13: #{tpu_custom_call.1} parent=11 // pred_check
          %p549 = pneg %p109
        $region14: #{tpu_custom_call.1} parent=11 // pred_check_branch
          %551 = sbr.rel (%p549) target = $region16
        $region15: #{tpu_custom_call.1} parent=11 // pred_region
          _
        $region16: #{tpu_custom_call.1} parent=11 // pred_fallthru
          _
        // Predicated region
        $region17: #{tpu_custom_call.1} parent=11 // pred_check
          %p552 = pneg %p130
        $region18: #{tpu_custom_call.1} parent=11 // pred_check_branch
          %554 = sbr.rel (%p552) target = $region20
        $region19: #{tpu_custom_call.1} parent=11 // pred_region
          _
        $region20: #{tpu_custom_call.1} parent=11 // pred_fallthru
          _
        // Predicated region
        $region21: #{tpu_custom_call.1} parent=11 // pred_check
          %p555 = pneg %p151
        $region22: #{tpu_custom_call.1} parent=11 // pred_check_branch
          %557 = sbr.rel (%p555) target = $region24
        $region23: #{tpu_custom_call.1} parent=11 // pred_region
          _
        $region24: #{tpu_custom_call.1} parent=11 // pred_fallthru
          _
        // Predicated region
        $region25: #{tpu_custom_call.1} parent=11 // pred_check
          %p558 = pneg %p172
        $region26: #{tpu_custom_call.1} parent=11 // pred_check_branch
          %560 = sbr.rel (%p558) target = $region28
        $region27: #{tpu_custom_call.1} parent=11 // pred_region
          %s562 = ssub.s32 16, 16
          %563 = vsyncadd [#allocation3], %s562
          %s565 = sshll.u32 [#allocation2], 4
          %s566 = int_to_ptr.vmem [resolvable:$true] %s565
          %568 = dma.hbm_to_vmem [thread:$0]  %s5, 16, %s566, [#allocation3]
        $region28: #{tpu_custom_call.1} parent=11 // pred_fallthru
          _
        // Predicated region
        $region29: #{tpu_custom_call.1} parent=11 // pred_check
          %p569 = pneg %p193
        $region30: #{tpu_custom_call.1} parent=11 // pred_check_branch
          %571 = sbr.rel (%p569) target = $region32
        $region31: #{tpu_custom_call.1} parent=11 // pred_region
          %s573 = ssub.s32 16, 16
          %574 = vsyncadd [#allocation6], %s573
          %s576 = sshll.u32 [#allocation5], 4
          %s577 = int_to_ptr.vmem [resolvable:$true] %s576
          %579 = dma.hbm_to_vmem [thread:$0]  %s6, 16, %s577, [#allocation6]
        $region32: #{tpu_custom_call.1} parent=11 // pred_fallthru
          _
        // Predicated region
        $region33: #{tpu_custom_call.1} parent=11 // pred_check
          %p580 = pneg %p214
        $region34: #{tpu_custom_call.1} parent=11 // pred_check_branch
          %582 = sbr.rel (%p580) target = $region36
        $region35: #{tpu_custom_call.1} parent=11 // pred_region
          %s584 = ssub.s32 16, 16
          %585 = vsyncadd [#allocation6], %s584
          %s587 = sshll.u32 [#allocation7], 4
          %s588 = int_to_ptr.vmem [resolvable:$true] %s587
          %590 = dma.hbm_to_vmem [thread:$0]  %s7, 16, %s588, [#allocation6]
        $region36: #{tpu_custom_call.1} parent=11 // pred_fallthru
          _
        // Predicated region
        $region37: #{tpu_custom_call.1} parent=11 // pred_check
          %p591 = pneg %p235
        $region38: #{tpu_custom_call.1} parent=11 // pred_check_branch
          %593 = sbr.rel (%p591) target = $region40
        $region39: #{tpu_custom_call.1} parent=11 // pred_region
          %s595 = ssub.s32 256, 256
          %596 = vsyncadd [#allocation9], %s595
          %s597 = sshll.u32 [#allocation8], 4
          %s598 = int_to_ptr.vmem [resolvable:$true] %s597
          %603 = dma.hbm_to_vmem [thread:$0]  %s8, 256, %s598, [#allocation9], 64, 64, 4
        $region40: #{tpu_custom_call.1} parent=11 // pred_fallthru
          _
        // Predicated region
        $region41: #{tpu_custom_call.1} parent=11 // pred_check
          %p604 = pneg %p256
        $region42: #{tpu_custom_call.1} parent=11 // pred_check_branch
          %606 = sbr.rel (%p604) target = $region44
        $region43: #{tpu_custom_call.1} parent=11 // pred_region
          %s608 = ssub.s32 16, 16
          %609 = vsyncadd [#allocation9], %s608
          %s611 = sshll.u32 [#allocation10], 4
          %s612 = int_to_ptr.vmem [resolvable:$true] %s611
          %614 = dma.hbm_to_vmem [thread:$0]  %s9, 16, %s612, [#allocation9]
        $region44: #{tpu_custom_call.1} parent=11 // pred_fallthru
          _
        // Predicated region
        $region45: #{tpu_custom_call.1} parent=11 // pred_check
          %p615 = pneg %p277
        $region46: #{tpu_custom_call.1} parent=11 // pred_check_branch
          %617 = sbr.rel (%p615) target = $region48
        $region47: #{tpu_custom_call.1} parent=11 // pred_region
          _
        $region48: #{tpu_custom_call.1} parent=11 // pred_fallthru
          _
        // Predicated region
        $region49: #{tpu_custom_call.1} parent=11 // pred_check
          %p618 = pneg %p298
        $region50: #{tpu_custom_call.1} parent=11 // pred_check_branch
          %620 = sbr.rel (%p618) target = $region52
        $region51: #{tpu_custom_call.1} parent=11 // pred_region
          %s622 = ssub.s32 16, 16
          %623 = vsyncadd [#allocation12], %s622
          %s625 = sshll.u32 [#allocation11], 4
          %s626 = int_to_ptr.vmem [resolvable:$true] %s625
          %628 = dma.hbm_to_vmem [thread:$0]  %s11, 16, %s626, [#allocation12]
        $region52: #{tpu_custom_call.1} parent=11 // pred_fallthru
          _
        // Predicated region
        $region53: #{tpu_custom_call.1} parent=11 // pred_check
          %p629 = pneg %p319
        $region54: #{tpu_custom_call.1} parent=11 // pred_check_branch
          %631 = sbr.rel (%p629) target = $region56
        $region55: #{tpu_custom_call.1} parent=11 // pred_region
          %s633 = ssub.s32 256, 256
          %634 = vsyncadd [#allocation12], %s633
          %s635 = sshll.u32 [#allocation13], 4
          %s636 = int_to_ptr.vmem [resolvable:$true] %s635
          %641 = dma.hbm_to_vmem [thread:$0]  %s12, 256, %s636, [#allocation12], 64, 64, 4
        $region56: #{tpu_custom_call.1} parent=11 // pred_fallthru
          _
        // Predicated region
        $region57: #{tpu_custom_call.1} parent=11 // pred_check
          %p642 = pneg %p340
        $region58: #{tpu_custom_call.1} parent=11 // pred_check_branch
          %644 = sbr.rel (%p642) target = $region60
        $region59: #{tpu_custom_call.1} parent=11 // pred_region
          %s646 = ssub.s32 16, 16
          %647 = vsyncadd [#allocation15], %s646
          %s649 = sshll.u32 [#allocation14], 4
          %s650 = int_to_ptr.vmem [resolvable:$true] %s649
          %652 = dma.hbm_to_vmem [thread:$0]  %s13, 16, %s650, [#allocation15]
        $region60: #{tpu_custom_call.1} parent=11 // pred_fallthru
          _
        // Predicated region
        $region61: #{tpu_custom_call.1} parent=11 // pred_check
          %p653 = pneg %p361
        $region62: #{tpu_custom_call.1} parent=11 // pred_check_branch
          %655 = sbr.rel (%p653) target = $region64
        $region63: #{tpu_custom_call.1} parent=11 // pred_region
          _
        $region64: #{tpu_custom_call.1} parent=11 // pred_fallthru
          _
        // Predicated region
        $region65: #{tpu_custom_call.1} parent=11 // pred_check
          %p656 = pneg %p382
        $region66: #{tpu_custom_call.1} parent=11 // pred_check_branch
          %658 = sbr.rel (%p656) target = $region68
        $region67: #{tpu_custom_call.1} parent=11 // pred_region
          _
        $region68: #{tpu_custom_call.1} parent=11 // pred_fallthru
          _
        // Predicated region
        $region69: #{tpu_custom_call.1} parent=11 // pred_check
          %p659 = pneg %p403
        $region70: #{tpu_custom_call.1} parent=11 // pred_check_branch
          %661 = sbr.rel (%p659) target = $region72
        $region71: #{tpu_custom_call.1} parent=11 // pred_region
          _
        $region72: #{tpu_custom_call.1} parent=11 // pred_fallthru
          _
        // Predicated region
        $region73: #{tpu_custom_call.1} parent=11 // pred_check
          %p662 = pneg %p424
        $region74: #{tpu_custom_call.1} parent=11 // pred_check_branch
          %664 = sbr.rel (%p662) target = $region76
        $region75: #{tpu_custom_call.1} parent=11 // pred_region
          _
        $region76: #{tpu_custom_call.1} parent=11 // pred_fallthru
          _
        // Predicated region
        $region77: #{tpu_custom_call.1} parent=11 // pred_check
          %p665 = pneg %p445
        $region78: #{tpu_custom_call.1} parent=11 // pred_check_branch
          %667 = sbr.rel (%p665) target = $region80
        $region79: #{tpu_custom_call.1} parent=11 // pred_region
          _
        $region80: #{tpu_custom_call.1} parent=11 // pred_fallthru
          _
        // Predicated region
        $region81: #{tpu_custom_call.1} parent=11 // pred_check
          %p668 = pneg %p466
        $region82: #{tpu_custom_call.1} parent=11 // pred_check_branch
          %670 = sbr.rel (%p668) target = $region84
        $region83: #{tpu_custom_call.1} parent=11 // pred_region
          _
        $region84: #{tpu_custom_call.1} parent=11 // pred_fallthru
          _
        // Predicated region
        $region85: #{tpu_custom_call.1} parent=11 // pred_check
          %p671 = pneg %p487
        $region86: #{tpu_custom_call.1} parent=11 // pred_check_branch
          %673 = sbr.rel (%p671) target = $region88
        $region87: #{tpu_custom_call.1} parent=11 // pred_region
          _
        $region88: #{tpu_custom_call.1} parent=11 // pred_fallthru
          _
        // Predicated region
        $region89: #{tpu_custom_call.1} parent=11 // pred_check
          %p674 = pneg %p508
        $region90: #{tpu_custom_call.1} parent=11 // pred_check_branch
          %676 = sbr.rel (%p674) target = $region92
        $region91: #{tpu_custom_call.1} parent=11 // pred_region
          _
        $region92: #{tpu_custom_call.1} parent=11 // pred_fallthru
          _
      $region12: #{tpu_custom_call.1} parent=5 // pred_fallthru
        _
      %p677 = scmp.lt.s32.totalorder %s36, 2
      // Predicated region
      $region93: #{tpu_custom_call.1} parent=5 // pred_check
        %p678 = pneg %p677
      $region94: #{tpu_custom_call.1} parent=5 // pred_check_branch
        %680 = sbr.rel (%p678) target = $region96
      $region95: #{tpu_custom_call.1} parent=5 // pred_region
        // Predicated region
        $region97: #{tpu_custom_call.1} parent=95 // pred_check
          %p681 = pneg %p56
        $region98: #{tpu_custom_call.1} parent=95 // pred_check_branch
          %683 = sbr.rel (%p681) target = $region100
        $region99: #{tpu_custom_call.1} parent=95 // pred_region
          %p684 = scmp.lt.s32.totalorder %s36, 1
          %s685 = scalar_select %p684, %s36, 1
          %s686 = smul.addr %s685, 8
          %s687 = scalar_lea.vmem %s0, %s686
        $region100: #{tpu_custom_call.1} parent=95 // pred_fallthru
          _
        // Predicated region
        $region101: #{tpu_custom_call.1} parent=95 // pred_check
          %p688 = pneg %p82
        $region102: #{tpu_custom_call.1} parent=95 // pred_check_branch
          %690 = sbr.rel (%p688) target = $region104
        $region103: #{tpu_custom_call.1} parent=95 // pred_region
          %p691 = scmp.lt.s32.totalorder %s36, 1
          %s692 = scalar_select %p691, %s36, 1
          %s693 = smul.addr %s692, 2
          %s694 = smul.addr %s693, 8
          %s695 = scalar_lea.vmem %s1, %s694
        $region104: #{tpu_custom_call.1} parent=95 // pred_fallthru
          _
      $region96: #{tpu_custom_call.1} parent=5 // pred_fallthru
        _
      %p696 = scmp.le.s32.totalorder 1, %s36
      %p697 = scmp.lt.s32.totalorder %s36, 3
      %p698 = pnand %p696, %p697
      %p699 = pneg %p698
      // Predicated region
      $region105: #{tpu_custom_call.1} parent=5 // pred_check
        _
      $region106: #{tpu_custom_call.1} parent=5 // pred_check_branch
        %701 = sbr.rel (%p698) target = $region108
      $region107: #{tpu_custom_call.1} parent=5 // pred_region
        %s702 = ssub.s32 %s36, 1
        // Predicated region
        $region109: #{tpu_custom_call.1} parent=107 // pred_check
          %p703 = pneg %p172
        $region110: #{tpu_custom_call.1} parent=107 // pred_check_branch
          %705 = sbr.rel (%p703) target = $region112
        $region111: #{tpu_custom_call.1} parent=107 // pred_region
          %706 = dma.done [#allocation3], 16
        $region112: #{tpu_custom_call.1} parent=107 // pred_fallthru
          _
        // Predicated region
        $region113: #{tpu_custom_call.1} parent=107 // pred_check
          %p707 = pneg %p193
        $region114: #{tpu_custom_call.1} parent=107 // pred_check_branch
          %709 = sbr.rel (%p707) target = $region116
        $region115: #{tpu_custom_call.1} parent=107 // pred_region
          %710 = dma.done [#allocation6], 16
        $region116: #{tpu_custom_call.1} parent=107 // pred_fallthru
          _
        // Predicated region
        $region117: #{tpu_custom_call.1} parent=107 // pred_check
          %p711 = pneg %p214
        $region118: #{tpu_custom_call.1} parent=107 // pred_check_branch
          %713 = sbr.rel (%p711) target = $region120
        $region119: #{tpu_custom_call.1} parent=107 // pred_region
          %714 = dma.done [#allocation6], 16
        $region120: #{tpu_custom_call.1} parent=107 // pred_fallthru
          _
        // Predicated region
        $region121: #{tpu_custom_call.1} parent=107 // pred_check
          %p715 = pneg %p235
        $region122: #{tpu_custom_call.1} parent=107 // pred_check_branch
          %717 = sbr.rel (%p715) target = $region124
        $region123: #{tpu_custom_call.1} parent=107 // pred_region
          %718 = dma.done [#allocation9], 256
        $region124: #{tpu_custom_call.1} parent=107 // pred_fallthru
          _
        // Predicated region
        $region125: #{tpu_custom_call.1} parent=107 // pred_check
          %p719 = pneg %p256
        $region126: #{tpu_custom_call.1} parent=107 // pred_check_branch
          %721 = sbr.rel (%p719) target = $region128
        $region127: #{tpu_custom_call.1} parent=107 // pred_region
          %722 = dma.done [#allocation9], 16
        $region128: #{tpu_custom_call.1} parent=107 // pred_fallthru
          _
        // Predicated region
        $region129: #{tpu_custom_call.1} parent=107 // pred_check
          %p723 = pneg %p298
        $region130: #{tpu_custom_call.1} parent=107 // pred_check_branch
          %725 = sbr.rel (%p723) target = $region132
        $region131: #{tpu_custom_call.1} parent=107 // pred_region
          %726 = dma.done [#allocation12], 16
        $region132: #{tpu_custom_call.1} parent=107 // pred_fallthru
          _
        // Predicated region
        $region133: #{tpu_custom_call.1} parent=107 // pred_check
          %p727 = pneg %p319
        $region134: #{tpu_custom_call.1} parent=107 // pred_check_branch
          %729 = sbr.rel (%p727) target = $region136
        $region135: #{tpu_custom_call.1} parent=107 // pred_region
          %730 = dma.done [#allocation12], 256
        $region136: #{tpu_custom_call.1} parent=107 // pred_fallthru
          _
        // Predicated region
        $region137: #{tpu_custom_call.1} parent=107 // pred_check
          %p731 = pneg %p340
        $region138: #{tpu_custom_call.1} parent=107 // pred_check_branch
          %733 = sbr.rel (%p731) target = $region140
        $region139: #{tpu_custom_call.1} parent=107 // pred_region
          %734 = dma.done [#allocation15], 16
        $region140: #{tpu_custom_call.1} parent=107 // pred_fallthru
          _
        %p735 = scmp.lt.s32.totalorder %s41, 1
        %s736 = scalar_select %p735, %s41, 1
        %s737 = smul.addr %s736, 8
        %s738 = scalar_lea.vmem %s0, %s737
        %p739 = pneg %p62
        %p740 = pneg %p59
        %p741 = scmp.lt.s32.totalorder %s41, 1
        %s742 = scalar_select %p741, %s41, 1
        %s743 = smul.addr %s742, 2
        %s744 = smul.addr %s743, 8
        %s745 = scalar_lea.vmem %s1, %s744
        %p746 = pneg %p88
        %p747 = pneg %p85
        %p748 = pneg %p109
        %p749 = pneg %p106
        %p750 = pneg %p130
        %p751 = pneg %p127
        %p752 = pneg %p151
        %p753 = pneg %p148
        %p754 = pneg %p172
        %p755 = pneg %p169
        %p756 = pneg %p193
        %p757 = pneg %p190
        %p758 = pneg %p214
        %p759 = pneg %p211
        %p760 = pneg %p235
        %p761 = pneg %p232
        %p762 = pneg %p256
        %p763 = pneg %p253
        %p764 = pneg %p277
        %p765 = pneg %p274
        %p766 = pneg %p298
        %p767 = pneg %p295
        %p768 = pneg %p319
        %p769 = pneg %p316
        %p770 = pneg %p340
        %p771 = pneg %p337
        %p772 = pneg %p361
        %p773 = pneg %p358
        %p774 = pneg %p382
        %p775 = pneg %p379
        %p776 = pneg %p403
        %p777 = pneg %p400
        %p778 = pneg %p424
        %p779 = pneg %p421
        %p780 = pneg %p445
        %p781 = pneg %p442
        %p782 = pneg %p466
        %p783 = pneg %p463
        %p784 = pneg %p487
        %p785 = pneg %p484
        %p786 = pneg %p508
        %p787 = pneg %p505
        %p788 = pneg %p534
        %p789 = pneg %p531
        %s790 = sand.u32 %s521, 1
        %s791 = scalar_lea.sflag [#allocation4], %s790
        %s792 = sand.u32 %s521, 1
        %s793 = smul.addr %s792, 8
        %s794 = scalar_lea.vmem [#allocation16], %s793
        %p795 = scmp.lt.s32.totalorder %s41, 1
        %s796 = scalar_select %p795, %s41, 1
        %s797 = smul.addr %s796, 8
        %s798 = scalar_lea.vmem %s0, %s797
        %p799 = scmp.lt.s32.totalorder %s41, 1
        %s800 = scalar_select %p799, %s41, 1
        %s801 = smul.addr %s800, 2
        %s802 = smul.addr %s801, 8
        %s803 = scalar_lea.vmem %s1, %s802
        %v805 = vld [vmem:[%s798] sm:$0xff]
        %v806 = vld [vmem:[%s803] sm:$0xff]
        %v807 = vld [vmem:[%s803 + $0x8] sm:$0xff]
        %v808 = vld [vmem:[%s2] sm:$0xf]
        %v809 = vld [vmem:[%s2 + $0x4] sm:$0xf]
        %v810 = vld [vmem:[%s2 + $0x8] sm:$0xf]
        %v811 = vld [vmem:[%s2 + $0xc] sm:$0xf]
        %v812 = vpack.c.bf16 %v805, %v805
        %v813 = vld [vmem:[%s3] sm:$0x1]
        %v815 = vlaneseq
        %v816 = vshrl.u32 %v815, 7
        %v817 = vsub.s32 0, %v816
        %v818 = vrot.slane %v813, %v817
        %v824 = vunpack.c.l.b16 %v808
        %v825 = vunpack.c.l.b16 %v809
        %v826 = vunpack.c.l.b16 %v810
        %v827 = vunpack.c.l.b16 %v811
        %v828 = vpack.c.b16 %v825, %v824
        %v829 = vpack.c.b16 %v827, %v826
        %vm832 = vcmask 261120
        %v834 = vsel %vm832, %v812, 0
        %836 = vmatprep.subr.bf16.mxu0 0
        %837 = vmatpush1.bf16.msra.mxu0 %v828
        %838 = vmatprep.subr.bf16.mxu0 0
        %839 = vmatpush1.bf16.msra.mxu0 %v829
        %840 = vmatprep.subr.bf16.mxu0 0
        %841 = vmatpush1.bf16.msra.mxu0 0
        %842 = vmatprep.subr.bf16.mxu0 0
        %843 = vmatpush1.bf16.msra.mxu0 0
        %844 = vmatprep.subr.bf16.mxu0 0
        %845 = vmatpush1.bf16.msra.mxu0 0
        %846 = vmatprep.subr.bf16.mxu0 0
        %847 = vmatpush1.bf16.msra.mxu0 0
        %848 = vmatprep.subr.bf16.mxu0 0
        %849 = vmatpush1.bf16.msra.mxu0 0
        %850 = vmatprep.subr.bf16.mxu0 0
        %851 = vmatpush1.bf16.msra.mxu0 0
        %852 = vmatprep.subr.bf16.mxu0 0
        %853 = vmatpush1.bf16.msra.mxu0 0
        %854 = vmatprep.subr.bf16.mxu0 0
        %855 = vmatpush1.bf16.msra.mxu0 0
        %856 = vmatprep.subr.bf16.mxu0 0
        %857 = vmatpush1.bf16.msra.mxu0 0
        %858 = vmatprep.subr.bf16.mxu0 0
        %859 = vmatpush1.bf16.msra.mxu0 0
        %860 = vmatprep.subr.bf16.mxu0 0
        %861 = vmatpush1.bf16.msra.mxu0 0
        %862 = vmatprep.subr.bf16.mxu0 0
        %863 = vmatpush1.bf16.msra.mxu0 0
        %864 = vmatprep.subr.bf16.mxu0 0
        %865 = vmatpush1.bf16.msra.mxu0 0
        %866 = vmatprep.subr.bf16.mxu0 0
        %867 = vmatpush1.bf16.msra.mxu0 0
        %868 = vmatprep.mubr.bf16.mxu0 0
        %869 = vmatmul.mubr.bf16.gmra.mrb[0].mxu0 %v834
        %v870 = vpop.f32.mrb[0].mxu0
        %v871 = vadd.f32 %v818, %v870
        %v872 = vpop.f32.mrb[0].mxu0
        %v873 = vpop.f32.mrb[0].mxu0
        %v874 = vpop.f32.mrb[0].mxu0
        %875 = vdwg.mxu0
        %v876 = vlaneseq
        %v877 = vshrl.u32 %v876, 7
        %v878 = vlaneseq
        %v879 = vand.u32 %v878, 127
        %vm880 = vcmp.ge.s32.totalorder %v877, %v879
        %v881 = vpack.c.bf16 %v871, %v871
        %883 = vrot.lane.b32.xlu0 %v881, 96
        %v884 = vpop.permute.xlu0 %883
        %vm885 = vcmask 64512
        %v887 = vsel %vm885, %v881, 0
        %v890 = vsel %vm885, %v884, 0
        %892 = vmatprep.subr.bf16.mxu0 0
        %893 = vmatpush1.bf16.xpose.msra.mxu0 %v890
        %894 = vmatprep.subr.bf16.mxu0 0
        %895 = vmatpush1.bf16.xpose.msra.mxu0 0
        %896 = vmatprep.subr.bf16.mxu0 0
        %897 = vmatpush1.bf16.xpose.msra.mxu0 0
        %898 = vmatprep.subr.bf16.mxu0 0
        %899 = vmatpush1.bf16.xpose.msra.mxu0 0
        %900 = vmatprep.subr.bf16.mxu0 0
        %901 = vmatpush1.bf16.xpose.msra.mxu0 0
        %902 = vmatprep.subr.bf16.mxu0 0
        %903 = vmatpush1.bf16.xpose.msra.mxu0 0
        %904 = vmatprep.subr.bf16.mxu0 0
        %905 = vmatpush1.bf16.xpose.msra.mxu0 0
        %906 = vmatprep.subr.bf16.mxu0 0
        %907 = vmatpush1.bf16.xpose.msra.mxu0 0
        %908 = vmatprep.subr.bf16.mxu0 0
        %909 = vmatpush1.bf16.xpose.msra.mxu0 0
        %910 = vmatprep.subr.bf16.mxu0 0
        %911 = vmatpush1.bf16.xpose.msra.mxu0 0
        %912 = vmatprep.subr.bf16.mxu0 0
        %913 = vmatpush1.bf16.xpose.msra.mxu0 0
        %914 = vmatprep.subr.bf16.mxu0 0
        %915 = vmatpush1.bf16.xpose.msra.mxu0 0
        %916 = vmatprep.subr.bf16.mxu0 0
        %917 = vmatpush1.bf16.xpose.msra.mxu0 0
        %918 = vmatprep.subr.bf16.mxu0 0
        %919 = vmatpush1.bf16.xpose.msra.mxu0 0
        %920 = vmatprep.subr.bf16.mxu0 0
        %921 = vmatpush1.bf16.xpose.msra.mxu0 0
        %922 = vmatprep.subr.bf16.mxu0 0
        %923 = vmatpush1.bf16.xpose.msra.mxu0 0
        %924 = vmatprep.mubr.bf16.mxu0 0
        %925 = vmatmul.mubr.bf16.gmra.mrb[0].mxu0 %v887
        %v926 = vpop.f32.mrb[0].mxu0
        %v927 = vadd.f32 0.0, %v926
        %v928 = vpop.f32.mrb[0].mxu0
        %v929 = vpop.f32.mrb[0].mxu0
        %v930 = vpop.f32.mrb[0].mxu0
        %931 = vdwg.mxu0
        %v932 = vmul.f32 %v927, 0.35355338
        %v933 = vsel %vm880, %v932, -1e+30
        %v934 = vsel %vm885, %v933, -inf
        %935 = vmax.xlane.f32.xlu0 %v934
        %v936 = vpop.xlane.xlu0 %935
        %v937 = vsub.f32 %v933, %v936
        %v938 = vmul.f32 %v937, 1.442695
        %v939 = vpow.pop %v938
        %v940 = vsel %vm885, %v939, 0.0
        %941 = vadd.xlane.f32.xlu0 %v940
        %v942 = vpop.xlane.xlu0 %941
        %v943 = vrcp.pop %v942
        %v944 = vmul.f32 %v939, %v943
        %v945 = vpack.c.bf16 %v944, %v944
        %946 = vrot.lane.b32.xlu0 %v881, 64
        %v947 = vpop.permute.xlu0 %946
        %v949 = vsel %vm885, %v945, 0
        %vm951 = vcmask 1043456
        %v953 = vsel %vm951, %v947, 0
        %955 = vmatprep.subr.bf16.mxu0 0
        %956 = vmatpush1.bf16.msra.mxu0 %v953
        %957 = vmatprep.subr.bf16.mxu0 0
        %958 = vmatpush1.bf16.msra.mxu0 0
        %959 = vmatprep.subr.bf16.mxu0 0
        %960 = vmatpush1.bf16.msra.mxu0 0
        %961 = vmatprep.subr.bf16.mxu0 0
        %962 = vmatpush1.bf16.msra.mxu0 0
        %963 = vmatprep.subr.bf16.mxu0 0
        %964 = vmatpush1.bf16.msra.mxu0 0
        %965 = vmatprep.subr.bf16.mxu0 0
        %966 = vmatpush1.bf16.msra.mxu0 0
        %967 = vmatprep.subr.bf16.mxu0 0
        %968 = vmatpush1.bf16.msra.mxu0 0
        %969 = vmatprep.subr.bf16.mxu0 0
        %970 = vmatpush1.bf16.msra.mxu0 0
        %971 = vmatprep.subr.bf16.mxu0 0
        %972 = vmatpush1.bf16.msra.mxu0 0
        %973 = vmatprep.subr.bf16.mxu0 0
        %974 = vmatpush1.bf16.msra.mxu0 0
        %975 = vmatprep.subr.bf16.mxu0 0
        %976 = vmatpush1.bf16.msra.mxu0 0
        %977 = vmatprep.subr.bf16.mxu0 0
        %978 = vmatpush1.bf16.msra.mxu0 0
        %979 = vmatprep.subr.bf16.mxu0 0
        %980 = vmatpush1.bf16.msra.mxu0 0
        %981 = vmatprep.subr.bf16.mxu0 0
        %982 = vmatpush1.bf16.msra.mxu0 0
        %983 = vmatprep.subr.bf16.mxu0 0
        %984 = vmatpush1.bf16.msra.mxu0 0
        %985 = vmatprep.subr.bf16.mxu0 0
        %986 = vmatpush1.bf16.msra.mxu0 0
        %987 = vmatprep.mubr.bf16.mxu0 0
        %988 = vmatmul.mubr.bf16.gmra.mrb[0].mxu0 %v949
        %v989 = vpop.f32.mrb[0].mxu0
        %v990 = vadd.f32 0.0, %v989
        %v991 = vpop.f32.mrb[0].mxu0
        %v992 = vpop.f32.mrb[0].mxu0
        %v993 = vpop.f32.mrb[0].mxu0
        %994 = vdwg.mxu0
        %995 = vrot.lane.b32.xlu0 %v881, 120
        %v996 = vpop.permute.xlu0 %995
        %997 = vrot.lane.b32.xlu0 %v881, 88
        %v998 = vpop.permute.xlu0 %997
        %v1000 = vsel %vm885, %v996, 0
        %v1003 = vsel %vm885, %v998, 0
        %1005 = vmatprep.subr.bf16.mxu0 0
        %1006 = vmatpush1.bf16.xpose.msra.mxu0 %v1003
        %1007 = vmatprep.subr.bf16.mxu0 0
        %1008 = vmatpush1.bf16.xpose.msra.mxu0 0
        %1009 = vmatprep.subr.bf16.mxu0 0
        %1010 = vmatpush1.bf16.xpose.msra.mxu0 0
        %1011 = vmatprep.subr.bf16.mxu0 0
        %1012 = vmatpush1.bf16.xpose.msra.mxu0 0
        %1013 = vmatprep.subr.bf16.mxu0 0
        %1014 = vmatpush1.bf16.xpose.msra.mxu0 0
        %1015 = vmatprep.subr.bf16.mxu0 0
        %1016 = vmatpush1.bf16.xpose.msra.mxu0 0
        %1017 = vmatprep.subr.bf16.mxu0 0
        %1018 = vmatpush1.bf16.xpose.msra.mxu0 0
        %1019 = vmatprep.subr.bf16.mxu0 0
        %1020 = vmatpush1.bf16.xpose.msra.mxu0 0
        %1021 = vmatprep.subr.bf16.mxu0 0
        %1022 = vmatpush1.bf16.xpose.msra.mxu0 0
        %1023 = vmatprep.subr.bf16.mxu0 0
        %1024 = vmatpush1.bf16.xpose.msra.mxu0 0
        %1025 = vmatprep.subr.bf16.mxu0 0
        %1026 = vmatpush1.bf16.xpose.msra.mxu0 0
        %1027 = vmatprep.subr.bf16.mxu0 0
        %1028 = vmatpush1.bf16.xpose.msra.mxu0 0
        %1029 = vmatprep.subr.bf16.mxu0 0
        %1030 = vmatpush1.bf16.xpose.msra.mxu0 0
        %1031 = vmatprep.subr.bf16.mxu0 0
        %1032 = vmatpush1.bf16.xpose.msra.mxu0 0
        %1033 = vmatprep.subr.bf16.mxu0 0
        %1034 = vmatpush1.bf16.xpose.msra.mxu0 0
        %1035 = vmatprep.subr.bf16.mxu0 0
        %1036 = vmatpush1.bf16.xpose.msra.mxu0 0
        %1037 = vmatprep.mubr.bf16.mxu0 0
        %1038 = vmatmul.mubr.bf16.gmra.mrb[0].mxu0 %v1000
        %v1039 = vpop.f32.mrb[0].mxu0
        %v1040 = vadd.f32 0.0, %v1039
        %v1041 = vpop.f32.mrb[0].mxu0
        %v1042 = vpop.f32.mrb[0].mxu0
        %v1043 = vpop.f32.mrb[0].mxu0
        %1044 = vdwg.mxu0
        %v1045 = vmul.f32 %v1040, 0.35355338
        %v1046 = vsel %vm880, %v1045, -1e+30
        %v1047 = vsel %vm885, %v1046, -inf
        %1048 = vmax.xlane.f32.xlu0 %v1047
        %v1049 = vpop.xlane.xlu0 %1048
        %v1050 = vsub.f32 %v1046, %v1049
        %v1051 = vmul.f32 %v1050, 1.442695
        %v1052 = vpow.pop %v1051
        %v1053 = vsel %vm885, %v1052, 0.0
        %1054 = vadd.xlane.f32.xlu0 %v1053
        %v1055 = vpop.xlane.xlu0 %1054
        %v1056 = vrcp.pop %v1055
        %v1057 = vmul.f32 %v1052, %v1056
        %v1058 = vpack.c.bf16 %v1057, %v1057
        %1059 = vrot.lane.b32.xlu0 %v881, 56
        %v1060 = vpop.permute.xlu0 %1059
        %v1062 = vsel %vm885, %v1058, 0
        %v1065 = vsel %vm951, %v1060, 0
        %1067 = vmatprep.subr.bf16.mxu0 0
        %1068 = vmatpush1.bf16.msra.mxu0 %v1065
        %1069 = vmatprep.subr.bf16.mxu0 0
        %1070 = vmatpush1.bf16.msra.mxu0 0
        %1071 = vmatprep.subr.bf16.mxu0 0
        %1072 = vmatpush1.bf16.msra.mxu0 0
        %1073 = vmatprep.subr.bf16.mxu0 0
        %1074 = vmatpush1.bf16.msra.mxu0 0
        %1075 = vmatprep.subr.bf16.mxu0 0
        %1076 = vmatpush1.bf16.msra.mxu0 0
        %1077 = vmatprep.subr.bf16.mxu0 0
        %1078 = vmatpush1.bf16.msra.mxu0 0
        %1079 = vmatprep.subr.bf16.mxu0 0
        %1080 = vmatpush1.bf16.msra.mxu0 0
        %1081 = vmatprep.subr.bf16.mxu0 0
        %1082 = vmatpush1.bf16.msra.mxu0 0
        %1083 = vmatprep.subr.bf16.mxu0 0
        %1084 = vmatpush1.bf16.msra.mxu0 0
        %1085 = vmatprep.subr.bf16.mxu0 0
        %1086 = vmatpush1.bf16.msra.mxu0 0
        %1087 = vmatprep.subr.bf16.mxu0 0
        %1088 = vmatpush1.bf16.msra.mxu0 0
        %1089 = vmatprep.subr.bf16.mxu0 0
        %1090 = vmatpush1.bf16.msra.mxu0 0
        %1091 = vmatprep.subr.bf16.mxu0 0
        %1092 = vmatpush1.bf16.msra.mxu0 0
        %1093 = vmatprep.subr.bf16.mxu0 0
        %1094 = vmatpush1.bf16.msra.mxu0 0
        %1095 = vmatprep.subr.bf16.mxu0 0
        %1096 = vmatpush1.bf16.msra.mxu0 0
        %1097 = vmatprep.subr.bf16.mxu0 0
        %1098 = vmatpush1.bf16.msra.mxu0 0
        %1099 = vmatprep.mubr.bf16.mxu0 0
        %1100 = vmatmul.mubr.bf16.gmra.mrb[0].mxu0 %v1062
        %v1101 = vpop.f32.mrb[0].mxu0
        %v1102 = vadd.f32 0.0, %v1101
        %v1103 = vpop.f32.mrb[0].mxu0
        %v1104 = vpop.f32.mrb[0].mxu0
        %v1105 = vpop.f32.mrb[0].mxu0
        %1106 = vdwg.mxu0
        %1107 = vrot.lane.b32.xlu0 %v881, 112
        %v1108 = vpop.permute.xlu0 %1107
        %1109 = vrot.lane.b32.xlu0 %v881, 80
        %v1110 = vpop.permute.xlu0 %1109
        %v1112 = vsel %vm885, %v1108, 0
        %v1115 = vsel %vm885, %v1110, 0
        %1117 = vmatprep.subr.bf16.mxu0 0
        %1118 = vmatpush1.bf16.xpose.msra.mxu0 %v1115
        %1119 = vmatprep.subr.bf16.mxu0 0
        %1120 = vmatpush1.bf16.xpose.msra.mxu0 0
        %1121 = vmatprep.subr.bf16.mxu0 0
        %1122 = vmatpush1.bf16.xpose.msra.mxu0 0
        %1123 = vmatprep.subr.bf16.mxu0 0
        %1124 = vmatpush1.bf16.xpose.msra.mxu0 0
        %1125 = vmatprep.subr.bf16.mxu0 0
        %1126 = vmatpush1.bf16.xpose.msra.mxu0 0
        %1127 = vmatprep.subr.bf16.mxu0 0
        %1128 = vmatpush1.bf16.xpose.msra.mxu0 0
        %1129 = vmatprep.subr.bf16.mxu0 0
        %1130 = vmatpush1.bf16.xpose.msra.mxu0 0
        %1131 = vmatprep.subr.bf16.mxu0 0
        %1132 = vmatpush1.bf16.xpose.msra.mxu0 0
        %1133 = vmatprep.subr.bf16.mxu0 0
        %1134 = vmatpush1.bf16.xpose.msra.mxu0 0
        %1135 = vmatprep.subr.bf16.mxu0 0
        %1136 = vmatpush1.bf16.xpose.msra.mxu0 0
        %1137 = vmatprep.subr.bf16.mxu0 0
        %1138 = vmatpush1.bf16.xpose.msra.mxu0 0
        %1139 = vmatprep.subr.bf16.mxu0 0
        %1140 = vmatpush1.bf16.xpose.msra.mxu0 0
        %1141 = vmatprep.subr.bf16.mxu0 0
        %1142 = vmatpush1.bf16.xpose.msra.mxu0 0
        %1143 = vmatprep.subr.bf16.mxu0 0
        %1144 = vmatpush1.bf16.xpose.msra.mxu0 0
        %1145 = vmatprep.subr.bf16.mxu0 0
        %1146 = vmatpush1.bf16.xpose.msra.mxu0 0
        %1147 = vmatprep.subr.bf16.mxu0 0
        %1148 = vmatpush1.bf16.xpose.msra.mxu0 0
        %1149 = vmatprep.mubr.bf16.mxu0 0
        %1150 = vmatmul.mubr.bf16.gmra.mrb[0].mxu0 %v1112
        %v1151 = vpop.f32.mrb[0].mxu0
        %v1152 = vadd.f32 0.0, %v1151
        %v1153 = vpop.f32.mrb[0].mxu0
        %v1154 = vpop.f32.mrb[0].mxu0
        %v1155 = vpop.f32.mrb[0].mxu0
        %1156 = vdwg.mxu0
        %v1157 = vmul.f32 %v1152, 0.35355338
        %v1158 = vsel %vm880, %v1157, -1e+30
        %v1159 = vsel %vm885, %v1158, -inf
        %1160 = vmax.xlane.f32.xlu0 %v1159
        %v1161 = vpop.xlane.xlu0 %1160
        %v1162 = vsub.f32 %v1158, %v1161
        %v1163 = vmul.f32 %v1162, 1.442695
        %v1164 = vpow.pop %v1163
        %v1165 = vsel %vm885, %v1164, 0.0
        %1166 = vadd.xlane.f32.xlu0 %v1165
        %v1167 = vpop.xlane.xlu0 %1166
        %v1168 = vrcp.pop %v1167
        %v1169 = vmul.f32 %v1164, %v1168
        %v1170 = vpack.c.bf16 %v1169, %v1169
        %1171 = vrot.lane.b32.xlu0 %v881, 48
        %v1172 = vpop.permute.xlu0 %1171
        %v1174 = vsel %vm885, %v1170, 0
        %v1177 = vsel %vm951, %v1172, 0
        %1179 = vmatprep.subr.bf16.mxu0 0
        %1180 = vmatpush1.bf16.msra.mxu0 %v1177
        %1181 = vmatprep.subr.bf16.mxu0 0
        %1182 = vmatpush1.bf16.msra.mxu0 0
        %1183 = vmatprep.subr.bf16.mxu0 0
        %1184 = vmatpush1.bf16.msra.mxu0 0
        %1185 = vmatprep.subr.bf16.mxu0 0
        %1186 = vmatpush1.bf16.msra.mxu0 0
        %1187 = vmatprep.subr.bf16.mxu0 0
        %1188 = vmatpush1.bf16.msra.mxu0 0
        %1189 = vmatprep.subr.bf16.mxu0 0
        %1190 = vmatpush1.bf16.msra.mxu0 0
        %1191 = vmatprep.subr.bf16.mxu0 0
        %1192 = vmatpush1.bf16.msra.mxu0 0
        %1193 = vmatprep.subr.bf16.mxu0 0
        %1194 = vmatpush1.bf16.msra.mxu0 0
        %1195 = vmatprep.subr.bf16.mxu0 0
        %1196 = vmatpush1.bf16.msra.mxu0 0
        %1197 = vmatprep.subr.bf16.mxu0 0
        %1198 = vmatpush1.bf16.msra.mxu0 0
        %1199 = vmatprep.subr.bf16.mxu0 0
        %1200 = vmatpush1.bf16.msra.mxu0 0
        %1201 = vmatprep.subr.bf16.mxu0 0
        %1202 = vmatpush1.bf16.msra.mxu0 0
        %1203 = vmatprep.subr.bf16.mxu0 0
        %1204 = vmatpush1.bf16.msra.mxu0 0
        %1205 = vmatprep.subr.bf16.mxu0 0
        %1206 = vmatpush1.bf16.msra.mxu0 0
        %1207 = vmatprep.subr.bf16.mxu0 0
        %1208 = vmatpush1.bf16.msra.mxu0 0
        %1209 = vmatprep.subr.bf16.mxu0 0
        %1210 = vmatpush1.bf16.msra.mxu0 0
        %1211 = vmatprep.mubr.bf16.mxu0 0
        %1212 = vmatmul.mubr.bf16.gmra.mrb[0].mxu0 %v1174
        %v1213 = vpop.f32.mrb[0].mxu0
        %v1214 = vadd.f32 0.0, %v1213
        %v1215 = vpop.f32.mrb[0].mxu0
        %v1216 = vpop.f32.mrb[0].mxu0
        %v1217 = vpop.f32.mrb[0].mxu0
        %1218 = vdwg.mxu0
        %1219 = vrot.lane.b32.xlu0 %v881, 104
        %v1220 = vpop.permute.xlu0 %1219
        %1221 = vrot.lane.b32.xlu0 %v881, 72
        %v1222 = vpop.permute.xlu0 %1221
        %v1224 = vsel %vm885, %v1220, 0
        %v1227 = vsel %vm885, %v1222, 0
        %1229 = vmatprep.subr.bf16.mxu0 0
        %1230 = vmatpush1.bf16.xpose.msra.mxu0 %v1227
        %1231 = vmatprep.subr.bf16.mxu0 0
        %1232 = vmatpush1.bf16.xpose.msra.mxu0 0
        %1233 = vmatprep.subr.bf16.mxu0 0
        %1234 = vmatpush1.bf16.xpose.msra.mxu0 0
        %1235 = vmatprep.subr.bf16.mxu0 0
        %1236 = vmatpush1.bf16.xpose.msra.mxu0 0
        %1237 = vmatprep.subr.bf16.mxu0 0
        %1238 = vmatpush1.bf16.xpose.msra.mxu0 0
        %1239 = vmatprep.subr.bf16.mxu0 0
        %1240 = vmatpush1.bf16.xpose.msra.mxu0 0
        %1241 = vmatprep.subr.bf16.mxu0 0
        %1242 = vmatpush1.bf16.xpose.msra.mxu0 0
        %1243 = vmatprep.subr.bf16.mxu0 0
        %1244 = vmatpush1.bf16.xpose.msra.mxu0 0
        %1245 = vmatprep.subr.bf16.mxu0 0
        %1246 = vmatpush1.bf16.xpose.msra.mxu0 0
        %1247 = vmatprep.subr.bf16.mxu0 0
        %1248 = vmatpush1.bf16.xpose.msra.mxu0 0
        %1249 = vmatprep.subr.bf16.mxu0 0
        %1250 = vmatpush1.bf16.xpose.msra.mxu0 0
        %1251 = vmatprep.subr.bf16.mxu0 0
        %1252 = vmatpush1.bf16.xpose.msra.mxu0 0
        %1253 = vmatprep.subr.bf16.mxu0 0
        %1254 = vmatpush1.bf16.xpose.msra.mxu0 0
        %1255 = vmatprep.subr.bf16.mxu0 0
        %1256 = vmatpush1.bf16.xpose.msra.mxu0 0
        %1257 = vmatprep.subr.bf16.mxu0 0
        %1258 = vmatpush1.bf16.xpose.msra.mxu0 0
        %1259 = vmatprep.subr.bf16.mxu0 0
        %1260 = vmatpush1.bf16.xpose.msra.mxu0 0
        %1261 = vmatprep.mubr.bf16.mxu0 0
        %1262 = vmatmul.mubr.bf16.gmra.mrb[0].mxu0 %v1224
        %v1263 = vpop.f32.mrb[0].mxu0
        %v1264 = vadd.f32 0.0, %v1263
        %v1265 = vpop.f32.mrb[0].mxu0
        %v1266 = vpop.f32.mrb[0].mxu0
        %v1267 = vpop.f32.mrb[0].mxu0
        %1268 = vdwg.mxu0
        %v1269 = vmul.f32 %v1264, 0.35355338
        %v1270 = vsel %vm880, %v1269, -1e+30
        %v1271 = vsel %vm885, %v1270, -inf
        %1272 = vmax.xlane.f32.xlu0 %v1271
        %v1273 = vpop.xlane.xlu0 %1272
        %v1274 = vsub.f32 %v1270, %v1273
        %v1275 = vmul.f32 %v1274, 1.442695
        %v1276 = vpow.pop %v1275
        %v1277 = vsel %vm885, %v1276, 0.0
        %1278 = vadd.xlane.f32.xlu0 %v1277
        %v1279 = vpop.xlane.xlu0 %1278
        %v1280 = vrcp.pop %v1279
        %v1281 = vmul.f32 %v1276, %v1280
        %v1282 = vpack.c.bf16 %v1281, %v1281
        %1283 = vrot.lane.b32.xlu0 %v881, 40
        %v1284 = vpop.permute.xlu0 %1283
        %v1286 = vsel %vm885, %v1282, 0
        %v1289 = vsel %vm951, %v1284, 0
        %1291 = vmatprep.subr.bf16.mxu0 0
        %1292 = vmatpush1.bf16.msra.mxu0 %v1289
        %1293 = vmatprep.subr.bf16.mxu0 0
        %1294 = vmatpush1.bf16.msra.mxu0 0
        %1295 = vmatprep.subr.bf16.mxu0 0
        %1296 = vmatpush1.bf16.msra.mxu0 0
        %1297 = vmatprep.subr.bf16.mxu0 0
        %1298 = vmatpush1.bf16.msra.mxu0 0
        %1299 = vmatprep.subr.bf16.mxu0 0
        %1300 = vmatpush1.bf16.msra.mxu0 0
        %1301 = vmatprep.subr.bf16.mxu0 0
        %1302 = vmatpush1.bf16.msra.mxu0 0
        %1303 = vmatprep.subr.bf16.mxu0 0
        %1304 = vmatpush1.bf16.msra.mxu0 0
        %1305 = vmatprep.subr.bf16.mxu0 0
        %1306 = vmatpush1.bf16.msra.mxu0 0
        %1307 = vmatprep.subr.bf16.mxu0 0
        %1308 = vmatpush1.bf16.msra.mxu0 0
        %1309 = vmatprep.subr.bf16.mxu0 0
        %1310 = vmatpush1.bf16.msra.mxu0 0
        %1311 = vmatprep.subr.bf16.mxu0 0
        %1312 = vmatpush1.bf16.msra.mxu0 0
        %1313 = vmatprep.subr.bf16.mxu0 0
        %1314 = vmatpush1.bf16.msra.mxu0 0
        %1315 = vmatprep.subr.bf16.mxu0 0
        %1316 = vmatpush1.bf16.msra.mxu0 0
        %1317 = vmatprep.subr.bf16.mxu0 0
        %1318 = vmatpush1.bf16.msra.mxu0 0
        %1319 = vmatprep.subr.bf16.mxu0 0
        %1320 = vmatpush1.bf16.msra.mxu0 0
        %1321 = vmatprep.subr.bf16.mxu0 0
        %1322 = vmatpush1.bf16.msra.mxu0 0
        %1323 = vmatprep.mubr.bf16.mxu0 0
        %1324 = vmatmul.mubr.bf16.gmra.mrb[0].mxu0 %v1286
        %v1325 = vpop.f32.mrb[0].mxu0
        %v1326 = vadd.f32 0.0, %v1325
        %v1327 = vpop.f32.mrb[0].mxu0
        %v1328 = vpop.f32.mrb[0].mxu0
        %v1329 = vpop.f32.mrb[0].mxu0
        %1330 = vdwg.mxu0
        %1332 = vrot.lane.b32.xlu0 %v1102, 8
        %v1333 = vpop.permute.xlu0 %1332
        %1336 = vrot.lane.b32.xlu0 %v1214, 16
        %v1337 = vpop.permute.xlu0 %1336
        %1340 = vrot.lane.b32.xlu0 %v1326, 24
        %v1341 = vpop.permute.xlu0 %1340
        %v1343 = vsel %vm885, %v990, %v1333
        %vm1344 = vcmask 130048
        %v1345 = vsel %vm1344, %v1343, %v1337
        %vm1346 = vcmask 195584
        %v1347 = vsel %vm1346, %v1345, %v1341
        %v1348 = vld [vmem:[%s4] sm:$0xf]
        %v1349 = vld [vmem:[%s4 + $0x4] sm:$0xf]
        %v1350 = vld [vmem:[%s4 + $0x8] sm:$0xf]
        %v1351 = vld [vmem:[%s4 + $0xc] sm:$0xf]
        %v1352 = vpack.c.bf16 %v1347, %v1347
        %v1353 = vld [vmem:[#allocation2] sm:$0x1]
        %v1355 = vlaneseq
        %v1356 = vshrl.u32 %v1355, 7
        %v1357 = vsub.s32 0, %v1356
        %v1358 = vrot.slane %v1353, %v1357
        %v1364 = vunpack.c.l.b16 %v1348
        %v1365 = vunpack.c.l.b16 %v1349
        %v1366 = vunpack.c.l.b16 %v1350
        %v1367 = vunpack.c.l.b16 %v1351
        %v1368 = vpack.c.b16 %v1365, %v1364
        %v1369 = vpack.c.b16 %v1367, %v1366
        %v1373 = vsel %vm832, %v1352, 0
        %1375 = vmatprep.subr.bf16.mxu0 0
        %1376 = vmatpush1.bf16.msra.mxu0 %v1368
        %1377 = vmatprep.subr.bf16.mxu0 0
        %1378 = vmatpush1.bf16.msra.mxu0 %v1369
        %1379 = vmatprep.subr.bf16.mxu0 0
        %1380 = vmatpush1.bf16.msra.mxu0 0
        %1381 = vmatprep.subr.bf16.mxu0 0
        %1382 = vmatpush1.bf16.msra.mxu0 0
        %1383 = vmatprep.subr.bf16.mxu0 0
        %1384 = vmatpush1.bf16.msra.mxu0 0
        %1385 = vmatprep.subr.bf16.mxu0 0
        %1386 = vmatpush1.bf16.msra.mxu0 0
        %1387 = vmatprep.subr.bf16.mxu0 0
        %1388 = vmatpush1.bf16.msra.mxu0 0
        %1389 = vmatprep.subr.bf16.mxu0 0
        %1390 = vmatpush1.bf16.msra.mxu0 0
        %1391 = vmatprep.subr.bf16.mxu0 0
        %1392 = vmatpush1.bf16.msra.mxu0 0
        %1393 = vmatprep.subr.bf16.mxu0 0
        %1394 = vmatpush1.bf16.msra.mxu0 0
        %1395 = vmatprep.subr.bf16.mxu0 0
        %1396 = vmatpush1.bf16.msra.mxu0 0
        %1397 = vmatprep.subr.bf16.mxu0 0
        %1398 = vmatpush1.bf16.msra.mxu0 0
        %1399 = vmatprep.subr.bf16.mxu0 0
        %1400 = vmatpush1.bf16.msra.mxu0 0
        %1401 = vmatprep.subr.bf16.mxu0 0
        %1402 = vmatpush1.bf16.msra.mxu0 0
        %1403 = vmatprep.subr.bf16.mxu0 0
        %1404 = vmatpush1.bf16.msra.mxu0 0
        %1405 = vmatprep.subr.bf16.mxu0 0
        %1406 = vmatpush1.bf16.msra.mxu0 0
        %1407 = vmatprep.mubr.bf16.mxu0 0
        %1408 = vmatmul.mubr.bf16.gmra.mrb[0].mxu0 %v1373
        %v1409 = vpop.f32.mrb[0].mxu0
        %v1410 = vadd.f32 %v1358, %v1409
        %v1411 = vpop.f32.mrb[0].mxu0
        %v1412 = vpop.f32.mrb[0].mxu0
        %v1413 = vpop.f32.mrb[0].mxu0
        %1414 = vdwg.mxu0
        %v1415 = vld [vmem:[#allocation5] sm:$0x1]
        %v1416 = vld [vmem:[#allocation7] sm:$0x1]
        %v1417 = vsel %vm832, %v1410, 0.0
        %1418 = vadd.xlane.f32.xlu0 %v1417
        %v1419 = vpop.xlane.xlu0 %1418
        %v1420 = vrcp.pop 32.0
        %v1421 = vmul.f32 %v1419, %v1420
        %v1422 = vsub.f32 %v1410, %v1421
        %v1423 = vmul.f32 %v1422, %v1422
        %v1424 = vsel %vm832, %v1423, 0.0
        %1425 = vadd.xlane.f32.xlu0 %v1424
        %v1426 = vpop.xlane.xlu0 %1425
        %v1427 = vmul.f32 %v1426, %v1420
        %v1428 = vadd.f32 %v1427, 1e-05
        %v1429 = vrsqrt.pop %v1428
        %v1430 = vmul.f32 %v1422, %v1429
        %v1432 = vlaneseq
        %v1433 = vshrl.u32 %v1432, 7
        %v1434 = vsub.s32 0, %v1433
        %v1435 = vrot.slane %v1415, %v1434
        %v1437 = vmul.f32 %v1430, %v1435
        %v1439 = vlaneseq
        %v1440 = vshrl.u32 %v1439, 7
        %v1441 = vsub.s32 0, %v1440
        %v1442 = vrot.slane %v1416, %v1441
        %v1444 = vadd.f32 %v1437, %v1442
        %v1445 = vld [vmem:[%s10] sm:$0xf]
        %v1446 = vld [vmem:[%s10 + $0x4] sm:$0xf]
        %v1447 = vld [vmem:[%s10 + $0x8] sm:$0xf]
        %v1448 = vld [vmem:[%s10 + $0xc] sm:$0xf]
        %v1449 = vpack.c.bf16 %v807, %v806
        %v1450 = vld [vmem:[#allocation11] sm:$0x1]
        %v1452 = vlaneseq
        %v1453 = vshrl.u32 %v1452, 7
        %v1454 = vsub.s32 0, %v1453
        %v1455 = vrot.slane %v1450, %v1454
        %v1461 = vunpack.c.l.b16 %v1445
        %v1462 = vunpack.c.l.b16 %v1446
        %v1463 = vunpack.c.l.b16 %v1447
        %v1464 = vunpack.c.l.b16 %v1448
        %v1465 = vpack.c.b16 %v1462, %v1461
        %v1466 = vpack.c.b16 %v1464, %v1463
        %v1470 = vsel %vm832, %v1449, 0
        %1472 = vmatprep.subr.bf16.mxu0 0
        %1473 = vmatpush1.bf16.msra.mxu0 %v1465
        %1474 = vmatprep.subr.bf16.mxu0 0
        %1475 = vmatpush1.bf16.msra.mxu0 %v1466
        %1476 = vmatprep.subr.bf16.mxu0 0
        %1477 = vmatpush1.bf16.msra.mxu0 0
        %1478 = vmatprep.subr.bf16.mxu0 0
        %1479 = vmatpush1.bf16.msra.mxu0 0
        %1480 = vmatprep.subr.bf16.mxu0 0
        %1481 = vmatpush1.bf16.msra.mxu0 0
        %1482 = vmatprep.subr.bf16.mxu0 0
        %1483 = vmatpush1.bf16.msra.mxu0 0
        %1484 = vmatprep.subr.bf16.mxu0 0
        %1485 = vmatpush1.bf16.msra.mxu0 0
        %1486 = vmatprep.subr.bf16.mxu0 0
        %1487 = vmatpush1.bf16.msra.mxu0 0
        %1488 = vmatprep.subr.bf16.mxu0 0
        %1489 = vmatpush1.bf16.msra.mxu0 0
        %1490 = vmatprep.subr.bf16.mxu0 0
        %1491 = vmatpush1.bf16.msra.mxu0 0
        %1492 = vmatprep.subr.bf16.mxu0 0
        %1493 = vmatpush1.bf16.msra.mxu0 0
        %1494 = vmatprep.subr.bf16.mxu0 0
        %1495 = vmatpush1.bf16.msra.mxu0 0
        %1496 = vmatprep.subr.bf16.mxu0 0
        %1497 = vmatpush1.bf16.msra.mxu0 0
        %1498 = vmatprep.subr.bf16.mxu0 0
        %1499 = vmatpush1.bf16.msra.mxu0 0
        %1500 = vmatprep.subr.bf16.mxu0 0
        %1501 = vmatpush1.bf16.msra.mxu0 0
        %1502 = vmatprep.subr.bf16.mxu0 0
        %1503 = vmatpush1.bf16.msra.mxu0 0
        %1504 = vmatprep.mubr.bf16.mxu0 0
        %1505 = vmatmul.mubr.bf16.gmra.mrb[0].mxu0 %v1470
        %v1506 = vpop.f32.mrb[0].mxu0
        %v1507 = vadd.f32 %v1455, %v1506
        %v1508 = vpop.f32.mrb[0].mxu0
        %v1509 = vpop.f32.mrb[0].mxu0
        %v1510 = vadd.f32 %v1455, %v1509
        %v1511 = vpop.f32.mrb[0].mxu0
        %1512 = vdwg.mxu0
        %v1513 = vld [vmem:[#allocation8] sm:$0xf]
        %v1514 = vld [vmem:[#allocation8 + $0x4] sm:$0xf]
        %v1515 = vld [vmem:[#allocation8 + $0x8] sm:$0xf]
        %v1516 = vld [vmem:[#allocation8 + $0xc] sm:$0xf]
        %v1517 = vpack.c.bf16 %v1444, %v1444
        %v1518 = vld [vmem:[#allocation10] sm:$0x1]
        %v1520 = vlaneseq
        %v1521 = vshrl.u32 %v1520, 7
        %v1522 = vsub.s32 0, %v1521
        %v1523 = vrot.slane %v1518, %v1522
        %v1529 = vunpack.c.l.b16 %v1513
        %v1530 = vunpack.c.l.b16 %v1514
        %v1531 = vunpack.c.l.b16 %v1515
        %v1532 = vunpack.c.l.b16 %v1516
        %v1533 = vpack.c.b16 %v1530, %v1529
        %v1534 = vpack.c.b16 %v1532, %v1531
        %v1538 = vsel %vm832, %v1517, 0
        %1540 = vmatprep.subr.bf16.mxu0 0
        %1541 = vmatpush1.bf16.msra.mxu0 %v1533
        %1542 = vmatprep.subr.bf16.mxu0 0
        %1543 = vmatpush1.bf16.msra.mxu0 %v1534
        %1544 = vmatprep.subr.bf16.mxu0 0
        %1545 = vmatpush1.bf16.msra.mxu0 0
        %1546 = vmatprep.subr.bf16.mxu0 0
        %1547 = vmatpush1.bf16.msra.mxu0 0
        %1548 = vmatprep.subr.bf16.mxu0 0
        %1549 = vmatpush1.bf16.msra.mxu0 0
        %1550 = vmatprep.subr.bf16.mxu0 0
        %1551 = vmatpush1.bf16.msra.mxu0 0
        %1552 = vmatprep.subr.bf16.mxu0 0
        %1553 = vmatpush1.bf16.msra.mxu0 0
        %1554 = vmatprep.subr.bf16.mxu0 0
        %1555 = vmatpush1.bf16.msra.mxu0 0
        %1556 = vmatprep.subr.bf16.mxu0 0
        %1557 = vmatpush1.bf16.msra.mxu0 0
        %1558 = vmatprep.subr.bf16.mxu0 0
        %1559 = vmatpush1.bf16.msra.mxu0 0
        %1560 = vmatprep.subr.bf16.mxu0 0
        %1561 = vmatpush1.bf16.msra.mxu0 0
        %1562 = vmatprep.subr.bf16.mxu0 0
        %1563 = vmatpush1.bf16.msra.mxu0 0
        %1564 = vmatprep.subr.bf16.mxu0 0
        %1565 = vmatpush1.bf16.msra.mxu0 0
        %1566 = vmatprep.subr.bf16.mxu0 0
        %1567 = vmatpush1.bf16.msra.mxu0 0
        %1568 = vmatprep.subr.bf16.mxu0 0
        %1569 = vmatpush1.bf16.msra.mxu0 0
        %1570 = vmatprep.subr.bf16.mxu0 0
        %1571 = vmatpush1.bf16.msra.mxu0 0
        %1572 = vmatprep.mubr.bf16.mxu0 0
        %1573 = vmatmul.mubr.bf16.gmra.mrb[0].mxu0 %v1538
        %v1574 = vpop.f32.mrb[0].mxu0
        %v1575 = vadd.f32 %v1523, %v1574
        %v1576 = vpop.f32.mrb[0].mxu0
        %v1577 = vpop.f32.mrb[0].mxu0
        %v1578 = vpop.f32.mrb[0].mxu0
        %1579 = vdwg.mxu0
        %v1580 = vpack.c.bf16 %v1575, %v1575
        %v1581 = vpack.c.bf16 %v1510, %v1507
        %v1583 = vsel %vm885, %v1580, 0
        %v1586 = vsel %vm885, %v1581, 0
        %1588 = vmatprep.subr.bf16.mxu0 0
        %1589 = vmatpush1.bf16.xpose.msra.mxu0 %v1586
        %1590 = vmatprep.subr.bf16.mxu0 0
        %1591 = vmatpush1.bf16.xpose.msra.mxu0 0
        %1592 = vmatprep.subr.bf16.mxu0 0
        %1593 = vmatpush1.bf16.xpose.msra.mxu0 0
        %1594 = vmatprep.subr.bf16.mxu0 0
        %1595 = vmatpush1.bf16.xpose.msra.mxu0 0
        %1596 = vmatprep.subr.bf16.mxu0 0
        %1597 = vmatpush1.bf16.xpose.msra.mxu0 0
        %1598 = vmatprep.subr.bf16.mxu0 0
        %1599 = vmatpush1.bf16.xpose.msra.mxu0 0
        %1600 = vmatprep.subr.bf16.mxu0 0
        %1601 = vmatpush1.bf16.xpose.msra.mxu0 0
        %1602 = vmatprep.subr.bf16.mxu0 0
        %1603 = vmatpush1.bf16.xpose.msra.mxu0 0
        %1604 = vmatprep.subr.bf16.mxu0 0
        %1605 = vmatpush1.bf16.xpose.msra.mxu0 0
        %1606 = vmatprep.subr.bf16.mxu0 0
        %1607 = vmatpush1.bf16.xpose.msra.mxu0 0
        %1608 = vmatprep.subr.bf16.mxu0 0
        %1609 = vmatpush1.bf16.xpose.msra.mxu0 0
        %1610 = vmatprep.subr.bf16.mxu0 0
        %1611 = vmatpush1.bf16.xpose.msra.mxu0 0
        %1612 = vmatprep.subr.bf16.mxu0 0
        %1613 = vmatpush1.bf16.xpose.msra.mxu0 0
        %1614 = vmatprep.subr.bf16.mxu0 0
        %1615 = vmatpush1.bf16.xpose.msra.mxu0 0
        %1616 = vmatprep.subr.bf16.mxu0 0
        %1617 = vmatpush1.bf16.xpose.msra.mxu0 0
        %1618 = vmatprep.subr.bf16.mxu0 0
        %1619 = vmatpush1.bf16.xpose.msra.mxu0 0
        %1620 = vmatprep.mubr.bf16.mxu0 0
        %1621 = vmatmul.mubr.bf16.gmra.mrb[0].mxu0 %v1583
        %v1622 = vpop.f32.mrb[0].mxu0
        %v1623 = vadd.f32 0.0, %v1622
        %v1624 = vpop.f32.mrb[0].mxu0
        %v1625 = vpop.f32.mrb[0].mxu0
        %v1626 = vpop.f32.mrb[0].mxu0
        %1627 = vdwg.mxu0
        %v1628 = vmul.f32 %v1623, 0.35355338
        %v1629 = vsel %vm1344, %v1628, -inf
        %1630 = vmax.xlane.f32.xlu0 %v1629
        %v1631 = vpop.xlane.xlu0 %1630
        %v1632 = vsub.f32 %v1628, %v1631
        %v1633 = vmul.f32 %v1632, 1.442695
        %v1634 = vpow.pop %v1633
        %v1635 = vsel %vm1344, %v1634, 0.0
        %1636 = vadd.xlane.f32.xlu0 %v1635
        %v1637 = vpop.xlane.xlu0 %1636
        %v1638 = vrcp.pop %v1637
        %v1639 = vmul.f32 %v1634, %v1638
        %v1640 = vpack.c.bf16 %v1639, %v1639
        %1642 = vrot.lane.b32.xlu0 %v1581, 96
        %v1643 = vpop.permute.xlu0 %1642
        %v1646 = vsel %vm1344, %v1640, 0
        %1648 = vmatprep.subr.bf16.mxu0 0
        %1649 = vmatpush1.bf16.msra.mxu0 %v1643
        %1650 = vmatprep.subr.bf16.mxu0 0
        %1651 = vmatpush1.bf16.msra.mxu0 0
        %1652 = vmatprep.subr.bf16.mxu0 0
        %1653 = vmatpush1.bf16.msra.mxu0 0
        %1654 = vmatprep.subr.bf16.mxu0 0
        %1655 = vmatpush1.bf16.msra.mxu0 0
        %1656 = vmatprep.subr.bf16.mxu0 0
        %1657 = vmatpush1.bf16.msra.mxu0 0
        %1658 = vmatprep.subr.bf16.mxu0 0
        %1659 = vmatpush1.bf16.msra.mxu0 0
        %1660 = vmatprep.subr.bf16.mxu0 0
        %1661 = vmatpush1.bf16.msra.mxu0 0
        %1662 = vmatprep.subr.bf16.mxu0 0
        %1663 = vmatpush1.bf16.msra.mxu0 0
        %1664 = vmatprep.subr.bf16.mxu0 0
        %1665 = vmatpush1.bf16.msra.mxu0 0
        %1666 = vmatprep.subr.bf16.mxu0 0
        %1667 = vmatpush1.bf16.msra.mxu0 0
        %1668 = vmatprep.subr.bf16.mxu0 0
        %1669 = vmatpush1.bf16.msra.mxu0 0
        %1670 = vmatprep.subr.bf16.mxu0 0
        %1671 = vmatpush1.bf16.msra.mxu0 0
        %1672 = vmatprep.subr.bf16.mxu0 0
        %1673 = vmatpush1.bf16.msra.mxu0 0
        %1674 = vmatprep.subr.bf16.mxu0 0
        %1675 = vmatpush1.bf16.msra.mxu0 0
        %1676 = vmatprep.subr.bf16.mxu0 0
        %1677 = vmatpush1.bf16.msra.mxu0 0
        %1678 = vmatprep.subr.bf16.mxu0 0
        %1679 = vmatpush1.bf16.msra.mxu0 0
        %1680 = vmatprep.mubr.bf16.mxu0 0
        %1681 = vmatmul.mubr.bf16.gmra.mrb[0].mxu0 %v1646
        %v1682 = vpop.f32.mrb[0].mxu0
        %v1683 = vadd.f32 0.0, %v1682
        %v1684 = vpop.f32.mrb[0].mxu0
        %v1685 = vpop.f32.mrb[0].mxu0
        %v1686 = vpop.f32.mrb[0].mxu0
        %1687 = vdwg.mxu0
        %1689 = vrot.lane.b32.xlu0 %v1580, 120
        %v1690 = vpop.permute.xlu0 %1689
        %1691 = vrot.lane.b32.xlu0 %v1581, 120
        %v1692 = vpop.permute.xlu0 %1691
        %v1694 = vsel %vm885, %v1690, 0
        %v1697 = vsel %vm885, %v1692, 0
        %1699 = vmatprep.subr.bf16.mxu0 0
        %1700 = vmatpush1.bf16.xpose.msra.mxu0 %v1697
        %1701 = vmatprep.subr.bf16.mxu0 0
        %1702 = vmatpush1.bf16.xpose.msra.mxu0 0
        %1703 = vmatprep.subr.bf16.mxu0 0
        %1704 = vmatpush1.bf16.xpose.msra.mxu0 0
        %1705 = vmatprep.subr.bf16.mxu0 0
        %1706 = vmatpush1.bf16.xpose.msra.mxu0 0
        %1707 = vmatprep.subr.bf16.mxu0 0
        %1708 = vmatpush1.bf16.xpose.msra.mxu0 0
        %1709 = vmatprep.subr.bf16.mxu0 0
        %1710 = vmatpush1.bf16.xpose.msra.mxu0 0
        %1711 = vmatprep.subr.bf16.mxu0 0
        %1712 = vmatpush1.bf16.xpose.msra.mxu0 0
        %1713 = vmatprep.subr.bf16.mxu0 0
        %1714 = vmatpush1.bf16.xpose.msra.mxu0 0
        %1715 = vmatprep.subr.bf16.mxu0 0
        %1716 = vmatpush1.bf16.xpose.msra.mxu0 0
        %1717 = vmatprep.subr.bf16.mxu0 0
        %1718 = vmatpush1.bf16.xpose.msra.mxu0 0
        %1719 = vmatprep.subr.bf16.mxu0 0
        %1720 = vmatpush1.bf16.xpose.msra.mxu0 0
        %1721 = vmatprep.subr.bf16.mxu0 0
        %1722 = vmatpush1.bf16.xpose.msra.mxu0 0
        %1723 = vmatprep.subr.bf16.mxu0 0
        %1724 = vmatpush1.bf16.xpose.msra.mxu0 0
        %1725 = vmatprep.subr.bf16.mxu0 0
        %1726 = vmatpush1.bf16.xpose.msra.mxu0 0
        %1727 = vmatprep.subr.bf16.mxu0 0
        %1728 = vmatpush1.bf16.xpose.msra.mxu0 0
        %1729 = vmatprep.subr.bf16.mxu0 0
        %1730 = vmatpush1.bf16.xpose.msra.mxu0 0
        %1731 = vmatprep.mubr.bf16.mxu0 0
        %1732 = vmatmul.mubr.bf16.gmra.mrb[0].mxu0 %v1694
        %v1733 = vpop.f32.mrb[0].mxu0
        %v1734 = vadd.f32 0.0, %v1733
        %v1735 = vpop.f32.mrb[0].mxu0
        %v1736 = vpop.f32.mrb[0].mxu0
        %v1737 = vpop.f32.mrb[0].mxu0
        %1738 = vdwg.mxu0
        %v1739 = vmul.f32 %v1734, 0.35355338
        %v1740 = vsel %vm1344, %v1739, -inf
        %1741 = vmax.xlane.f32.xlu0 %v1740
        %v1742 = vpop.xlane.xlu0 %1741
        %v1743 = vsub.f32 %v1739, %v1742
        %v1744 = vmul.f32 %v1743, 1.442695
        %v1745 = vpow.pop %v1744
        %v1746 = vsel %vm1344, %v1745, 0.0
        %1747 = vadd.xlane.f32.xlu0 %v1746
        %v1748 = vpop.xlane.xlu0 %1747
        %v1749 = vrcp.pop %v1748
        %v1750 = vmul.f32 %v1745, %v1749
        %v1751 = vpack.c.bf16 %v1750, %v1750
        %1752 = vrot.lane.b32.xlu0 %v1581, 88
        %v1753 = vpop.permute.xlu0 %1752
        %v1756 = vsel %vm1344, %v1751, 0
        %1758 = vmatprep.subr.bf16.mxu0 0
        %1759 = vmatpush1.bf16.msra.mxu0 %v1753
        %1760 = vmatprep.subr.bf16.mxu0 0
        %1761 = vmatpush1.bf16.msra.mxu0 0
        %1762 = vmatprep.subr.bf16.mxu0 0
        %1763 = vmatpush1.bf16.msra.mxu0 0
        %1764 = vmatprep.subr.bf16.mxu0 0
        %1765 = vmatpush1.bf16.msra.mxu0 0
        %1766 = vmatprep.subr.bf16.mxu0 0
        %1767 = vmatpush1.bf16.msra.mxu0 0
        %1768 = vmatprep.subr.bf16.mxu0 0
        %1769 = vmatpush1.bf16.msra.mxu0 0
        %1770 = vmatprep.subr.bf16.mxu0 0
        %1771 = vmatpush1.bf16.msra.mxu0 0
        %1772 = vmatprep.subr.bf16.mxu0 0
        %1773 = vmatpush1.bf16.msra.mxu0 0
        %1774 = vmatprep.subr.bf16.mxu0 0
        %1775 = vmatpush1.bf16.msra.mxu0 0
        %1776 = vmatprep.subr.bf16.mxu0 0
        %1777 = vmatpush1.bf16.msra.mxu0 0
        %1778 = vmatprep.subr.bf16.mxu0 0
        %1779 = vmatpush1.bf16.msra.mxu0 0
        %1780 = vmatprep.subr.bf16.mxu0 0
        %1781 = vmatpush1.bf16.msra.mxu0 0
        %1782 = vmatprep.subr.bf16.mxu0 0
        %1783 = vmatpush1.bf16.msra.mxu0 0
        %1784 = vmatprep.subr.bf16.mxu0 0
        %1785 = vmatpush1.bf16.msra.mxu0 0
        %1786 = vmatprep.subr.bf16.mxu0 0
        %1787 = vmatpush1.bf16.msra.mxu0 0
        %1788 = vmatprep.subr.bf16.mxu0 0
        %1789 = vmatpush1.bf16.msra.mxu0 0
        %1790 = vmatprep.mubr.bf16.mxu0 0
        %1791 = vmatmul.mubr.bf16.gmra.mrb[0].mxu0 %v1756
        %v1792 = vpop.f32.mrb[0].mxu0
        %v1793 = vadd.f32 0.0, %v1792
        %v1794 = vpop.f32.mrb[0].mxu0
        %v1795 = vpop.f32.mrb[0].mxu0
        %v1796 = vpop.f32.mrb[0].mxu0
        %1797 = vdwg.mxu0
        %1798 = vrot.lane.b32.xlu0 %v1580, 112
        %v1799 = vpop.permute.xlu0 %1798
        %1800 = vrot.lane.b32.xlu0 %v1581, 112
        %v1801 = vpop.permute.xlu0 %1800
        %v1803 = vsel %vm885, %v1799, 0
        %v1806 = vsel %vm885, %v1801, 0
        %1808 = vmatprep.subr.bf16.mxu0 0
        %1809 = vmatpush1.bf16.xpose.msra.mxu0 %v1806
        %1810 = vmatprep.subr.bf16.mxu0 0
        %1811 = vmatpush1.bf16.xpose.msra.mxu0 0
        %1812 = vmatprep.subr.bf16.mxu0 0
        %1813 = vmatpush1.bf16.xpose.msra.mxu0 0
        %1814 = vmatprep.subr.bf16.mxu0 0
        %1815 = vmatpush1.bf16.xpose.msra.mxu0 0
        %1816 = vmatprep.subr.bf16.mxu0 0
        %1817 = vmatpush1.bf16.xpose.msra.mxu0 0
        %1818 = vmatprep.subr.bf16.mxu0 0
        %1819 = vmatpush1.bf16.xpose.msra.mxu0 0
        %1820 = vmatprep.subr.bf16.mxu0 0
        %1821 = vmatpush1.bf16.xpose.msra.mxu0 0
        %1822 = vmatprep.subr.bf16.mxu0 0
        %1823 = vmatpush1.bf16.xpose.msra.mxu0 0
        %1824 = vmatprep.subr.bf16.mxu0 0
        %1825 = vmatpush1.bf16.xpose.msra.mxu0 0
        %1826 = vmatprep.subr.bf16.mxu0 0
        %1827 = vmatpush1.bf16.xpose.msra.mxu0 0
        %1828 = vmatprep.subr.bf16.mxu0 0
        %1829 = vmatpush1.bf16.xpose.msra.mxu0 0
        %1830 = vmatprep.subr.bf16.mxu0 0
        %1831 = vmatpush1.bf16.xpose.msra.mxu0 0
        %1832 = vmatprep.subr.bf16.mxu0 0
        %1833 = vmatpush1.bf16.xpose.msra.mxu0 0
        %1834 = vmatprep.subr.bf16.mxu0 0
        %1835 = vmatpush1.bf16.xpose.msra.mxu0 0
        %1836 = vmatprep.subr.bf16.mxu0 0
        %1837 = vmatpush1.bf16.xpose.msra.mxu0 0
        %1838 = vmatprep.subr.bf16.mxu0 0
        %1839 = vmatpush1.bf16.xpose.msra.mxu0 0
        %1840 = vmatprep.mubr.bf16.mxu0 0
        %1841 = vmatmul.mubr.bf16.gmra.mrb[0].mxu0 %v1803
        %v1842 = vpop.f32.mrb[0].mxu0
        %v1843 = vadd.f32 0.0, %v1842
        %v1844 = vpop.f32.mrb[0].mxu0
        %v1845 = vpop.f32.mrb[0].mxu0
        %v1846 = vpop.f32.mrb[0].mxu0
        %1847 = vdwg.mxu0
        %v1848 = vmul.f32 %v1843, 0.35355338
        %v1849 = vsel %vm1344, %v1848, -inf
        %1850 = vmax.xlane.f32.xlu0 %v1849
        %v1851 = vpop.xlane.xlu0 %1850
        %v1852 = vsub.f32 %v1848, %v1851
        %v1853 = vmul.f32 %v1852, 1.442695
        %v1854 = vpow.pop %v1853
        %v1855 = vsel %vm1344, %v1854, 0.0
        %1856 = vadd.xlane.f32.xlu0 %v1855
        %v1857 = vpop.xlane.xlu0 %1856
        %v1858 = vrcp.pop %v1857
        %v1859 = vmul.f32 %v1854, %v1858
        %v1860 = vpack.c.bf16 %v1859, %v1859
        %1861 = vrot.lane.b32.xlu0 %v1581, 80
        %v1862 = vpop.permute.xlu0 %1861
        %v1865 = vsel %vm1344, %v1860, 0
        %1867 = vmatprep.subr.bf16.mxu0 0
        %1868 = vmatpush1.bf16.msra.mxu0 %v1862
        %1869 = vmatprep.subr.bf16.mxu0 0
        %1870 = vmatpush1.bf16.msra.mxu0 0
        %1871 = vmatprep.subr.bf16.mxu0 0
        %1872 = vmatpush1.bf16.msra.mxu0 0
        %1873 = vmatprep.subr.bf16.mxu0 0
        %1874 = vmatpush1.bf16.msra.mxu0 0
        %1875 = vmatprep.subr.bf16.mxu0 0
        %1876 = vmatpush1.bf16.msra.mxu0 0
        %1877 = vmatprep.subr.bf16.mxu0 0
        %1878 = vmatpush1.bf16.msra.mxu0 0
        %1879 = vmatprep.subr.bf16.mxu0 0
        %1880 = vmatpush1.bf16.msra.mxu0 0
        %1881 = vmatprep.subr.bf16.mxu0 0
        %1882 = vmatpush1.bf16.msra.mxu0 0
        %1883 = vmatprep.subr.bf16.mxu0 0
        %1884 = vmatpush1.bf16.msra.mxu0 0
        %1885 = vmatprep.subr.bf16.mxu0 0
        %1886 = vmatpush1.bf16.msra.mxu0 0
        %1887 = vmatprep.subr.bf16.mxu0 0
        %1888 = vmatpush1.bf16.msra.mxu0 0
        %1889 = vmatprep.subr.bf16.mxu0 0
        %1890 = vmatpush1.bf16.msra.mxu0 0
        %1891 = vmatprep.subr.bf16.mxu0 0
        %1892 = vmatpush1.bf16.msra.mxu0 0
        %1893 = vmatprep.subr.bf16.mxu0 0
        %1894 = vmatpush1.bf16.msra.mxu0 0
        %1895 = vmatprep.subr.bf16.mxu0 0
        %1896 = vmatpush1.bf16.msra.mxu0 0
        %1897 = vmatprep.subr.bf16.mxu0 0
        %1898 = vmatpush1.bf16.msra.mxu0 0
        %1899 = vmatprep.mubr.bf16.mxu0 0
        %1900 = vmatmul.mubr.bf16.gmra.mrb[0].mxu0 %v1865
        %v1901 = vpop.f32.mrb[0].mxu0
        %v1902 = vadd.f32 0.0, %v1901
        %v1903 = vpop.f32.mrb[0].mxu0
        %v1904 = vpop.f32.mrb[0].mxu0
        %v1905 = vpop.f32.mrb[0].mxu0
        %1906 = vdwg.mxu0
        %1907 = vrot.lane.b32.xlu0 %v1580, 104
        %v1908 = vpop.permute.xlu0 %1907
        %1909 = vrot.lane.b32.xlu0 %v1581, 104
        %v1910 = vpop.permute.xlu0 %1909
        %v1912 = vsel %vm885, %v1908, 0
        %v1915 = vsel %vm885, %v1910, 0
        %1917 = vmatprep.subr.bf16.mxu0 0
        %1918 = vmatpush1.bf16.xpose.msra.mxu0 %v1915
        %1919 = vmatprep.subr.bf16.mxu0 0
        %1920 = vmatpush1.bf16.xpose.msra.mxu0 0
        %1921 = vmatprep.subr.bf16.mxu0 0
        %1922 = vmatpush1.bf16.xpose.msra.mxu0 0
        %1923 = vmatprep.subr.bf16.mxu0 0
        %1924 = vmatpush1.bf16.xpose.msra.mxu0 0
        %1925 = vmatprep.subr.bf16.mxu0 0
        %1926 = vmatpush1.bf16.xpose.msra.mxu0 0
        %1927 = vmatprep.subr.bf16.mxu0 0
        %1928 = vmatpush1.bf16.xpose.msra.mxu0 0
        %1929 = vmatprep.subr.bf16.mxu0 0
        %1930 = vmatpush1.bf16.xpose.msra.mxu0 0
        %1931 = vmatprep.subr.bf16.mxu0 0
        %1932 = vmatpush1.bf16.xpose.msra.mxu0 0
        %1933 = vmatprep.subr.bf16.mxu0 0
        %1934 = vmatpush1.bf16.xpose.msra.mxu0 0
        %1935 = vmatprep.subr.bf16.mxu0 0
        %1936 = vmatpush1.bf16.xpose.msra.mxu0 0
        %1937 = vmatprep.subr.bf16.mxu0 0
        %1938 = vmatpush1.bf16.xpose.msra.mxu0 0
        %1939 = vmatprep.subr.bf16.mxu0 0
        %1940 = vmatpush1.bf16.xpose.msra.mxu0 0
        %1941 = vmatprep.subr.bf16.mxu0 0
        %1942 = vmatpush1.bf16.xpose.msra.mxu0 0
        %1943 = vmatprep.subr.bf16.mxu0 0
        %1944 = vmatpush1.bf16.xpose.msra.mxu0 0
        %1945 = vmatprep.subr.bf16.mxu0 0
        %1946 = vmatpush1.bf16.xpose.msra.mxu0 0
        %1947 = vmatprep.subr.bf16.mxu0 0
        %1948 = vmatpush1.bf16.xpose.msra.mxu0 0
        %1949 = vmatprep.mubr.bf16.mxu0 0
        %1950 = vmatmul.mubr.bf16.gmra.mrb[0].mxu0 %v1912
        %v1951 = vpop.f32.mrb[0].mxu0
        %v1952 = vadd.f32 0.0, %v1951
        %v1953 = vpop.f32.mrb[0].mxu0
        %v1954 = vpop.f32.mrb[0].mxu0
        %v1955 = vpop.f32.mrb[0].mxu0
        %1956 = vdwg.mxu0
        %v1957 = vmul.f32 %v1952, 0.35355338
        %v1958 = vsel %vm1344, %v1957, -inf
        %1959 = vmax.xlane.f32.xlu0 %v1958
        %v1960 = vpop.xlane.xlu0 %1959
        %v1961 = vsub.f32 %v1957, %v1960
        %v1962 = vmul.f32 %v1961, 1.442695
        %v1963 = vpow.pop %v1962
        %v1964 = vsel %vm1344, %v1963, 0.0
        %1965 = vadd.xlane.f32.xlu0 %v1964
        %v1966 = vpop.xlane.xlu0 %1965
        %v1967 = vrcp.pop %v1966
        %v1968 = vmul.f32 %v1963, %v1967
        %v1969 = vpack.c.bf16 %v1968, %v1968
        %1970 = vrot.lane.b32.xlu0 %v1581, 72
        %v1971 = vpop.permute.xlu0 %1970
        %v1974 = vsel %vm1344, %v1969, 0
        %1976 = vmatprep.subr.bf16.mxu0 0
        %1977 = vmatpush1.bf16.msra.mxu0 %v1971
        %1978 = vmatprep.subr.bf16.mxu0 0
        %1979 = vmatpush1.bf16.msra.mxu0 0
        %1980 = vmatprep.subr.bf16.mxu0 0
        %1981 = vmatpush1.bf16.msra.mxu0 0
        %1982 = vmatprep.subr.bf16.mxu0 0
        %1983 = vmatpush1.bf16.msra.mxu0 0
        %1984 = vmatprep.subr.bf16.mxu0 0
        %1985 = vmatpush1.bf16.msra.mxu0 0
        %1986 = vmatprep.subr.bf16.mxu0 0
        %1987 = vmatpush1.bf16.msra.mxu0 0
        %1988 = vmatprep.subr.bf16.mxu0 0
        %1989 = vmatpush1.bf16.msra.mxu0 0
        %1990 = vmatprep.subr.bf16.mxu0 0
        %1991 = vmatpush1.bf16.msra.mxu0 0
        %1992 = vmatprep.subr.bf16.mxu0 0
        %1993 = vmatpush1.bf16.msra.mxu0 0
        %1994 = vmatprep.subr.bf16.mxu0 0
        %1995 = vmatpush1.bf16.msra.mxu0 0
        %1996 = vmatprep.subr.bf16.mxu0 0
        %1997 = vmatpush1.bf16.msra.mxu0 0
        %1998 = vmatprep.subr.bf16.mxu0 0
        %1999 = vmatpush1.bf16.msra.mxu0 0
        %2000 = vmatprep.subr.bf16.mxu0 0
        %2001 = vmatpush1.bf16.msra.mxu0 0
        %2002 = vmatprep.subr.bf16.mxu0 0
        %2003 = vmatpush1.bf16.msra.mxu0 0
        %2004 = vmatprep.subr.bf16.mxu0 0
        %2005 = vmatpush1.bf16.msra.mxu0 0
        %2006 = vmatprep.subr.bf16.mxu0 0
        %2007 = vmatpush1.bf16.msra.mxu0 0
        %2008 = vmatprep.mubr.bf16.mxu0 0
        %2009 = vmatmul.mubr.bf16.gmra.mrb[0].mxu0 %v1974
        %v2010 = vpop.f32.mrb[0].mxu0
        %v2011 = vadd.f32 0.0, %v2010
        %v2012 = vpop.f32.mrb[0].mxu0
        %v2013 = vpop.f32.mrb[0].mxu0
        %v2014 = vpop.f32.mrb[0].mxu0
        %2015 = vdwg.mxu0
        %2017 = vrot.lane.b32.xlu0 %v1793, 8
        %v2018 = vpop.permute.xlu0 %2017
        %2021 = vrot.lane.b32.xlu0 %v1902, 16
        %v2022 = vpop.permute.xlu0 %2021
        %2025 = vrot.lane.b32.xlu0 %v2011, 24
        %v2026 = vpop.permute.xlu0 %2025
        %v2028 = vsel %vm885, %v1683, %v2018
        %v2029 = vsel %vm1344, %v2028, %v2022
        %v2030 = vsel %vm1346, %v2029, %v2026
        %v2031 = vld [vmem:[#allocation13] sm:$0xf]
        %v2032 = vld [vmem:[#allocation13 + $0x4] sm:$0xf]
        %v2033 = vld [vmem:[#allocation13 + $0x8] sm:$0xf]
        %v2034 = vld [vmem:[#allocation13 + $0xc] sm:$0xf]
        %v2035 = vpack.c.bf16 %v2030, %v2030
        %v2040 = vunpack.c.l.b16 %v2031
        %v2041 = vunpack.c.l.b16 %v2032
        %v2042 = vunpack.c.l.b16 %v2033
        %v2043 = vunpack.c.l.b16 %v2034
        %v2044 = vpack.c.b16 %v2041, %v2040
        %v2045 = vpack.c.b16 %v2043, %v2042
        %v2049 = vsel %vm832, %v2035, 0
        %2051 = vmatprep.subr.bf16.mxu0 0
        %2052 = vmatpush1.bf16.msra.mxu0 %v2044
        %2053 = vmatprep.subr.bf16.mxu0 0
        %2054 = vmatpush1.bf16.msra.mxu0 %v2045
        %2055 = vmatprep.subr.bf16.mxu0 0
        %2056 = vmatpush1.bf16.msra.mxu0 0
        %2057 = vmatprep.subr.bf16.mxu0 0
        %2058 = vmatpush1.bf16.msra.mxu0 0
        %2059 = vmatprep.subr.bf16.mxu0 0
        %2060 = vmatpush1.bf16.msra.mxu0 0
        %2061 = vmatprep.subr.bf16.mxu0 0
        %2062 = vmatpush1.bf16.msra.mxu0 0
        %2063 = vmatprep.subr.bf16.mxu0 0
        %2064 = vmatpush1.bf16.msra.mxu0 0
        %2065 = vmatprep.subr.bf16.mxu0 0
        %2066 = vmatpush1.bf16.msra.mxu0 0
        %2067 = vmatprep.subr.bf16.mxu0 0
        %2068 = vmatpush1.bf16.msra.mxu0 0
        %2069 = vmatprep.subr.bf16.mxu0 0
        %2070 = vmatpush1.bf16.msra.mxu0 0
        %2071 = vmatprep.subr.bf16.mxu0 0
        %2072 = vmatpush1.bf16.msra.mxu0 0
        %2073 = vmatprep.subr.bf16.mxu0 0
        %2074 = vmatpush1.bf16.msra.mxu0 0
        %2075 = vmatprep.subr.bf16.mxu0 0
        %2076 = vmatpush1.bf16.msra.mxu0 0
        %2077 = vmatprep.subr.bf16.mxu0 0
        %2078 = vmatpush1.bf16.msra.mxu0 0
        %2079 = vmatprep.subr.bf16.mxu0 0
        %2080 = vmatpush1.bf16.msra.mxu0 0
        %2081 = vmatprep.subr.bf16.mxu0 0
        %2082 = vmatpush1.bf16.msra.mxu0 0
        %2083 = vmatprep.mubr.bf16.mxu0 0
        %2084 = vmatmul.mubr.bf16.gmra.mrb[0].mxu0 %v2049
        %v2085 = vpop.f32.mrb[0].mxu0
        %v2086 = vadd.f32 0.0, %v2085
        %v2087 = vpop.f32.mrb[0].mxu0
        %v2088 = vpop.f32.mrb[0].mxu0
        %v2089 = vpop.f32.mrb[0].mxu0
        %2090 = vdwg.mxu0
        %v2091 = vadd.f32 %v1444, %v2086
        %v2092 = vld [vmem:[#allocation14] sm:$0x1]
        %v2094 = vlaneseq
        %v2095 = vshrl.u32 %v2094, 7
        %v2096 = vsub.s32 0, %v2095
        %v2097 = vrot.slane %v2092, %v2096
        %v2099 = vadd.f32 %v2091, %v2097
        %v2100 = vld [vmem:[%s14] sm:$0x1]
        %v2101 = vld [vmem:[%s15] sm:$0x1]
        %v2102 = vsel %vm832, %v2099, 0.0
        %2103 = vadd.xlane.f32.xlu0 %v2102
        %v2104 = vpop.xlane.xlu0 %2103
        %v2105 = vmul.f32 %v2104, %v1420
        %v2106 = vsub.f32 %v2099, %v2105
        %v2107 = vmul.f32 %v2106, %v2106
        %v2108 = vsel %vm832, %v2107, 0.0
        %2109 = vadd.xlane.f32.xlu0 %v2108
        %v2110 = vpop.xlane.xlu0 %2109
        %v2111 = vmul.f32 %v2110, %v1420
        %v2112 = vadd.f32 %v2111, 1e-05
        %v2113 = vrsqrt.pop %v2112
        %v2114 = vmul.f32 %v2106, %v2113
        %v2116 = vlaneseq
        %v2117 = vshrl.u32 %v2116, 7
        %v2118 = vsub.s32 0, %v2117
        %v2119 = vrot.slane %v2100, %v2118
        %v2121 = vmul.f32 %v2114, %v2119
        %v2123 = vlaneseq
        %v2124 = vshrl.u32 %v2123, 7
        %v2125 = vsub.s32 0, %v2124
        %v2126 = vrot.slane %v2101, %v2125
        %v2128 = vadd.f32 %v2121, %v2126
        %v2129 = vld [vmem:[%s16] sm:$0xf]
        %v2130 = vld [vmem:[%s16 + $0x4] sm:$0xf]
        %v2131 = vld [vmem:[%s16 + $0x8] sm:$0xf]
        %v2132 = vld [vmem:[%s16 + $0xc] sm:$0xf]
        %v2133 = vpack.c.bf16 %v2128, %v2128
        %v2134 = vld [vmem:[%s17] sm:$0x1]
        %v2136 = vlaneseq
        %v2137 = vshrl.u32 %v2136, 7
        %v2138 = vsub.s32 0, %v2137
        %v2139 = vrot.slane %v2134, %v2138
        %v2145 = vunpack.c.l.b16 %v2129
        %v2146 = vunpack.c.l.b16 %v2130
        %v2147 = vunpack.c.l.b16 %v2131
        %v2148 = vunpack.c.l.b16 %v2132
        %v2149 = vpack.c.b16 %v2146, %v2145
        %v2150 = vpack.c.b16 %v2148, %v2147
        %v2154 = vsel %vm832, %v2133, 0
        %2156 = vmatprep.subr.bf16.mxu0 0
        %2157 = vmatpush1.bf16.msra.mxu0 %v2149
        %2158 = vmatprep.subr.bf16.mxu0 0
        %2159 = vmatpush1.bf16.msra.mxu0 %v2150
        %2160 = vmatprep.subr.bf16.mxu0 0
        %2161 = vmatpush1.bf16.msra.mxu0 0
        %2162 = vmatprep.subr.bf16.mxu0 0
        %2163 = vmatpush1.bf16.msra.mxu0 0
        %2164 = vmatprep.subr.bf16.mxu0 0
        %2165 = vmatpush1.bf16.msra.mxu0 0
        %2166 = vmatprep.subr.bf16.mxu0 0
        %2167 = vmatpush1.bf16.msra.mxu0 0
        %2168 = vmatprep.subr.bf16.mxu0 0
        %2169 = vmatpush1.bf16.msra.mxu0 0
        %2170 = vmatprep.subr.bf16.mxu0 0
        %2171 = vmatpush1.bf16.msra.mxu0 0
        %2172 = vmatprep.subr.bf16.mxu0 0
        %2173 = vmatpush1.bf16.msra.mxu0 0
        %2174 = vmatprep.subr.bf16.mxu0 0
        %2175 = vmatpush1.bf16.msra.mxu0 0
        %2176 = vmatprep.subr.bf16.mxu0 0
        %2177 = vmatpush1.bf16.msra.mxu0 0
        %2178 = vmatprep.subr.bf16.mxu0 0
        %2179 = vmatpush1.bf16.msra.mxu0 0
        %2180 = vmatprep.subr.bf16.mxu0 0
        %2181 = vmatpush1.bf16.msra.mxu0 0
        %2182 = vmatprep.subr.bf16.mxu0 0
        %2183 = vmatpush1.bf16.msra.mxu0 0
        %2184 = vmatprep.subr.bf16.mxu0 0
        %2185 = vmatpush1.bf16.msra.mxu0 0
        %2186 = vmatprep.subr.bf16.mxu0 0
        %2187 = vmatpush1.bf16.msra.mxu0 0
        %2188 = vmatprep.mubr.bf16.mxu0 0
        %2189 = vmatmul.mubr.bf16.gmra.mrb[0].mxu0 %v2154
        %v2190 = vpop.f32.mrb[0].mxu0
        %v2191 = vadd.f32 %v2139, %v2190
        %v2192 = vpop.f32.mrb[0].mxu0
        %v2193 = vpop.f32.mrb[0].mxu0
        %v2194 = vpop.f32.mrb[0].mxu0
        %2195 = vdwg.mxu0
        %v2196 = vmul.f32 %v2191, 0.5
        %v2197 = vmul.f32 %v2191, 0.044715
        %v2198 = vmul.f32 %v2197, %v2191
        %v2199 = vmul.f32 %v2198, %v2191
        %v2200 = vadd.f32 %v2191, %v2199
        %v2201 = vmul.f32 %v2200, 0.7978846
        %v2202 = vtanh.pop %v2201
        %v2203 = vadd.f32 %v2202, 1.0
        %v2204 = vmul.f32 %v2196, %v2203
        %v2205 = vld [vmem:[%s18] sm:$0xf]
        %v2206 = vld [vmem:[%s18 + $0x4] sm:$0xf]
        %v2207 = vld [vmem:[%s18 + $0x8] sm:$0xf]
        %v2208 = vld [vmem:[%s18 + $0xc] sm:$0xf]
        %v2209 = vld [vmem:[%s18 + $0x10] sm:$0xf]
        %v2210 = vld [vmem:[%s18 + $0x14] sm:$0xf]
        %v2211 = vld [vmem:[%s18 + $0x18] sm:$0xf]
        %v2212 = vld [vmem:[%s18 + $0x1c] sm:$0xf]
        %v2213 = vld [vmem:[%s18 + $0x20] sm:$0xf]
        %v2214 = vld [vmem:[%s18 + $0x24] sm:$0xf]
        %v2215 = vld [vmem:[%s18 + $0x28] sm:$0xf]
        %v2216 = vld [vmem:[%s18 + $0x2c] sm:$0xf]
        %v2217 = vld [vmem:[%s18 + $0x30] sm:$0xf]
        %v2218 = vld [vmem:[%s18 + $0x34] sm:$0xf]
        %v2219 = vld [vmem:[%s18 + $0x38] sm:$0xf]
        %v2220 = vld [vmem:[%s18 + $0x3c] sm:$0xf]
        %v2221 = vpack.c.bf16 %v2204, %v2204
        %v2238 = vunpack.c.l.b16 %v2205
        %v2239 = vunpack.c.l.b16 %v2206
        %v2240 = vunpack.c.l.b16 %v2207
        %v2241 = vunpack.c.l.b16 %v2208
        %v2242 = vunpack.c.l.b16 %v2209
        %v2243 = vunpack.c.l.b16 %v2210
        %v2244 = vunpack.c.l.b16 %v2211
        %v2245 = vunpack.c.l.b16 %v2212
        %v2246 = vunpack.c.l.b16 %v2213
        %v2247 = vunpack.c.l.b16 %v2214
        %v2248 = vunpack.c.l.b16 %v2215
        %v2249 = vunpack.c.l.b16 %v2216
        %v2250 = vunpack.c.l.b16 %v2217
        %v2251 = vunpack.c.l.b16 %v2218
        %v2252 = vunpack.c.l.b16 %v2219
        %v2253 = vunpack.c.l.b16 %v2220
        %v2254 = vpack.c.b16 %v2239, %v2238
        %v2255 = vpack.c.b16 %v2241, %v2240
        %v2256 = vpack.c.b16 %v2243, %v2242
        %v2257 = vpack.c.b16 %v2245, %v2244
        %v2258 = vpack.c.b16 %v2247, %v2246
        %v2259 = vpack.c.b16 %v2249, %v2248
        %v2260 = vpack.c.b16 %v2251, %v2250
        %v2261 = vpack.c.b16 %v2253, %v2252
        %2270 = vmatprep.subr.bf16.mxu0 0
        %2271 = vmatpush1.bf16.msra.mxu0 %v2254
        %2272 = vmatprep.subr.bf16.mxu0 0
        %2273 = vmatpush1.bf16.msra.mxu0 %v2255
        %2274 = vmatprep.subr.bf16.mxu0 0
        %2275 = vmatpush1.bf16.msra.mxu0 %v2256
        %2276 = vmatprep.subr.bf16.mxu0 0
        %2277 = vmatpush1.bf16.msra.mxu0 %v2257
        %2278 = vmatprep.subr.bf16.mxu0 0
        %2279 = vmatpush1.bf16.msra.mxu0 %v2258
        %2280 = vmatprep.subr.bf16.mxu0 0
        %2281 = vmatpush1.bf16.msra.mxu0 %v2259
        %2282 = vmatprep.subr.bf16.mxu0 0
        %2283 = vmatpush1.bf16.msra.mxu0 %v2260
        %2284 = vmatprep.subr.bf16.mxu0 0
        %2285 = vmatpush1.bf16.msra.mxu0 %v2261
        %2286 = vmatprep.subr.bf16.mxu0 0
        %2287 = vmatpush1.bf16.msra.mxu0 0
        %2288 = vmatprep.subr.bf16.mxu0 0
        %2289 = vmatpush1.bf16.msra.mxu0 0
        %2290 = vmatprep.subr.bf16.mxu0 0
        %2291 = vmatpush1.bf16.msra.mxu0 0
        %2292 = vmatprep.subr.bf16.mxu0 0
        %2293 = vmatpush1.bf16.msra.mxu0 0
        %2294 = vmatprep.subr.bf16.mxu0 0
        %2295 = vmatpush1.bf16.msra.mxu0 0
        %2296 = vmatprep.subr.bf16.mxu0 0
        %2297 = vmatpush1.bf16.msra.mxu0 0
        %2298 = vmatprep.subr.bf16.mxu0 0
        %2299 = vmatpush1.bf16.msra.mxu0 0
        %2300 = vmatprep.subr.bf16.mxu0 0
        %2301 = vmatpush1.bf16.msra.mxu0 0
        %2302 = vmatprep.mubr.bf16.mxu0 0
        %2303 = vmatmul.mubr.bf16.gmra.mrb[0].mxu0 %v2221
        %v2304 = vpop.f32.mrb[0].mxu0
        %v2305 = vadd.f32 0.0, %v2304
        %v2306 = vpop.f32.mrb[0].mxu0
        %v2307 = vpop.f32.mrb[0].mxu0
        %v2308 = vpop.f32.mrb[0].mxu0
        %2309 = vdwg.mxu0
        %v2310 = vadd.f32 %v2128, %v2305
        %v2311 = vld [vmem:[%s19] sm:$0x1]
        %v2313 = vlaneseq
        %v2314 = vshrl.u32 %v2313, 7
        %v2315 = vsub.s32 0, %v2314
        %v2316 = vrot.slane %v2311, %v2315
        %v2318 = vadd.f32 %v2310, %v2316
        %v2319 = vld [vmem:[%s20] sm:$0x1]
        %v2320 = vld [vmem:[%s21] sm:$0x1]
        %v2321 = vsel %vm832, %v2318, 0.0
        %2322 = vadd.xlane.f32.xlu0 %v2321
        %v2323 = vpop.xlane.xlu0 %2322
        %v2324 = vmul.f32 %v2323, %v1420
        %v2325 = vsub.f32 %v2318, %v2324
        %v2326 = vmul.f32 %v2325, %v2325
        %v2327 = vsel %vm832, %v2326, 0.0
        %2328 = vadd.xlane.f32.xlu0 %v2327
        %v2329 = vpop.xlane.xlu0 %2328
        %v2330 = vmul.f32 %v2329, %v1420
        %v2331 = vadd.f32 %v2330, 1e-05
        %v2332 = vrsqrt.pop %v2331
        %v2333 = vmul.f32 %v2325, %v2332
        %v2335 = vlaneseq
        %v2336 = vshrl.u32 %v2335, 7
        %v2337 = vsub.s32 0, %v2336
        %v2338 = vrot.slane %v2319, %v2337
        %v2340 = vmul.f32 %v2333, %v2338
        %v2342 = vlaneseq
        %v2343 = vshrl.u32 %v2342, 7
        %v2344 = vsub.s32 0, %v2343
        %v2345 = vrot.slane %v2320, %v2344
        %v2347 = vadd.f32 %v2340, %v2345
        %2348 = vst.msk [vmem:[%s794] sm:$0xff] %vm832, %v2347
        %s2349 = sand.u32 %s521, 1
        %s2350 = scalar_lea.sflag [#allocation4], %s2349
        %s2351 = sand.u32 %s521, 1
        %s2352 = smul.addr %s2351, 8
        %s2353 = scalar_lea.vmem [#allocation16], %s2352
        // Predicated region
        $region141: #{tpu_custom_call.1} parent=107 // pred_check
          %p2354 = pneg %p531
        $region142: #{tpu_custom_call.1} parent=107 // pred_check_branch
          %2356 = sbr.rel (%p2354) target = $region144
        $region143: #{tpu_custom_call.1} parent=107 // pred_region
          %s2358 = ssub.s32 128, 128
          %2359 = vsyncadd %s2350, %s2358
          %s2360 = smul.addr %s41, 128
          %s2361 = scalar_lea.hbm %s22, %s2360
          %s2363 = sshll.u32 %s2353, 4
          %s2364 = int_to_ptr.vmem [resolvable:$true] %s2363
          %2366 = dma.vmem_to_hbm [thread:$0]  %s2364, 128, %s2361, %s2350
        $region144: #{tpu_custom_call.1} parent=107 // pred_fallthru
          _
      $region108: #{tpu_custom_call.1} parent=5 // pred_fallthru
        _
      %p2367 = scmp.le.s32.totalorder 2, %s36
      // Predicated region
      $region145: #{tpu_custom_call.1} parent=5 // pred_check
        %p2368 = pneg %p2367
      $region146: #{tpu_custom_call.1} parent=5 // pred_check_branch
        %2370 = sbr.rel (%p2368) target = $region148
      $region147: #{tpu_custom_call.1} parent=5 // pred_region
        %s2371 = ssub.s32 %s36, 2
        // Predicated region
        $region149: #{tpu_custom_call.1} parent=147 // pred_check
          %p2372 = pneg %p537
        $region150: #{tpu_custom_call.1} parent=147 // pred_check_branch
          %2374 = sbr.rel (%p2372) target = $region152
        $region151: #{tpu_custom_call.1} parent=147 // pred_region
          %s2375 = sand.u32 %s522, 1
          %s2376 = scalar_lea.sflag [#allocation4], %s2375
          %s2377 = sand.u32 %s522, 1
          %s2378 = smul.addr %s2377, 8
          %s2379 = scalar_lea.vmem [#allocation16], %s2378
          %2380 = dma.done %s2376, 128
        $region152: #{tpu_custom_call.1} parent=147 // pred_fallthru
          _
      $region148: #{tpu_custom_call.1} parent=5 // pred_fallthru
        _
    $region6: #{tpu_custom_call.1} parent=1 // loop_footer
      %s40 = sadd.s32 1, %s36
    $region7: #{tpu_custom_call.1} parent=1 // loop_footer_branch
      %35 = sbr.rel target = $region3
    $region8: #{tpu_custom_call.1} parent=1 // loop_exit
      _
    %2381 = vsyncpa [#allocation3], 1
    %s2382 = scalar_lea.sflag [#allocation3], 1
    %2383 = vsyncpa %s2382, 1
    %2384 = vsyncpa [#allocation6], 1
    %2385 = vsyncpa [#allocation9], 1
    %2386 = vsyncpa [#allocation12], 1
    %2387 = vsyncpa [#allocation15], 1
    %2388 = vsyncpa [#allocation4], 1
    %s2389 = scalar_lea.sflag [#allocation4], 1
    %2390 = vsyncpa %s2389, 1

</llo_original>
